<compile_context>
chip_gen: v7x
topology: tpu7x:2x2x1
jax: 0.10.0
libtpu: 0.0.40
codegen_flags: <defaults>
</compile_context>

<pallas_src>
import functools
import math
import numpy as np

import jax
import jax.numpy as jnp
from jax.experimental import pallas as pl
from jax.experimental.pallas import tpu as pltpu


# ----------------------------------------------------------------------------
# small helpers
# ----------------------------------------------------------------------------

def _round_up(n, m):
    return ((n + m - 1) // m) * m


def _mm(a, b, dt):
    # MXU matmul: operands in `dt` (bf16 by default), f32 accumulation.
    return jnp.dot(a.astype(dt), b.astype(dt), preferred_element_type=jnp.float32)


def _mm_nt(a, b, dt):
    # [M,K] x [N,K] -> [M,N]; contraction over the lane-contiguous last axes.
    return jax.lax.dot_general(a.astype(dt), b.astype(dt),
                               (((1,), (1,)), ((), ())),
                               preferred_element_type=jnp.float32)


def _ln(y, g, b, eps):
    mu = jnp.mean(y, axis=-1, keepdims=True)
    var = jnp.mean((y - mu) ** 2, axis=-1, keepdims=True)
    return (y - mu) * jax.lax.rsqrt(var + eps) * g + b


def _wspec(shape):
    nd = len(shape)
    return pl.BlockSpec(shape, lambda *_args, _nd=nd: (0,) * _nd)


def _inverse_sigmoid_jnp(x, eps=1e-5):
    x = jnp.clip(x, 0.0, 1.0)
    return jnp.log(jnp.maximum(x, eps) / jnp.maximum(1.0 - x, eps))


_NEG = -1e30


# ----------------------------------------------------------------------------
# fused per-layer kernel
#   grid = (B, n_kv_tiles); prologue at kv==0, flash cross-attn body, epilogue at kv==last.
# ----------------------------------------------------------------------------

def _fused_layer_kernel(
    # activations
    x_ref, rb_ref, f_ref,
    # pos-MLP (shared across layers)
    pm_w1, pm_b1, pm_w2, pm_b2,
    # self-attention + LN1
    sa_wqk, sa_bqk, sa_wv, sa_bv, sa_wo, sa_bo, ln1_g, ln1_b,
    # cross-attention + LN2
    ca_wq, ca_bq, ca_wkv, ca_bkv, ca_wo, ca_bo, ln2_g, ln2_b,
    # FFN + LN3
    fw1, fb1, fw2, fb2, ln3_g, ln3_b,
    # bbox head
    bw1, bb1, bw2, bb2, bw3, bb3,
    # outputs
    out_ref, pos_ref, delta_ref, refined_ref,
    # scratch
    x1_scr, q_scr, m_scr, l_scr, acc_scr,
    *, num_heads, scale, eps, mm_dtype, nk_valid, needs_mask):

    kv = pl.program_id(1)
    nkv = pl.num_programs(1)
    h_dim = x_ref.shape[-1]
    dh = h_dim // num_heads
    tkv = f_ref.shape[0]

    # ---------------- prologue: pos-MLP, self-attention block, cross-attn Q ----------------
    @pl.when(kv == 0)
    def _prologue():
        x = x_ref[...].astype(jnp.float32)                       # [Nq, H]
        rb = rb_ref[...].astype(jnp.float32)                     # [Nq, 4]

        # pos-MLP: MLP(4 -> 2H -> H).  The K=4 stage is 4 broadcast-FMAs on the VPU.
        w1 = pm_w1[...].astype(jnp.float32)                      # [4, 2H]
        h1 = pm_b1[...].astype(jnp.float32) + rb[:, 0:1] * w1[0:1, :]
        for j in range(1, 4):
            h1 = h1 + rb[:, j:j + 1] * w1[j:j + 1, :]
        h1 = jnp.maximum(h1, 0.0)
        pos = _mm(h1, pm_w2[...], mm_dtype) + pm_b2[...]         # [Nq, H] f32
        pos_ref[...] = pos.astype(pos_ref.dtype)

        # self-attention: Q|K from x+pos via one [H,2H] matmul, V from x.
        q_in = x + pos
        qk = _mm(q_in, sa_wqk[...], mm_dtype) + sa_bqk[...]      # [Nq, 2H]
        q = qk[:, :h_dim].astype(mm_dtype)
        k = qk[:, h_dim:].astype(mm_dtype)
        v = (_mm(x, sa_wv[...], mm_dtype) + sa_bv[...]).astype(mm_dtype)
        ctxs = []
        for hh in range(num_heads):
            hs, he = hh * dh, (hh + 1) * dh
            s = _mm_nt(q[:, hs:he], k[:, hs:he], mm_dtype) * scale   # [Nq, Nq]
            s = s - jnp.max(s, axis=-1, keepdims=True)
            e = jnp.exp(s)
            p = e / jnp.sum(e, axis=-1, keepdims=True)
            ctxs.append(_mm(p, v[:, hs:he], mm_dtype))               # [Nq, dh]
        ctx = jnp.concatenate(ctxs, axis=-1)                         # [Nq, H]
        attn = _mm(ctx, sa_wo[...], mm_dtype) + sa_bo[...]           # single K=H out-proj
        x1 = _ln(x + attn, ln1_g[...], ln1_b[...], eps)
        x1_scr[...] = x1

        # cross-attention Q projection + flash state init
        q_scr[...] = (_mm(x1 + pos, ca_wq[...], mm_dtype) + ca_bq[...]).astype(q_scr.dtype)
        m_scr[...] = jnp.full(m_scr.shape, _NEG, dtype=m_scr.dtype)
        l_scr[...] = jnp.zeros(l_scr.shape, dtype=l_scr.dtype)
        acc_scr[...] = jnp.zeros(acc_scr.shape, dtype=acc_scr.dtype)

    # ---------------- body: KV-tiled flash cross-attention ----------------
    f = f_ref[...]                                               # [TKV, H]
    kvp = _mm(f, ca_wkv[...], mm_dtype) + ca_bkv[...]            # fused K|V proj -> [TKV, 2H]
    k = kvp[:, :h_dim].astype(mm_dtype)
    v = kvp[:, h_dim:].astype(mm_dtype)
    q = q_scr[...]
    if needs_mask:
        col = kv * tkv + jax.lax.broadcasted_iota(jnp.int32, (1, tkv), 1)
        valid = col < nk_valid                                   # [1, TKV]
    for hh in range(num_heads):
        hs, he = hh * dh, (hh + 1) * dh
        s = _mm_nt(q[:, hs:he], k[:, hs:he], mm_dtype) * scale   # [Nq, TKV]
        if needs_mask:
            s = jnp.where(valid, s, _NEG)
        m_prev = m_scr[hh]                                       # [Nq, 1]
        m_new = jnp.maximum(m_prev, jnp.max(s, axis=-1, keepdims=True))
        alpha = jnp.exp(m_prev - m_new)
        p = jnp.exp(s - m_new)
        l_scr[hh] = alpha * l_scr[hh] + jnp.sum(p, axis=-1, keepdims=True)
        acc_scr[hh] = alpha * acc_scr[hh] + _mm(p, v[:, hs:he], mm_dtype)
        m_scr[hh] = m_new

    # ---------------- epilogue: cross out-proj + LN2, FFN + LN3, bbox head + refine --------
    @pl.when(kv == nkv - 1)
    def _epilogue():
        ctx_all = acc_scr[...] / l_scr[...]                      # [heads, Nq, dh]
        ctx = jnp.concatenate([ctx_all[hh] for hh in range(num_heads)], axis=-1)  # [Nq, H]
        attn = _mm(ctx, ca_wo[...], mm_dtype) + ca_bo[...]       # single K=H out-proj
        x1 = x1_scr[...]
        x2 = _ln(x1 + attn, ln2_g[...], ln2_b[...], eps)

        hid = jnp.maximum(_mm(x2, fw1[...], mm_dtype) + fb1[...], 0.0)
        x3 = _ln(x2 + _mm(hid, fw2[...], mm_dtype) + fb2[...], ln3_g[...], ln3_b[...], eps)
        out_ref[...] = x3.astype(out_ref.dtype)

        b1h = jnp.maximum(_mm(x3, bw1[...], mm_dtype) + bb1[...], 0.0)
        b2h = jnp.maximum(_mm(b1h, bw2[...], mm_dtype) + bb2[...], 0.0)
        d = _mm(b2h, bw3[...], mm_dtype) + bb3[...]              # [Nq, 4]
        delta_ref[...] = d.astype(delta_ref.dtype)
        r = jnp.clip(rb_ref[...].astype(jnp.float32), 0.0, 1.0)
        inv = jnp.log(jnp.maximum(r, 1e-5) / jnp.maximum(1.0 - r, 1e-5))
        refined_ref[...] = jax.nn.sigmoid(d + inv).astype(refined_ref.dtype)


# ----------------------------------------------------------------------------
# cosine classifier kernel (score-head proj + L2-normalize + query x class contraction)
# ----------------------------------------------------------------------------

def _cls_kernel(x_ref, lf_ref, w_ref, b_ref, o_ref, *, cls_scale, mm_dtype):
    x = x_ref[...].astype(jnp.float32)                           # [Nq, H]
    lf = lf_ref[...]                                             # [C, H]
    clas = _mm(lf, w_ref[...], mm_dtype) + b_ref[...]            # [C, H]
    xn = x * jax.lax.rsqrt(jnp.maximum(jnp.sum(x * x, axis=-1, keepdims=True), 1e-24))
    cn = clas * jax.lax.rsqrt(jnp.maximum(jnp.sum(clas * clas, axis=-1, keepdims=True), 1e-24))
    o_ref[...] = (cls_scale * _mm_nt(xn, cn, mm_dtype)).astype(o_ref.dtype)


# ----------------------------------------------------------------------------
# parameter construction (deterministic, PRNGKey-based)
# ----------------------------------------------------------------------------

def _dense(key, fi, fo, wdtype):
    w = (jax.random.normal(key, (fi, fo), jnp.float32) * (1.0 / np.sqrt(fi))).astype(wdtype)
    return w, jnp.zeros((1, fo), jnp.float32)


def _attn_self_params(key, h, wdtype):
    kq, kk, kv, ko = jax.random.split(key, 4)
    wq, bq = _dense(kq, h, h, wdtype)
    wk, bk = _dense(kk, h, h, wdtype)
    wv, bv = _dense(kv, h, h, wdtype)
    wo, bo = _dense(ko, h, h, wdtype)
    return dict(wqk=jnp.concatenate([wq, wk], axis=1),
                bqk=jnp.concatenate([bq, bk], axis=1),
                wv=wv, bv=bv, wo=wo, bo=bo)


def _attn_cross_params(key, h, wdtype):
    kq, kk, kv, ko = jax.random.split(key, 4)
    wq, bq = _dense(kq, h, h, wdtype)
    wk, bk = _dense(kk, h, h, wdtype)
    wv, bv = _dense(kv, h, h, wdtype)
    wo, bo = _dense(ko, h, h, wdtype)
    return dict(wq=wq, bq=bq,
                wkv=jnp.concatenate([wk, wv], axis=1),
                bkv=jnp.concatenate([bk, bv], axis=1),
                wo=wo, bo=bo)


# ----------------------------------------------------------------------------
# module
# ----------------------------------------------------------------------------

class DeformableTransformerDecoderV2Pallas:
    def __init__(self, hidden_dim, num_heads, num_layers, d_ffn, num_classes,
                 eval_idx=-1, cls_type="cosine", key=jax.random.PRNGKey(0),
                 matmul_dtype=jnp.bfloat16, act_dtype=jnp.bfloat16,
                 kv_tile=512, vmem_limit_bytes=32 * 1024 * 1024):
        # kv_tile / vmem_limit_bytes defaults are safe on v5e/v6e/v7x; on v6e (128 MiB VMEM)
        # raising them to 1024-2048 / 64+ MiB amortizes per-grid-step overhead further.
        assert cls_type == "cosine"
        assert hidden_dim % num_heads == 0
        self.h = hidden_dim
        self.heads = num_heads
        self.dh = hidden_dim // num_heads
        self.num_layers = num_layers
        self.eval_idx = eval_idx if eval_idx >= 0 else num_layers + eval_idx
        self.cls_scale = float(np.exp(np.log(1.0 / 0.07)))
        self.mm_dtype = matmul_dtype
        self.act_dtype = act_dtype
        self.kv_tile = int(kv_tile)
        self.vmem_limit_bytes = int(vmem_limit_bytes)
        self.eps = 1e-5

        keys = iter(jax.random.split(key, 8 + 16 * num_layers))
        h = hidden_dim
        wdt = matmul_dtype

        # pos_mlp: MLP(4 -> 2h -> h), ReLU in between (shared across layers)
        self.pos_mlp = {}
        self.pos_mlp["w1"], self.pos_mlp["b1"] = _dense(next(keys), 4, 2 * h, wdt)
        self.pos_mlp["w2"], self.pos_mlp["b2"] = _dense(next(keys), 2 * h, h, wdt)

        self.layers = []
        self.bbox_head = []
        self.score_head = []
        for _ in range(num_layers):
            lp = dict(
                self_attn=_attn_self_params(next(keys), h, wdt),
                cross_attn=_attn_cross_params(next(keys), h, wdt),
                ln1_g=jnp.ones((1, h), jnp.float32), ln1_b=jnp.zeros((1, h), jnp.float32),
                ln2_g=jnp.ones((1, h), jnp.float32), ln2_b=jnp.zeros((1, h), jnp.float32),
                ln3_g=jnp.ones((1, h), jnp.float32), ln3_b=jnp.zeros((1, h), jnp.float32),
            )
            lp["ffn1_w"], lp["ffn1_b"] = _dense(next(keys), h, d_ffn, wdt)
            lp["ffn2_w"], lp["ffn2_b"] = _dense(next(keys), d_ffn, h, wdt)
            self.layers.append(lp)

            bh = {}
            bh["w1"], bh["b1"] = _dense(next(keys), h, h, wdt)
            bh["w2"], bh["b2"] = _dense(next(keys), h, h, wdt)
            bh["w3"], bh["b3"] = _dense(next(keys), h, 4, wdt)
            self.bbox_head.append(bh)

            sh = {}
            sh["w"], sh["b"] = _dense(next(keys), h, h, wdt)
            self.score_head.append(sh)

    # ---- fused per-layer call ----------------------------------------------

    def _layer_call(self, i, x, refer_bbox, feats_pad, nk_valid, tkv):
        B, Nq, h = x.shape
        nk_pad = feats_pad.shape[1]
        nkv = nk_pad // tkv
        lp = self.layers[i]
        sa = lp["self_attn"]
        ca = lp["cross_attn"]
        bh = self.bbox_head[i]
        pm = self.pos_mlp

        kern = functools.partial(
            _fused_layer_kernel, num_heads=self.heads,
            scale=1.0 / math.sqrt(self.dh), eps=self.eps, mm_dtype=self.mm_dtype,
            nk_valid=nk_valid, needs_mask=(nk_valid < nk_pad))

        weights = [
            pm["w1"], pm["b1"], pm["w2"], pm["b2"],
            sa["wqk"], sa["bqk"], sa["wv"], sa["bv"], sa["wo"], sa["bo"],
            lp["ln1_g"], lp["ln1_b"],
            ca["wq"], ca["bq"], ca["wkv"], ca["bkv"], ca["wo"], ca["bo"],
            lp["ln2_g"], lp["ln2_b"],
            lp["ffn1_w"], lp["ffn1_b"], lp["ffn2_w"], lp["ffn2_b"],
            lp["ln3_g"], lp["ln3_b"],
            bh["w1"], bh["b1"], bh["w2"], bh["b2"], bh["w3"], bh["b3"],
        ]
        in_specs = [
            pl.BlockSpec((None, Nq, h), lambda b, kv: (b, 0, 0)),     # output/embed
            pl.BlockSpec((None, Nq, 4), lambda b, kv: (b, 0, 0)),     # refer_bbox
            pl.BlockSpec((None, tkv, h), lambda b, kv: (b, kv, 0)),   # feats KV tile
        ] + [_wspec(w.shape) for w in weights]

        out_shapes = (
            jax.ShapeDtypeStruct((B, Nq, h), self.act_dtype),   # layer output (bf16 across layers)
            jax.ShapeDtypeStruct((B, Nq, h), jnp.float32),      # pos_query
            jax.ShapeDtypeStruct((B, Nq, 4), jnp.float32),      # bbox delta
            jax.ShapeDtypeStruct((B, Nq, 4), jnp.float32),      # refined bbox
        )
        out_specs = (
            pl.BlockSpec((None, Nq, h), lambda b, kv: (b, 0, 0)),
            pl.BlockSpec((None, Nq, h), lambda b, kv: (b, 0, 0)),
            pl.BlockSpec((None, Nq, 4), lambda b, kv: (b, 0, 0)),
            pl.BlockSpec((None, Nq, 4), lambda b, kv: (b, 0, 0)),
        )
        scratch = [
            pltpu.VMEM((Nq, h), jnp.float32),                    # x1 (post self-attn + LN1)
            pltpu.VMEM((Nq, h), self.mm_dtype),                  # cross-attn Q
            pltpu.VMEM((self.heads, Nq, 1), jnp.float32),        # flash running max
            pltpu.VMEM((self.heads, Nq, 1), jnp.float32),        # flash running sum
            pltpu.VMEM((self.heads, Nq, self.dh), jnp.float32),  # flash accumulator
        ]
        return pl.pallas_call(
            kern,
            out_shape=out_shapes,
            grid=(B, nkv),
            in_specs=in_specs,
            out_specs=out_specs,
            scratch_shapes=scratch,
            compiler_params=pltpu.CompilerParams(
                dimension_semantics=("parallel", "arbitrary"),
                vmem_limit_bytes=self.vmem_limit_bytes),
        )(x, refer_bbox, feats_pad, *weights)

    def _cls_call(self, i, x, label_bch):
        B, Nq, h = x.shape
        C = label_bch.shape[1]
        p = self.score_head[i]
        kern = functools.partial(_cls_kernel, cls_scale=self.cls_scale, mm_dtype=self.mm_dtype)
        return pl.pallas_call(
            kern,
            out_shape=jax.ShapeDtypeStruct((B, Nq, C), jnp.float32),
            grid=(B,),
            in_specs=[
                pl.BlockSpec((None, Nq, h), lambda b: (b, 0, 0)),
                pl.BlockSpec((None, C, h), lambda b: (b, 0, 0)),
                _wspec(p["w"].shape), _wspec(p["b"].shape),
            ],
            out_specs=pl.BlockSpec((None, Nq, C), lambda b: (b, 0, 0)),
            compiler_params=pltpu.CompilerParams(dimension_semantics=("parallel",)),
        )(x, label_bch, p["w"], p["b"])

    # ---- forward -----------------------------------------------------------

    def __call__(self, embed, refer_bbox, feats, shapes, label_feats, task_feats,
                 attn_mask=None, padding_mask=None, training=False):
        # TODO(synk): attn_mask / padding_mask other than None are not wired into the kernel.
        del shapes, attn_mask, padding_mask, task_feats

        B, Nq, h = embed.shape
        Nk = feats.shape[1]
        tkv = min(self.kv_tile, _round_up(Nk, 8))
        nk_pad = _round_up(Nk, tkv)
        feats_c = feats.astype(self.act_dtype)
        if nk_pad != Nk:
            feats_c = jnp.pad(feats_c, ((0, 0), (0, nk_pad - Nk), (0, 0)))

        output = embed.astype(self.act_dtype)
        refer_bbox = jax.nn.sigmoid(refer_bbox)
        # one-time layout plumbing: [C, B, H] -> [B, C, H] keeps the hidden axis lane-dense
        # for the fused cosine classifier.
        label_bch = jnp.transpose(label_feats, (1, 0, 2))

        dec_bboxes, dec_cls = [], []
        last_refined_bbox = None
        pos_query = None

        for i in range(self.num_layers):
            output, pos_query, delta, refined_bbox = self._layer_call(
                i, output, refer_bbox, feats_c, Nk, tkv)

            if training:
                dec_cls.append(self._cls_call(i, output, label_bch))
                if i == 0:
                    dec_bboxes.append(refined_bbox)
                else:
                    # tiny elementwise refine vs previous box -> plain XLA (no extra launch)
                    dec_bboxes.append(jax.nn.sigmoid(
                        delta + _inverse_sigmoid_jnp(last_refined_bbox)))
            elif i == self.eval_idx:
                dec_cls.append(self._cls_call(i, output, label_bch))
                dec_bboxes.append(refined_bbox)
                break

            last_refined_bbox = refined_bbox
            refer_bbox = refined_bbox  # .detach() is a no-op in a pure forward

        return (output.astype(jnp.float32), pos_query,
                jnp.stack(dec_bboxes), jnp.stack(dec_cls))


# ----------------------------------------------------------------------------
# Demo
# ----------------------------------------------------------------------------
if __name__ == "__main__":
    hidden, heads, num_layers, d_ffn = 32, 4, 2, 64
    bs, nq, nc, task_len = 2, 8, 5, 3
    shapes = [(4, 4)]                       # one feature level, 4x4 -> 16 tokens
    n_feat = sum(hh * ww for hh, ww in shapes)

    key = jax.random.PRNGKey(0)
    k1, k2, k3, k4, k5, k6 = jax.random.split(key, 6)
    embed = jax.random.normal(k1, (bs, nq, hidden), jnp.float32)
    refer_bbox = jax.random.normal(k2, (bs, nq, 4), jnp.float32)
    feats = jax.random.normal(k3, (bs, n_feat, hidden), jnp.float32)
    label_feats = jax.random.normal(k4, (nc, bs, hidden), jnp.float32)
    task_feats = jax.random.normal(k5, (task_len, bs, hidden), jnp.float32)

    model = DeformableTransformerDecoderV2Pallas(
        hidden_dim=hidden, num_heads=heads, num_layers=num_layers,
        d_ffn=d_ffn, num_classes=nc, eval_idx=-1, cls_type="cosine", key=k6)

    @jax.jit
    def run(embed, refer_bbox, feats, label_feats, task_feats):
        return model(embed, refer_bbox, feats, shapes, label_feats, task_feats,
                     training=False)

    output, pos_query, dec_bboxes, dec_cls = run(
        embed, refer_bbox, feats, label_feats, task_feats)

    jax.block_until_ready((output, pos_query, dec_bboxes, dec_cls))
    assert output.shape == (bs, nq, hidden)
    assert pos_query.shape == (bs, nq, hidden)
    assert dec_bboxes.shape == (1, bs, nq, 4)
    assert dec_cls.shape == (1, bs, nq, nc)
    assert np.all(np.isfinite(np.asarray(output)))
    assert np.all(np.isfinite(np.asarray(dec_bboxes)))
    assert np.all(np.isfinite(np.asarray(dec_cls)))
    print("KERNEL_OK")
</pallas_src>

<mosaic_0001>
module attributes {stable_mosaic.version = 11 : i64} {
  func.func @_cls_kernel(%arg0: i32, %arg1: memref<1x8x32xbf16, #tpu.memory_space<vmem>>, %arg2: memref<1x5x32xf32, #tpu.memory_space<vmem>>, %arg3: memref<32x32xbf16, #tpu.memory_space<vmem>>, %arg4: memref<1x32xf32, #tpu.memory_space<vmem>>, %arg5: memref<1x8x5xf32, #tpu.memory_space<vmem>>) attributes {dimension_semantics = [#tpu.dimension_semantics<parallel>], iteration_bounds = array<i64: 2>, scalar_prefetch = 0 : i64, scratch_operands = 0 : i64, tpu.core_type = #tpu.core_type<tc>, window_params = [{transform_indices = @transform_0, window_bounds = array<i64: 1, 8, 32>}, {transform_indices = @transform_1, window_bounds = array<i64: 1, 5, 32>}, {pipeline_mode = #tpu.pipeline_mode<synchronous>, transform_indices = @transform_2, window_bounds = array<i64: 32, 32>}, {pipeline_mode = #tpu.pipeline_mode<synchronous>, transform_indices = @transform_3, window_bounds = array<i64: 1, 32>}, {transform_indices = @transform_4, window_bounds = array<i64: 1, 8, 5>}]} {
    %c0 = arith.constant 0 : index
    %c0_0 = arith.constant 0 : index
    %c0_1 = arith.constant 0 : index
    %0 = vector.load %arg1[%c0, %c0_0, %c0_1] : memref<1x8x32xbf16, #tpu.memory_space<vmem>>, vector<1x8x32xbf16>
    %1 = vector.shape_cast %0 : vector<1x8x32xbf16> to vector<8x32xbf16>
    %2 = arith.extf %1 : vector<8x32xbf16> to vector<8x32xf32>
    %c0_2 = arith.constant 0 : index
    %c0_3 = arith.constant 0 : index
    %c0_4 = arith.constant 0 : index
    %3 = vector.load %arg2[%c0_2, %c0_3, %c0_4] : memref<1x5x32xf32, #tpu.memory_space<vmem>>, vector<1x5x32xf32>
    %4 = vector.shape_cast %3 : vector<1x5x32xf32> to vector<5x32xf32>
    %c0_5 = arith.constant 0 : index
    %c0_6 = arith.constant 0 : index
    %5 = vector.load %arg3[%c0_5, %c0_6] : memref<32x32xbf16, #tpu.memory_space<vmem>>, vector<32x32xbf16>
    %6 = arith.truncf %4 : vector<5x32xf32> to vector<5x32xbf16>
    %cst = arith.constant dense<0.000000e+00> : vector<5x32xf32>
    %7 = tpu.matmul %6, %5, %cst {dimension_numbers = #tpu.dot_dimension_numbers<[1], [0], [0], [1], [0, 0, 1, 1], [], []>} : vector<5x32xbf16>, vector<32x32xbf16>, vector<5x32xf32> -> vector<5x32xf32>
    %c0_7 = arith.constant 0 : index
    %c0_8 = arith.constant 0 : index
    %8 = vector.load %arg4[%c0_7, %c0_8] : memref<1x32xf32, #tpu.memory_space<vmem>>, vector<1x32xf32>
    %9 = vector.broadcast %8 : vector<1x32xf32> to vector<5x32xf32>
    %10 = arith.addf %7, %9 : vector<5x32xf32>
    %11 = arith.mulf %2, %2 : vector<8x32xf32>
    %cst_9 = arith.constant dense<0.000000e+00> : vector<8xf32>
    %12 = vector.multi_reduction <add>, %11, %cst_9 [1] : vector<8x32xf32> to vector<8xf32>
    %13 = vector.shape_cast %12 : vector<8xf32> to vector<8x1xf32>
    %cst_10 = arith.constant 1.000000e-24 : f32
    %14 = vector.broadcast %cst_10 : f32 to vector<8x1xf32>
    %15 = arith.maximumf %13, %14 : vector<8x1xf32>
    %16 = math.rsqrt %15 : vector<8x1xf32>
    %17 = vector.broadcast %16 : vector<8x1xf32> to vector<8x32xf32>
    %18 = arith.mulf %2, %17 : vector<8x32xf32>
    %19 = arith.mulf %10, %10 : vector<5x32xf32>
    %cst_11 = arith.constant dense<0.000000e+00> : vector<5xf32>
    %20 = vector.multi_reduction <add>, %19, %cst_11 [1] : vector<5x32xf32> to vector<5xf32>
    %21 = vector.shape_cast %20 : vector<5xf32> to vector<5x1xf32>
    %cst_12 = arith.constant 1.000000e-24 : f32
    %22 = vector.broadcast %cst_12 : f32 to vector<5x1xf32>
    %23 = arith.maximumf %21, %22 : vector<5x1xf32>
    %24 = math.rsqrt %23 : vector<5x1xf32>
    %25 = vector.broadcast %24 : vector<5x1xf32> to vector<5x32xf32>
    %26 = arith.mulf %10, %25 : vector<5x32xf32>
    %27 = arith.truncf %18 : vector<8x32xf32> to vector<8x32xbf16>
    %28 = arith.truncf %26 : vector<5x32xf32> to vector<5x32xbf16>
    %cst_13 = arith.constant dense<0.000000e+00> : vector<8x5xf32>
    %29 = tpu.matmul %27, %28, %cst_13 {dimension_numbers = #tpu.dot_dimension_numbers<[1], [1], [0], [0], [0, 0, 1, 0], [], []>} : vector<8x32xbf16>, vector<5x32xbf16>, vector<8x5xf32> -> vector<8x5xf32>
    %cst_14 = arith.constant 14.2857141 : f32
    %30 = vector.broadcast %cst_14 : f32 to vector<8x5xf32>
    %31 = arith.mulf %30, %29 : vector<8x5xf32>
    %c0_15 = arith.constant 0 : index
    %c0_16 = arith.constant 0 : index
    %c0_17 = arith.constant 0 : index
    %32 = vector.load %arg5[%c0_15, %c0_16, %c0_17] : memref<1x8x5xf32, #tpu.memory_space<vmem>>, vector<1x8x5xf32>
    %33 = vector.shape_cast %32 : vector<1x8x5xf32> to vector<8x5xf32>
    %34 = vector.shape_cast %31 : vector<8x5xf32> to vector<1x8x5xf32>
    tpu.vector_store %arg5[%c0_15, %c0_16, %c0_17], %34 {strides = array<i32>} : memref<1x8x5xf32, #tpu.memory_space<vmem>>, vector<1x8x5xf32>,
    return
  }
  func.func @transform_0(%arg0: i32) -> (i32, i32, i32) {
    %c0_i32 = arith.constant 0 : i32
    %c0_i32_0 = arith.constant 0 : i32
    %c0_i32_1 = arith.constant 0 : i32
    return %arg0, %c0_i32, %c0_i32_0 : i32, i32, i32
  }
  func.func @transform_1(%arg0: i32) -> (i32, i32, i32) {
    %c0_i32 = arith.constant 0 : i32
    %c0_i32_0 = arith.constant 0 : i32
    %c0_i32_1 = arith.constant 0 : i32
    return %arg0, %c0_i32, %c0_i32_0 : i32, i32, i32
  }
  func.func @transform_2(%arg0: i32) -> (i32, i32) {
    %c0_i32 = arith.constant 0 : i32
    %c0_i32_0 = arith.constant 0 : i32
    %c0_i32_1 = arith.constant 0 : i32
    return %c0_i32, %c0_i32_0 : i32, i32
  }
  func.func @transform_3(%arg0: i32) -> (i32, i32) {
    %c0_i32 = arith.constant 0 : i32
    %c0_i32_0 = arith.constant 0 : i32
    %c0_i32_1 = arith.constant 0 : i32
    return %c0_i32, %c0_i32_0 : i32, i32
  }
  func.func @transform_4(%arg0: i32) -> (i32, i32, i32) {
    %c0_i32 = arith.constant 0 : i32
    %c0_i32_0 = arith.constant 0 : i32
    %c0_i32_1 = arith.constant 0 : i32
    return %arg0, %c0_i32, %c0_i32_0 : i32, i32, i32
  }
}

module attributes {stable_mosaic.version = 11 : i64} {
  func.func @_fused_layer_kernel(%arg0: i32, %arg1: i32, %arg2: memref<1x8x32xbf16, #tpu.memory_space<vmem>>, %arg3: memref<1x8x4xf32, #tpu.memory_space<vmem>>, %arg4: memref<1x16x32xbf16, #tpu.memory_space<vmem>>, %arg5: memref<4x64xbf16, #tpu.memory_space<vmem>>, %arg6: memref<1x64xf32, #tpu.memory_space<vmem>>, %arg7: memref<64x32xbf16, #tpu.memory_space<vmem>>, %arg8: memref<1x32xf32, #tpu.memory_space<vmem>>, %arg9: memref<32x64xbf16, #tpu.memory_space<vmem>>, %arg10: memref<1x64xf32, #tpu.memory_space<vmem>>, %arg11: memref<32x32xbf16, #tpu.memory_space<vmem>>, %arg12: memref<1x32xf32, #tpu.memory_space<vmem>>, %arg13: memref<32x32xbf16, #tpu.memory_space<vmem>>, %arg14: memref<1x32xf32, #tpu.memory_space<vmem>>, %arg15: memref<1x32xf32, #tpu.memory_space<vmem>>, %arg16: memref<1x32xf32, #tpu.memory_space<vmem>>, %arg17: memref<32x32xbf16, #tpu.memory_space<vmem>>, %arg18: memref<1x32xf32, #tpu.memory_space<vmem>>, %arg19: memref<32x64xbf16, #tpu.memory_space<vmem>>, %arg20: memref<1x64xf32, #tpu.memory_space<vmem>>, %arg21: memref<32x32xbf16, #tpu.memory_space<vmem>>, %arg22: memref<1x32xf32, #tpu.memory_space<vmem>>, %arg23: memref<1x32xf32, #tpu.memory_space<vmem>>, %arg24: memref<1x32xf32, #tpu.memory_space<vmem>>, %arg25: memref<32x64xbf16, #tpu.memory_space<vmem>>, %arg26: memref<1x64xf32, #tpu.memory_space<vmem>>, %arg27: memref<64x32xbf16, #tpu.memory_space<vmem>>, %arg28: memref<1x32xf32, #tpu.memory_space<vmem>>, %arg29: memref<1x32xf32, #tpu.memory_space<vmem>>, %arg30: memref<1x32xf32, #tpu.memory_space<vmem>>, %arg31: memref<32x32xbf16, #tpu.memory_space<vmem>>, %arg32: memref<1x32xf32, #tpu.memory_space<vmem>>, %arg33: memref<32x32xbf16, #tpu.memory_space<vmem>>, %arg34: memref<1x32xf32, #tpu.memory_space<vmem>>, %arg35: memref<32x4xbf16, #tpu.memory_space<vmem>>, %arg36: memref<1x4xf32, #tpu.memory_space<vmem>>, %arg37: memref<1x8x32xbf16, #tpu.memory_space<vmem>>, %arg38: memref<1x8x32xf32, #tpu.memory_space<vmem>>, %arg39: memref<1x8x4xf32, #tpu.memory_space<vmem>>, %arg40: memref<1x8x4xf32, #tpu.memory_space<vmem>>, %arg41: memref<8x32xf32, #tpu.memory_space<vmem>>, %arg42: memref<8x32xbf16, #tpu.memory_space<vmem>>, %arg43: memref<4x8x1xf32, #tpu.memory_space<vmem>>, %arg44: memref<4x8x1xf32, #tpu.memory_space<vmem>>, %arg45: memref<4x8x8xf32, #tpu.memory_space<vmem>>) attributes {dimension_semantics = [#tpu.dimension_semantics<parallel>, #tpu.dimension_semantics<arbitrary>], iteration_bounds = array<i64: 2, 1>, scalar_prefetch = 0 : i64, scratch_operands = 5 : i64, tpu.core_type = #tpu.core_type<tc>, window_params = [{transform_indices = @transform_0, window_bounds = array<i64: 1, 8, 32>}, {transform_indices = @transform_1, window_bounds = array<i64: 1, 8, 4>}, {transform_indices = @transform_2, window_bounds = array<i64: 1, 16, 32>}, {pipeline_mode = #tpu.pipeline_mode<synchronous>, transform_indices = @transform_3, window_bounds = array<i64: 4, 64>}, {pipeline_mode = #tpu.pipeline_mode<synchronous>, transform_indices = @transform_4, window_bounds = array<i64: 1, 64>}, {pipeline_mode = #tpu.pipeline_mode<synchronous>, transform_indices = @transform_5, window_bounds = array<i64: 64, 32>}, {pipeline_mode = #tpu.pipeline_mode<synchronous>, transform_indices = @transform_6, window_bounds = array<i64: 1, 32>}, {pipeline_mode = #tpu.pipeline_mode<synchronous>, transform_indices = @transform_7, window_bounds = array<i64: 32, 64>}, {pipeline_mode = #tpu.pipeline_mode<synchronous>, transform_indices = @transform_8, window_bounds = array<i64: 1, 64>}, {pipeline_mode = #tpu.pipeline_mode<synchronous>, transform_indices = @transform_9, window_bounds = array<i64: 32, 32>}, {pipeline_mode = #tpu.pipeline_mode<synchronous>, transform_indices = @transform_10, window_bounds = array<i64: 1, 32>}, {pipeline_mode = #tpu.pipeline_mode<synchronous>, transform_indices = @transform_11, window_bounds = array<i64: 32, 32>}, {pipeline_mode = #tpu.pipeline_mode<synchronous>, transform_indices = @transform_12, window_bounds = array<i64: 1, 32>}, {pipeline_mode = #tpu.pipeline_mode<synchronous>, transform_indices = @transform_13, window_bounds = array<i64: 1, 32>}, {pipeline_mode = #tpu.pipeline_mode<synchronous>, transform_indices = @transform_14, window_bounds = array<i64: 1, 32>}, {pipeline_mode = #tpu.pipeline_mode<synchronous>, transform_indices = @transform_15, window_bounds = array<i64: 32, 32>}, {pipeline_mode = #tpu.pipeline_mode<synchronous>, transform_indices = @transform_16, window_bounds = array<i64: 1, 32>}, {pipeline_mode = #tpu.pipeline_mode<synchronous>, transform_indices = @transform_17, window_bounds = array<i64: 32, 64>}, {pipeline_mode = #tpu.pipeline_mode<synchronous>, transform_indices = @transform_18, window_bounds = array<i64: 1, 64>}, {pipeline_mode = #tpu.pipeline_mode<synchronous>, transform_indices = @transform_19, window_bounds = array<i64: 32, 32>}, {pipeline_mode = #tpu.pipeline_mode<synchronous>, transform_indices = @transform_20, window_bounds = array<i64: 1, 32>}, {pipeline_mode = #tpu.pipeline_mode<synchronous>, transform_indices = @transform_21, window_bounds = array<i64: 1, 32>}, {pipeline_mode = #tpu.pipeline_mode<synchronous>, transform_indices = @transform_22, window_bounds = array<i64: 1, 32>}, {pipeline_mode = #tpu.pipeline_mode<synchronous>, transform_indices = @transform_23, window_bounds = array<i64: 32, 64>}, {pipeline_mode = #tpu.pipeline_mode<synchronous>, transform_indices = @transform_24, window_bounds = array<i64: 1, 64>}, {pipeline_mode = #tpu.pipeline_mode<synchronous>, transform_indices = @transform_25, window_bounds = array<i64: 64, 32>}, {pipeline_mode = #tpu.pipeline_mode<synchronous>, transform_indices = @transform_26, window_bounds = array<i64: 1, 32>}, {pipeline_mode = #tpu.pipeline_mode<synchronous>, transform_indices = @transform_27, window_bounds = array<i64: 1, 32>}, {pipeline_mode = #tpu.pipeline_mode<synchronous>, transform_indices = @transform_28, window_bounds = array<i64: 1, 32>}, {pipeline_mode = #tpu.pipeline_mode<synchronous>, transform_indices = @transform_29, window_bounds = array<i64: 32, 32>}, {pipeline_mode = #tpu.pipeline_mode<synchronous>, transform_indices = @transform_30, window_bounds = array<i64: 1, 32>}, {pipeline_mode = #tpu.pipeline_mode<synchronous>, transform_indices = @transform_31, window_bounds = array<i64: 32, 32>}, {pipeline_mode = #tpu.pipeline_mode<synchronous>, transform_indices = @transform_32, window_bounds = array<i64: 1, 32>}, {pipeline_mode = #tpu.pipeline_mode<synchronous>, transform_indices = @transform_33, window_bounds = array<i64: 32, 4>}, {pipeline_mode = #tpu.pipeline_mode<synchronous>, transform_indices = @transform_34, window_bounds = array<i64: 1, 4>}, {transform_indices = @transform_35, window_bounds = array<i64: 1, 8, 32>}, {transform_indices = @transform_36, window_bounds = array<i64: 1, 8, 32>}, {transform_indices = @transform_37, window_bounds = array<i64: 1, 8, 4>}, {transform_indices = @transform_38, window_bounds = array<i64: 1, 8, 4>}]} {
    %c0_i32 = arith.constant 0 : i32
    %0 = arith.cmpi eq, %arg1, %c0_i32 : i32
    %1 = arith.extui %0 : i1 to i32
    %c0_i32_0 = arith.constant 0 : i32
    %2 = arith.cmpi ne, %1, %c0_i32_0 : i32
    scf.if %2 {
      %c0_100 = arith.constant 0 : index
      %c0_101 = arith.constant 0 : index
      %c0_102 = arith.constant 0 : index
      %170 = vector.load %arg2[%c0_100, %c0_101, %c0_102] : memref<1x8x32xbf16, #tpu.memory_space<vmem>>, vector<1x8x32xbf16>
      %171 = vector.shape_cast %170 : vector<1x8x32xbf16> to vector<8x32xbf16>
      %172 = arith.extf %171 : vector<8x32xbf16> to vector<8x32xf32>
      %c0_103 = arith.constant 0 : index
      %c0_104 = arith.constant 0 : index
      %c0_105 = arith.constant 0 : index
      %173 = vector.load %arg3[%c0_103, %c0_104, %c0_105] : memref<1x8x4xf32, #tpu.memory_space<vmem>>, vector<1x8x4xf32>
      %174 = vector.shape_cast %173 : vector<1x8x4xf32> to vector<8x4xf32>
      %c0_106 = arith.constant 0 : index
      %c0_107 = arith.constant 0 : index
      %175 = vector.load %arg5[%c0_106, %c0_107] : memref<4x64xbf16, #tpu.memory_space<vmem>>, vector<4x64xbf16>
      %176 = arith.extf %175 : vector<4x64xbf16> to vector<4x64xf32>
      %c0_108 = arith.constant 0 : index
      %c0_109 = arith.constant 0 : index
      %177 = vector.load %arg6[%c0_108, %c0_109] : memref<1x64xf32, #tpu.memory_space<vmem>>, vector<1x64xf32>
      %178 = vector.extract_strided_slice %174 {offsets = [0, 0], sizes = [8, 1], strides = [1, 1]} : vector<8x4xf32> to vector<8x1xf32>
      %179 = vector.extract_strided_slice %176 {offsets = [0, 0], sizes = [1, 64], strides = [1, 1]} : vector<4x64xf32> to vector<1x64xf32>
      %180 = vector.broadcast %178 : vector<8x1xf32> to vector<8x64xf32>
      %181 = vector.broadcast %179 : vector<1x64xf32> to vector<8x64xf32>
      %182 = arith.mulf %180, %181 : vector<8x64xf32>
      %183 = vector.broadcast %177 : vector<1x64xf32> to vector<8x64xf32>
      %184 = arith.addf %183, %182 : vector<8x64xf32>
      %185 = vector.extract_strided_slice %174 {offsets = [0, 1], sizes = [8, 1], strides = [1, 1]} : vector<8x4xf32> to vector<8x1xf32>
      %186 = vector.extract_strided_slice %176 {offsets = [1, 0], sizes = [1, 64], strides = [1, 1]} : vector<4x64xf32> to vector<1x64xf32>
      %187 = vector.broadcast %185 : vector<8x1xf32> to vector<8x64xf32>
      %188 = vector.broadcast %186 : vector<1x64xf32> to vector<8x64xf32>
      %189 = arith.mulf %187, %188 : vector<8x64xf32>
      %190 = arith.addf %184, %189 : vector<8x64xf32>
      %191 = vector.extract_strided_slice %174 {offsets = [0, 2], sizes = [8, 1], strides = [1, 1]} : vector<8x4xf32> to vector<8x1xf32>
      %192 = vector.extract_strided_slice %176 {offsets = [2, 0], sizes = [1, 64], strides = [1, 1]} : vector<4x64xf32> to vector<1x64xf32>
      %193 = vector.broadcast %191 : vector<8x1xf32> to vector<8x64xf32>
      %194 = vector.broadcast %192 : vector<1x64xf32> to vector<8x64xf32>
      %195 = arith.mulf %193, %194 : vector<8x64xf32>
      %196 = arith.addf %190, %195 : vector<8x64xf32>
      %197 = vector.extract_strided_slice %174 {offsets = [0, 3], sizes = [8, 1], strides = [1, 1]} : vector<8x4xf32> to vector<8x1xf32>
      %198 = vector.extract_strided_slice %176 {offsets = [3, 0], sizes = [1, 64], strides = [1, 1]} : vector<4x64xf32> to vector<1x64xf32>
      %199 = vector.broadcast %197 : vector<8x1xf32> to vector<8x64xf32>
      %200 = vector.broadcast %198 : vector<1x64xf32> to vector<8x64xf32>
      %201 = arith.mulf %199, %200 : vector<8x64xf32>
      %202 = arith.addf %196, %201 : vector<8x64xf32>
      %cst_110 = arith.constant 0.000000e+00 : f32
      %203 = vector.broadcast %cst_110 : f32 to vector<8x64xf32>
      %204 = arith.maximumf %202, %203 : vector<8x64xf32>
      %c0_111 = arith.constant 0 : index
      %c0_112 = arith.constant 0 : index
      %205 = vector.load %arg7[%c0_111, %c0_112] : memref<64x32xbf16, #tpu.memory_space<vmem>>, vector<64x32xbf16>
      %206 = arith.truncf %204 : vector<8x64xf32> to vector<8x64xbf16>
      %cst_113 = arith.constant dense<0.000000e+00> : vector<8x32xf32>
      %207 = tpu.matmul %206, %205, %cst_113 {dimension_numbers = #tpu.dot_dimension_numbers<[1], [0], [0], [1], [0, 0, 1, 1], [], []>} : vector<8x64xbf16>, vector<64x32xbf16>, vector<8x32xf32> -> vector<8x32xf32>
      %c0_114 = arith.constant 0 : index
      %c0_115 = arith.constant 0 : index
      %208 = vector.load %arg8[%c0_114, %c0_115] : memref<1x32xf32, #tpu.memory_space<vmem>>, vector<1x32xf32>
      %209 = vector.broadcast %208 : vector<1x32xf32> to vector<8x32xf32>
      %210 = arith.addf %207, %209 : vector<8x32xf32>
      %c0_116 = arith.constant 0 : index
      %c0_117 = arith.constant 0 : index
      %c0_118 = arith.constant 0 : index
      %211 = vector.load %arg38[%c0_116, %c0_117, %c0_118] : memref<1x8x32xf32, #tpu.memory_space<vmem>>, vector<1x8x32xf32>
      %212 = vector.shape_cast %211 : vector<1x8x32xf32> to vector<8x32xf32>
      %213 = vector.shape_cast %210 : vector<8x32xf32> to vector<1x8x32xf32>
      tpu.vector_store %arg38[%c0_116, %c0_117, %c0_118], %213 {strides = array<i32>} : memref<1x8x32xf32, #tpu.memory_space<vmem>>, vector<1x8x32xf32>,
      %214 = arith.addf %172, %210 : vector<8x32xf32>
      %c0_119 = arith.constant 0 : index
      %c0_120 = arith.constant 0 : index
      %215 = vector.load %arg9[%c0_119, %c0_120] : memref<32x64xbf16, #tpu.memory_space<vmem>>, vector<32x64xbf16>
      %216 = arith.truncf %214 : vector<8x32xf32> to vector<8x32xbf16>
      %cst_121 = arith.constant dense<0.000000e+00> : vector<8x64xf32>
      %217 = tpu.matmul %216, %215, %cst_121 {dimension_numbers = #tpu.dot_dimension_numbers<[1], [0], [0], [1], [0, 0, 1, 1], [], []>} : vector<8x32xbf16>, vector<32x64xbf16>, vector<8x64xf32> -> vector<8x64xf32>
      %c0_122 = arith.constant 0 : index
      %c0_123 = arith.constant 0 : index
      %218 = vector.load %arg10[%c0_122, %c0_123] : memref<1x64xf32, #tpu.memory_space<vmem>>, vector<1x64xf32>
      %219 = vector.broadcast %218 : vector<1x64xf32> to vector<8x64xf32>
      %220 = arith.addf %217, %219 : vector<8x64xf32>
      %221 = vector.extract_strided_slice %220 {offsets = [0, 0], sizes = [8, 32], strides = [1, 1]} : vector<8x64xf32> to vector<8x32xf32>
      %222 = arith.truncf %221 : vector<8x32xf32> to vector<8x32xbf16>
      %223 = vector.extract_strided_slice %220 {offsets = [0, 32], sizes = [8, 32], strides = [1, 1]} : vector<8x64xf32> to vector<8x32xf32>
      %224 = arith.truncf %223 : vector<8x32xf32> to vector<8x32xbf16>
      %c0_124 = arith.constant 0 : index
      %c0_125 = arith.constant 0 : index
      %225 = vector.load %arg11[%c0_124, %c0_125] : memref<32x32xbf16, #tpu.memory_space<vmem>>, vector<32x32xbf16>
      %226 = arith.truncf %172 : vector<8x32xf32> to vector<8x32xbf16>
      %cst_126 = arith.constant dense<0.000000e+00> : vector<8x32xf32>
      %227 = tpu.matmul %226, %225, %cst_126 {dimension_numbers = #tpu.dot_dimension_numbers<[1], [0], [0], [1], [0, 0, 1, 1], [], []>} : vector<8x32xbf16>, vector<32x32xbf16>, vector<8x32xf32> -> vector<8x32xf32>
      %c0_127 = arith.constant 0 : index
      %c0_128 = arith.constant 0 : index
      %228 = vector.load %arg12[%c0_127, %c0_128] : memref<1x32xf32, #tpu.memory_space<vmem>>, vector<1x32xf32>
      %229 = vector.broadcast %228 : vector<1x32xf32> to vector<8x32xf32>
      %230 = arith.addf %227, %229 : vector<8x32xf32>
      %231 = arith.truncf %230 : vector<8x32xf32> to vector<8x32xbf16>
      %232 = vector.extract_strided_slice %222 {offsets = [0, 0], sizes = [8, 8], strides = [1, 1]} : vector<8x32xbf16> to vector<8x8xbf16>
      %233 = vector.extract_strided_slice %224 {offsets = [0, 0], sizes = [8, 8], strides = [1, 1]} : vector<8x32xbf16> to vector<8x8xbf16>
      %cst_129 = arith.constant dense<0.000000e+00> : vector<8x8xf32>
      %234 = tpu.matmul %232, %233, %cst_129 {dimension_numbers = #tpu.dot_dimension_numbers<[1], [1], [0], [0], [0, 0, 1, 0], [], []>} : vector<8x8xbf16>, vector<8x8xbf16>, vector<8x8xf32> -> vector<8x8xf32>
      %cst_130 = arith.constant 0.353553385 : f32
      %235 = vector.broadcast %cst_130 : f32 to vector<8x8xf32>
      %236 = arith.mulf %234, %235 : vector<8x8xf32>
      %cst_131 = arith.constant dense<0xFF800000> : vector<8xf32>
      %237 = vector.multi_reduction <maximumf>, %236, %cst_131 [1] : vector<8x8xf32> to vector<8xf32>
      %238 = vector.shape_cast %237 : vector<8xf32> to vector<8x1xf32>
      %239 = vector.broadcast %238 : vector<8x1xf32> to vector<8x8xf32>
      %240 = arith.subf %236, %239 : vector<8x8xf32>
      %241 = math.exp %240 : vector<8x8xf32>
      %cst_132 = arith.constant dense<0.000000e+00> : vector<8xf32>
      %242 = vector.multi_reduction <add>, %241, %cst_132 [1] : vector<8x8xf32> to vector<8xf32>
      %243 = vector.shape_cast %242 : vector<8xf32> to vector<8x1xf32>
      %244 = vector.broadcast %243 : vector<8x1xf32> to vector<8x8xf32>
      %245 = arith.divf %241, %244 : vector<8x8xf32>
      %246 = vector.extract_strided_slice %231 {offsets = [0, 0], sizes = [8, 8], strides = [1, 1]} : vector<8x32xbf16> to vector<8x8xbf16>
      %247 = arith.truncf %245 : vector<8x8xf32> to vector<8x8xbf16>
      %cst_133 = arith.constant dense<0.000000e+00> : vector<8x8xf32>
      %248 = tpu.matmul %247, %246, %cst_133 {dimension_numbers = #tpu.dot_dimension_numbers<[1], [0], [0], [1], [0, 0, 1, 1], [], []>} : vector<8x8xbf16>, vector<8x8xbf16>, vector<8x8xf32> -> vector<8x8xf32>
      %249 = vector.extract_strided_slice %222 {offsets = [0, 8], sizes = [8, 8], strides = [1, 1]} : vector<8x32xbf16> to vector<8x8xbf16>
      %250 = vector.extract_strided_slice %224 {offsets = [0, 8], sizes = [8, 8], strides = [1, 1]} : vector<8x32xbf16> to vector<8x8xbf16>
      %cst_134 = arith.constant dense<0.000000e+00> : vector<8x8xf32>
      %251 = tpu.matmul %249, %250, %cst_134 {dimension_numbers = #tpu.dot_dimension_numbers<[1], [1], [0], [0], [0, 0, 1, 0], [], []>} : vector<8x8xbf16>, vector<8x8xbf16>, vector<8x8xf32> -> vector<8x8xf32>
      %cst_135 = arith.constant 0.353553385 : f32
      %252 = vector.broadcast %cst_135 : f32 to vector<8x8xf32>
      %253 = arith.mulf %251, %252 : vector<8x8xf32>
      %cst_136 = arith.constant dense<0xFF800000> : vector<8xf32>
      %254 = vector.multi_reduction <maximumf>, %253, %cst_136 [1] : vector<8x8xf32> to vector<8xf32>
      %255 = vector.shape_cast %254 : vector<8xf32> to vector<8x1xf32>
      %256 = vector.broadcast %255 : vector<8x1xf32> to vector<8x8xf32>
      %257 = arith.subf %253, %256 : vector<8x8xf32>
      %258 = math.exp %257 : vector<8x8xf32>
      %cst_137 = arith.constant dense<0.000000e+00> : vector<8xf32>
      %259 = vector.multi_reduction <add>, %258, %cst_137 [1] : vector<8x8xf32> to vector<8xf32>
      %260 = vector.shape_cast %259 : vector<8xf32> to vector<8x1xf32>
      %261 = vector.broadcast %260 : vector<8x1xf32> to vector<8x8xf32>
      %262 = arith.divf %258, %261 : vector<8x8xf32>
      %263 = vector.extract_strided_slice %231 {offsets = [0, 8], sizes = [8, 8], strides = [1, 1]} : vector<8x32xbf16> to vector<8x8xbf16>
      %264 = arith.truncf %262 : vector<8x8xf32> to vector<8x8xbf16>
      %cst_138 = arith.constant dense<0.000000e+00> : vector<8x8xf32>
      %265 = tpu.matmul %264, %263, %cst_138 {dimension_numbers = #tpu.dot_dimension_numbers<[1], [0], [0], [1], [0, 0, 1, 1], [], []>} : vector<8x8xbf16>, vector<8x8xbf16>, vector<8x8xf32> -> vector<8x8xf32>
      %266 = vector.extract_strided_slice %222 {offsets = [0, 16], sizes = [8, 8], strides = [1, 1]} : vector<8x32xbf16> to vector<8x8xbf16>
      %267 = vector.extract_strided_slice %224 {offsets = [0, 16], sizes = [8, 8], strides = [1, 1]} : vector<8x32xbf16> to vector<8x8xbf16>
      %cst_139 = arith.constant dense<0.000000e+00> : vector<8x8xf32>
      %268 = tpu.matmul %266, %267, %cst_139 {dimension_numbers = #tpu.dot_dimension_numbers<[1], [1], [0], [0], [0, 0, 1, 0], [], []>} : vector<8x8xbf16>, vector<8x8xbf16>, vector<8x8xf32> -> vector<8x8xf32>
      %cst_140 = arith.constant 0.353553385 : f32
      %269 = vector.broadcast %cst_140 : f32 to vector<8x8xf32>
      %270 = arith.mulf %268, %269 : vector<8x8xf32>
      %cst_141 = arith.constant dense<0xFF800000> : vector<8xf32>
      %271 = vector.multi_reduction <maximumf>, %270, %cst_141 [1] : vector<8x8xf32> to vector<8xf32>
      %272 = vector.shape_cast %271 : vector<8xf32> to vector<8x1xf32>
      %273 = vector.broadcast %272 : vector<8x1xf32> to vector<8x8xf32>
      %274 = arith.subf %270, %273 : vector<8x8xf32>
      %275 = math.exp %274 : vector<8x8xf32>
      %cst_142 = arith.constant dense<0.000000e+00> : vector<8xf32>
      %276 = vector.multi_reduction <add>, %275, %cst_142 [1] : vector<8x8xf32> to vector<8xf32>
      %277 = vector.shape_cast %276 : vector<8xf32> to vector<8x1xf32>
      %278 = vector.broadcast %277 : vector<8x1xf32> to vector<8x8xf32>
      %279 = arith.divf %275, %278 : vector<8x8xf32>
      %280 = vector.extract_strided_slice %231 {offsets = [0, 16], sizes = [8, 8], strides = [1, 1]} : vector<8x32xbf16> to vector<8x8xbf16>
      %281 = arith.truncf %279 : vector<8x8xf32> to vector<8x8xbf16>
      %cst_143 = arith.constant dense<0.000000e+00> : vector<8x8xf32>
      %282 = tpu.matmul %281, %280, %cst_143 {dimension_numbers = #tpu.dot_dimension_numbers<[1], [0], [0], [1], [0, 0, 1, 1], [], []>} : vector<8x8xbf16>, vector<8x8xbf16>, vector<8x8xf32> -> vector<8x8xf32>
      %283 = vector.extract_strided_slice %222 {offsets = [0, 24], sizes = [8, 8], strides = [1, 1]} : vector<8x32xbf16> to vector<8x8xbf16>
      %284 = vector.extract_strided_slice %224 {offsets = [0, 24], sizes = [8, 8], strides = [1, 1]} : vector<8x32xbf16> to vector<8x8xbf16>
      %cst_144 = arith.constant dense<0.000000e+00> : vector<8x8xf32>
      %285 = tpu.matmul %283, %284, %cst_144 {dimension_numbers = #tpu.dot_dimension_numbers<[1], [1], [0], [0], [0, 0, 1, 0], [], []>} : vector<8x8xbf16>, vector<8x8xbf16>, vector<8x8xf32> -> vector<8x8xf32>
      %cst_145 = arith.constant 0.353553385 : f32
      %286 = vector.broadcast %cst_145 : f32 to vector<8x8xf32>
      %287 = arith.mulf %285, %286 : vector<8x8xf32>
      %cst_146 = arith.constant dense<0xFF800000> : vector<8xf32>
      %288 = vector.multi_reduction <maximumf>, %287, %cst_146 [1] : vector<8x8xf32> to vector<8xf32>
      %289 = vector.shape_cast %288 : vector<8xf32> to vector<8x1xf32>
      %290 = vector.broadcast %289 : vector<8x1xf32> to vector<8x8xf32>
      %291 = arith.subf %287, %290 : vector<8x8xf32>
      %292 = math.exp %291 : vector<8x8xf32>
      %cst_147 = arith.constant dense<0.000000e+00> : vector<8xf32>
      %293 = vector.multi_reduction <add>, %292, %cst_147 [1] : vector<8x8xf32> to vector<8xf32>
      %294 = vector.shape_cast %293 : vector<8xf32> to vector<8x1xf32>
      %295 = vector.broadcast %294 : vector<8x1xf32> to vector<8x8xf32>
      %296 = arith.divf %292, %295 : vector<8x8xf32>
      %297 = vector.extract_strided_slice %231 {offsets = [0, 24], sizes = [8, 8], strides = [1, 1]} : vector<8x32xbf16> to vector<8x8xbf16>
      %298 = arith.truncf %296 : vector<8x8xf32> to vector<8x8xbf16>
      %cst_148 = arith.constant dense<0.000000e+00> : vector<8x8xf32>
      %299 = tpu.matmul %298, %297, %cst_148 {dimension_numbers = #tpu.dot_dimension_numbers<[1], [0], [0], [1], [0, 0, 1, 1], [], []>} : vector<8x8xbf16>, vector<8x8xbf16>, vector<8x8xf32> -> vector<8x8xf32>
      %300 = tpu.concatenate %248, %265, %282, %299 in 1 : vector<8x8xf32>, vector<8x8xf32>, vector<8x8xf32>, vector<8x8xf32> -> vector<8x32xf32>
      %c0_149 = arith.constant 0 : index
      %c0_150 = arith.constant 0 : index
      %301 = vector.load %arg13[%c0_149, %c0_150] : memref<32x32xbf16, #tpu.memory_space<vmem>>, vector<32x32xbf16>
      %302 = arith.truncf %300 : vector<8x32xf32> to vector<8x32xbf16>
      %cst_151 = arith.constant dense<0.000000e+00> : vector<8x32xf32>
      %303 = tpu.matmul %302, %301, %cst_151 {dimension_numbers = #tpu.dot_dimension_numbers<[1], [0], [0], [1], [0, 0, 1, 1], [], []>} : vector<8x32xbf16>, vector<32x32xbf16>, vector<8x32xf32> -> vector<8x32xf32>
      %c0_152 = arith.constant 0 : index
      %c0_153 = arith.constant 0 : index
      %304 = vector.load %arg14[%c0_152, %c0_153] : memref<1x32xf32, #tpu.memory_space<vmem>>, vector<1x32xf32>
      %305 = vector.broadcast %304 : vector<1x32xf32> to vector<8x32xf32>
      %306 = arith.addf %303, %305 : vector<8x32xf32>
      %307 = arith.addf %172, %306 : vector<8x32xf32>
      %c0_154 = arith.constant 0 : index
      %c0_155 = arith.constant 0 : index
      %308 = vector.load %arg15[%c0_154, %c0_155] : memref<1x32xf32, #tpu.memory_space<vmem>>, vector<1x32xf32>
      %c0_156 = arith.constant 0 : index
      %c0_157 = arith.constant 0 : index
      %309 = vector.load %arg16[%c0_156, %c0_157] : memref<1x32xf32, #tpu.memory_space<vmem>>, vector<1x32xf32>
      %cst_158 = arith.constant dense<0.000000e+00> : vector<8xf32>
      %310 = vector.multi_reduction <add>, %307, %cst_158 [1] : vector<8x32xf32> to vector<8xf32>
      %311 = vector.shape_cast %310 : vector<8xf32> to vector<8x1xf32>
      %cst_159 = arith.constant 3.200000e+01 : f32
      %312 = vector.broadcast %cst_159 : f32 to vector<8x1xf32>
      %313 = arith.divf %311, %312 : vector<8x1xf32>
      %314 = vector.broadcast %313 : vector<8x1xf32> to vector<8x32xf32>
      %315 = arith.subf %307, %314 : vector<8x32xf32>
      %316 = arith.mulf %315, %315 : vector<8x32xf32>
      %cst_160 = arith.constant dense<0.000000e+00> : vector<8xf32>
      %317 = vector.multi_reduction <add>, %316, %cst_160 [1] : vector<8x32xf32> to vector<8xf32>
      %318 = vector.shape_cast %317 : vector<8xf32> to vector<8x1xf32>
      %cst_161 = arith.constant 3.200000e+01 : f32
      %319 = vector.broadcast %cst_161 : f32 to vector<8x1xf32>
      %320 = arith.divf %318, %319 : vector<8x1xf32>
      %321 = vector.broadcast %313 : vector<8x1xf32> to vector<8x32xf32>
      %322 = arith.subf %307, %321 : vector<8x32xf32>
      %cst_162 = arith.constant 9.99999974E-6 : f32
      %323 = vector.broadcast %cst_162 : f32 to vector<8x1xf32>
      %324 = arith.addf %320, %323 : vector<8x1xf32>
      %325 = math.rsqrt %324 : vector<8x1xf32>
      %326 = vector.broadcast %325 : vector<8x1xf32> to vector<8x32xf32>
      %327 = arith.mulf %322, %326 : vector<8x32xf32>
      %328 = vector.broadcast %308 : vector<1x32xf32> to vector<8x32xf32>
      %329 = arith.mulf %327, %328 : vector<8x32xf32>
      %330 = vector.broadcast %309 : vector<1x32xf32> to vector<8x32xf32>
      %331 = arith.addf %329, %330 : vector<8x32xf32>
      %c0_163 = arith.constant 0 : index
      %c0_164 = arith.constant 0 : index
      %332 = vector.load %arg41[%c0_163, %c0_164] : memref<8x32xf32, #tpu.memory_space<vmem>>, vector<8x32xf32>
      tpu.vector_store %arg41[%c0_163, %c0_164], %331 {strides = array<i32>} : memref<8x32xf32, #tpu.memory_space<vmem>>, vector<8x32xf32>,
      %333 = arith.addf %331, %210 : vector<8x32xf32>
      %c0_165 = arith.constant 0 : index
      %c0_166 = arith.constant 0 : index
      %334 = vector.load %arg17[%c0_165, %c0_166] : memref<32x32xbf16, #tpu.memory_space<vmem>>, vector<32x32xbf16>
      %335 = arith.truncf %333 : vector<8x32xf32> to vector<8x32xbf16>
      %cst_167 = arith.constant dense<0.000000e+00> : vector<8x32xf32>
      %336 = tpu.matmul %335, %334, %cst_167 {dimension_numbers = #tpu.dot_dimension_numbers<[1], [0], [0], [1], [0, 0, 1, 1], [], []>} : vector<8x32xbf16>, vector<32x32xbf16>, vector<8x32xf32> -> vector<8x32xf32>
      %c0_168 = arith.constant 0 : index
      %c0_169 = arith.constant 0 : index
      %337 = vector.load %arg18[%c0_168, %c0_169] : memref<1x32xf32, #tpu.memory_space<vmem>>, vector<1x32xf32>
      %338 = vector.broadcast %337 : vector<1x32xf32> to vector<8x32xf32>
      %339 = arith.addf %336, %338 : vector<8x32xf32>
      %340 = arith.truncf %339 : vector<8x32xf32> to vector<8x32xbf16>
      %c0_170 = arith.constant 0 : index
      %c0_171 = arith.constant 0 : index
      %341 = vector.load %arg42[%c0_170, %c0_171] : memref<8x32xbf16, #tpu.memory_space<vmem>>, vector<8x32xbf16>
      tpu.vector_store %arg42[%c0_170, %c0_171], %340 {strides = array<i32>} : memref<8x32xbf16, #tpu.memory_space<vmem>>, vector<8x32xbf16>,
      %cst_172 = arith.constant -1.000000e+30 : f32
      %342 = vector.broadcast %cst_172 : f32 to vector<4x8x1xf32>
      %c0_173 = arith.constant 0 : index
      %c0_174 = arith.constant 0 : index
      %c0_175 = arith.constant 0 : index
      %343 = vector.load %arg43[%c0_173, %c0_174, %c0_175] : memref<4x8x1xf32, #tpu.memory_space<vmem>>, vector<4x8x1xf32>
      tpu.vector_store %arg43[%c0_173, %c0_174, %c0_175], %342 {strides = array<i32>} : memref<4x8x1xf32, #tpu.memory_space<vmem>>, vector<4x8x1xf32>,
      %cst_176 = arith.constant 0.000000e+00 : f32
      %344 = vector.broadcast %cst_176 : f32 to vector<4x8x1xf32>
      %c0_177 = arith.constant 0 : index
      %c0_178 = arith.constant 0 : index
      %c0_179 = arith.constant 0 : index
      %345 = vector.load %arg44[%c0_177, %c0_178, %c0_179] : memref<4x8x1xf32, #tpu.memory_space<vmem>>, vector<4x8x1xf32>
      tpu.vector_store %arg44[%c0_177, %c0_178, %c0_179], %344 {strides = array<i32>} : memref<4x8x1xf32, #tpu.memory_space<vmem>>, vector<4x8x1xf32>,
      %cst_180 = arith.constant 0.000000e+00 : f32
      %346 = vector.broadcast %cst_180 : f32 to vector<4x8x8xf32>
      %c0_181 = arith.constant 0 : index
      %c0_182 = arith.constant 0 : index
      %c0_183 = arith.constant 0 : index
      %347 = vector.load %arg45[%c0_181, %c0_182, %c0_183] : memref<4x8x8xf32, #tpu.memory_space<vmem>>, vector<4x8x8xf32>
      tpu.vector_store %arg45[%c0_181, %c0_182, %c0_183], %346 {strides = array<i32>} : memref<4x8x8xf32, #tpu.memory_space<vmem>>, vector<4x8x8xf32>,
    } else {
    }
    %c0 = arith.constant 0 : index
    %c0_1 = arith.constant 0 : index
    %c0_2 = arith.constant 0 : index
    %3 = vector.load %arg4[%c0, %c0_1, %c0_2] : memref<1x16x32xbf16, #tpu.memory_space<vmem>>, vector<1x16x32xbf16>
    %4 = vector.shape_cast %3 : vector<1x16x32xbf16> to vector<16x32xbf16>
    %c0_3 = arith.constant 0 : index
    %c0_4 = arith.constant 0 : index
    %5 = vector.load %arg19[%c0_3, %c0_4] : memref<32x64xbf16, #tpu.memory_space<vmem>>, vector<32x64xbf16>
    %cst = arith.constant dense<0.000000e+00> : vector<16x64xf32>
    %6 = tpu.matmul %4, %5, %cst {dimension_numbers = #tpu.dot_dimension_numbers<[1], [0], [0], [1], [0, 0, 1, 1], [], []>} : vector<16x32xbf16>, vector<32x64xbf16>, vector<16x64xf32> -> vector<16x64xf32>
    %c0_5 = arith.constant 0 : index
    %c0_6 = arith.constant 0 : index
    %7 = vector.load %arg20[%c0_5, %c0_6] : memref<1x64xf32, #tpu.memory_space<vmem>>, vector<1x64xf32>
    %8 = vector.broadcast %7 : vector<1x64xf32> to vector<16x64xf32>
    %9 = arith.addf %6, %8 : vector<16x64xf32>
    %10 = vector.extract_strided_slice %9 {offsets = [0, 0], sizes = [16, 32], strides = [1, 1]} : vector<16x64xf32> to vector<16x32xf32>
    %11 = arith.truncf %10 : vector<16x32xf32> to vector<16x32xbf16>
    %12 = vector.extract_strided_slice %9 {offsets = [0, 32], sizes = [16, 32], strides = [1, 1]} : vector<16x64xf32> to vector<16x32xf32>
    %13 = arith.truncf %12 : vector<16x32xf32> to vector<16x32xbf16>
    %c0_7 = arith.constant 0 : index
    %c0_8 = arith.constant 0 : index
    %14 = vector.load %arg42[%c0_7, %c0_8] : memref<8x32xbf16, #tpu.memory_space<vmem>>, vector<8x32xbf16>
    %15 = vector.extract_strided_slice %14 {offsets = [0, 0], sizes = [8, 8], strides = [1, 1]} : vector<8x32xbf16> to vector<8x8xbf16>
    %16 = vector.extract_strided_slice %11 {offsets = [0, 0], sizes = [16, 8], strides = [1, 1]} : vector<16x32xbf16> to vector<16x8xbf16>
    %cst_9 = arith.constant dense<0.000000e+00> : vector<8x16xf32>
    %17 = tpu.matmul %15, %16, %cst_9 {dimension_numbers = #tpu.dot_dimension_numbers<[1], [1], [0], [0], [0, 0, 1, 0], [], []>} : vector<8x8xbf16>, vector<16x8xbf16>, vector<8x16xf32> -> vector<8x16xf32>
    %cst_10 = arith.constant 0.353553385 : f32
    %18 = vector.broadcast %cst_10 : f32 to vector<8x16xf32>
    %19 = arith.mulf %17, %18 : vector<8x16xf32>
    %c0_11 = arith.constant 0 : index
    %c0_12 = arith.constant 0 : index
    %c0_13 = arith.constant 0 : index
    %20 = vector.load %arg43[%c0_11, %c0_12, %c0_13] : memref<4x8x1xf32, #tpu.memory_space<vmem>>, vector<1x8x1xf32>
    %21 = vector.shape_cast %20 : vector<1x8x1xf32> to vector<8x1xf32>
    %cst_14 = arith.constant dense<0xFF800000> : vector<8xf32>
    %22 = vector.multi_reduction <maximumf>, %19, %cst_14 [1] : vector<8x16xf32> to vector<8xf32>
    %23 = vector.shape_cast %22 : vector<8xf32> to vector<8x1xf32>
    %24 = arith.maximumf %21, %23 : vector<8x1xf32>
    %25 = arith.subf %21, %24 : vector<8x1xf32>
    %26 = math.exp %25 : vector<8x1xf32>
    %27 = vector.broadcast %24 : vector<8x1xf32> to vector<8x16xf32>
    %28 = arith.subf %19, %27 : vector<8x16xf32>
    %29 = math.exp %28 : vector<8x16xf32>
    %c0_15 = arith.constant 0 : index
    %c0_16 = arith.constant 0 : index
    %c0_17 = arith.constant 0 : index
    %30 = vector.load %arg44[%c0_15, %c0_16, %c0_17] : memref<4x8x1xf32, #tpu.memory_space<vmem>>, vector<1x8x1xf32>
    %31 = vector.shape_cast %30 : vector<1x8x1xf32> to vector<8x1xf32>
    %32 = arith.mulf %26, %31 : vector<8x1xf32>
    %cst_18 = arith.constant dense<0.000000e+00> : vector<8xf32>
    %33 = vector.multi_reduction <add>, %29, %cst_18 [1] : vector<8x16xf32> to vector<8xf32>
    %34 = vector.shape_cast %33 : vector<8xf32> to vector<8x1xf32>
    %35 = arith.addf %32, %34 : vector<8x1xf32>
    %c0_19 = arith.constant 0 : index
    %c0_20 = arith.constant 0 : index
    %c0_21 = arith.constant 0 : index
    %36 = vector.load %arg44[%c0_19, %c0_20, %c0_21] : memref<4x8x1xf32, #tpu.memory_space<vmem>>, vector<1x8x1xf32>
    %37 = vector.shape_cast %36 : vector<1x8x1xf32> to vector<8x1xf32>
    %38 = vector.shape_cast %35 : vector<8x1xf32> to vector<1x8x1xf32>
    tpu.vector_store %arg44[%c0_19, %c0_20, %c0_21], %38 {strides = array<i32>} : memref<4x8x1xf32, #tpu.memory_space<vmem>>, vector<1x8x1xf32>,
    %c0_22 = arith.constant 0 : index
    %c0_23 = arith.constant 0 : index
    %c0_24 = arith.constant 0 : index
    %39 = vector.load %arg45[%c0_22, %c0_23, %c0_24] : memref<4x8x8xf32, #tpu.memory_space<vmem>>, vector<1x8x8xf32>
    %40 = vector.shape_cast %39 : vector<1x8x8xf32> to vector<8x8xf32>
    %41 = vector.broadcast %26 : vector<8x1xf32> to vector<8x8xf32>
    %42 = arith.mulf %41, %40 : vector<8x8xf32>
    %43 = vector.extract_strided_slice %13 {offsets = [0, 0], sizes = [16, 8], strides = [1, 1]} : vector<16x32xbf16> to vector<16x8xbf16>
    %44 = arith.truncf %29 : vector<8x16xf32> to vector<8x16xbf16>
    %cst_25 = arith.constant dense<0.000000e+00> : vector<8x8xf32>
    %45 = tpu.matmul %44, %43, %cst_25 {dimension_numbers = #tpu.dot_dimension_numbers<[1], [0], [0], [1], [0, 0, 1, 1], [], []>} : vector<8x16xbf16>, vector<16x8xbf16>, vector<8x8xf32> -> vector<8x8xf32>
    %46 = arith.addf %42, %45 : vector<8x8xf32>
    %c0_26 = arith.constant 0 : index
    %c0_27 = arith.constant 0 : index
    %c0_28 = arith.constant 0 : index
    %47 = vector.load %arg45[%c0_26, %c0_27, %c0_28] : memref<4x8x8xf32, #tpu.memory_space<vmem>>, vector<1x8x8xf32>
    %48 = vector.shape_cast %47 : vector<1x8x8xf32> to vector<8x8xf32>
    %49 = vector.shape_cast %46 : vector<8x8xf32> to vector<1x8x8xf32>
    tpu.vector_store %arg45[%c0_26, %c0_27, %c0_28], %49 {strides = array<i32>} : memref<4x8x8xf32, #tpu.memory_space<vmem>>, vector<1x8x8xf32>,
    %c0_29 = arith.constant 0 : index
    %c0_30 = arith.constant 0 : index
    %c0_31 = arith.constant 0 : index
    %50 = vector.load %arg43[%c0_29, %c0_30, %c0_31] : memref<4x8x1xf32, #tpu.memory_space<vmem>>, vector<1x8x1xf32>
    %51 = vector.shape_cast %50 : vector<1x8x1xf32> to vector<8x1xf32>
    %52 = vector.shape_cast %24 : vector<8x1xf32> to vector<1x8x1xf32>
    tpu.vector_store %arg43[%c0_29, %c0_30, %c0_31], %52 {strides = array<i32>} : memref<4x8x1xf32, #tpu.memory_space<vmem>>, vector<1x8x1xf32>,
    %53 = vector.extract_strided_slice %14 {offsets = [0, 8], sizes = [8, 8], strides = [1, 1]} : vector<8x32xbf16> to vector<8x8xbf16>
    %54 = vector.extract_strided_slice %11 {offsets = [0, 8], sizes = [16, 8], strides = [1, 1]} : vector<16x32xbf16> to vector<16x8xbf16>
    %cst_32 = arith.constant dense<0.000000e+00> : vector<8x16xf32>
    %55 = tpu.matmul %53, %54, %cst_32 {dimension_numbers = #tpu.dot_dimension_numbers<[1], [1], [0], [0], [0, 0, 1, 0], [], []>} : vector<8x8xbf16>, vector<16x8xbf16>, vector<8x16xf32> -> vector<8x16xf32>
    %cst_33 = arith.constant 0.353553385 : f32
    %56 = vector.broadcast %cst_33 : f32 to vector<8x16xf32>
    %57 = arith.mulf %55, %56 : vector<8x16xf32>
    %c1 = arith.constant 1 : index
    %c0_34 = arith.constant 0 : index
    %c0_35 = arith.constant 0 : index
    %58 = vector.load %arg43[%c1, %c0_34, %c0_35] : memref<4x8x1xf32, #tpu.memory_space<vmem>>, vector<1x8x1xf32>
    %59 = vector.shape_cast %58 : vector<1x8x1xf32> to vector<8x1xf32>
    %cst_36 = arith.constant dense<0xFF800000> : vector<8xf32>
    %60 = vector.multi_reduction <maximumf>, %57, %cst_36 [1] : vector<8x16xf32> to vector<8xf32>
    %61 = vector.shape_cast %60 : vector<8xf32> to vector<8x1xf32>
    %62 = arith.maximumf %59, %61 : vector<8x1xf32>
    %63 = arith.subf %59, %62 : vector<8x1xf32>
    %64 = math.exp %63 : vector<8x1xf32>
    %65 = vector.broadcast %62 : vector<8x1xf32> to vector<8x16xf32>
    %66 = arith.subf %57, %65 : vector<8x16xf32>
    %67 = math.exp %66 : vector<8x16xf32>
    %c1_37 = arith.constant 1 : index
    %c0_38 = arith.constant 0 : index
    %c0_39 = arith.constant 0 : index
    %68 = vector.load %arg44[%c1_37, %c0_38, %c0_39] : memref<4x8x1xf32, #tpu.memory_space<vmem>>, vector<1x8x1xf32>
    %69 = vector.shape_cast %68 : vector<1x8x1xf32> to vector<8x1xf32>
    %70 = arith.mulf %64, %69 : vector<8x1xf32>
    %cst_40 = arith.constant dense<0.000000e+00> : vector<8xf32>
    %71 = vector.multi_reduction <add>, %67, %cst_40 [1] : vector<8x16xf32> to vector<8xf32>
    %72 = vector.shape_cast %71 : vector<8xf32> to vector<8x1xf32>
    %73 = arith.addf %70, %72 : vector<8x1xf32>
    %c1_41 = arith.constant 1 : index
    %c0_42 = arith.constant 0 : index
    %c0_43 = arith.constant 0 : index
    %74 = vector.load %arg44[%c1_41, %c0_42, %c0_43] : memref<4x8x1xf32, #tpu.memory_space<vmem>>, vector<1x8x1xf32>
    %75 = vector.shape_cast %74 : vector<1x8x1xf32> to vector<8x1xf32>
    %76 = vector.shape_cast %73 : vector<8x1xf32> to vector<1x8x1xf32>
    tpu.vector_store %arg44[%c1_41, %c0_42, %c0_43], %76 {strides = array<i32>} : memref<4x8x1xf32, #tpu.memory_space<vmem>>, vector<1x8x1xf32>,
    %c1_44 = arith.constant 1 : index
    %c0_45 = arith.constant 0 : index
    %c0_46 = arith.constant 0 : index
    %77 = vector.load %arg45[%c1_44, %c0_45, %c0_46] : memref<4x8x8xf32, #tpu.memory_space<vmem>>, vector<1x8x8xf32>
    %78 = vector.shape_cast %77 : vector<1x8x8xf32> to vector<8x8xf32>
    %79 = vector.broadcast %64 : vector<8x1xf32> to vector<8x8xf32>
    %80 = arith.mulf %79, %78 : vector<8x8xf32>
    %81 = vector.extract_strided_slice %13 {offsets = [0, 8], sizes = [16, 8], strides = [1, 1]} : vector<16x32xbf16> to vector<16x8xbf16>
    %82 = arith.truncf %67 : vector<8x16xf32> to vector<8x16xbf16>
    %cst_47 = arith.constant dense<0.000000e+00> : vector<8x8xf32>
    %83 = tpu.matmul %82, %81, %cst_47 {dimension_numbers = #tpu.dot_dimension_numbers<[1], [0], [0], [1], [0, 0, 1, 1], [], []>} : vector<8x16xbf16>, vector<16x8xbf16>, vector<8x8xf32> -> vector<8x8xf32>
    %84 = arith.addf %80, %83 : vector<8x8xf32>
    %c1_48 = arith.constant 1 : index
    %c0_49 = arith.constant 0 : index
    %c0_50 = arith.constant 0 : index
    %85 = vector.load %arg45[%c1_48, %c0_49, %c0_50] : memref<4x8x8xf32, #tpu.memory_space<vmem>>, vector<1x8x8xf32>
    %86 = vector.shape_cast %85 : vector<1x8x8xf32> to vector<8x8xf32>
    %87 = vector.shape_cast %84 : vector<8x8xf32> to vector<1x8x8xf32>
    tpu.vector_store %arg45[%c1_48, %c0_49, %c0_50], %87 {strides = array<i32>} : memref<4x8x8xf32, #tpu.memory_space<vmem>>, vector<1x8x8xf32>,
    %c1_51 = arith.constant 1 : index
    %c0_52 = arith.constant 0 : index
    %c0_53 = arith.constant 0 : index
    %88 = vector.load %arg43[%c1_51, %c0_52, %c0_53] : memref<4x8x1xf32, #tpu.memory_space<vmem>>, vector<1x8x1xf32>
    %89 = vector.shape_cast %88 : vector<1x8x1xf32> to vector<8x1xf32>
    %90 = vector.shape_cast %62 : vector<8x1xf32> to vector<1x8x1xf32>
    tpu.vector_store %arg43[%c1_51, %c0_52, %c0_53], %90 {strides = array<i32>} : memref<4x8x1xf32, #tpu.memory_space<vmem>>, vector<1x8x1xf32>,
    %91 = vector.extract_strided_slice %14 {offsets = [0, 16], sizes = [8, 8], strides = [1, 1]} : vector<8x32xbf16> to vector<8x8xbf16>
    %92 = vector.extract_strided_slice %11 {offsets = [0, 16], sizes = [16, 8], strides = [1, 1]} : vector<16x32xbf16> to vector<16x8xbf16>
    %cst_54 = arith.constant dense<0.000000e+00> : vector<8x16xf32>
    %93 = tpu.matmul %91, %92, %cst_54 {dimension_numbers = #tpu.dot_dimension_numbers<[1], [1], [0], [0], [0, 0, 1, 0], [], []>} : vector<8x8xbf16>, vector<16x8xbf16>, vector<8x16xf32> -> vector<8x16xf32>
    %cst_55 = arith.constant 0.353553385 : f32
    %94 = vector.broadcast %cst_55 : f32 to vector<8x16xf32>
    %95 = arith.mulf %93, %94 : vector<8x16xf32>
    %c2 = arith.constant 2 : index
    %c0_56 = arith.constant 0 : index
    %c0_57 = arith.constant 0 : index
    %96 = vector.load %arg43[%c2, %c0_56, %c0_57] : memref<4x8x1xf32, #tpu.memory_space<vmem>>, vector<1x8x1xf32>
    %97 = vector.shape_cast %96 : vector<1x8x1xf32> to vector<8x1xf32>
    %cst_58 = arith.constant dense<0xFF800000> : vector<8xf32>
    %98 = vector.multi_reduction <maximumf>, %95, %cst_58 [1] : vector<8x16xf32> to vector<8xf32>
    %99 = vector.shape_cast %98 : vector<8xf32> to vector<8x1xf32>
    %100 = arith.maximumf %97, %99 : vector<8x1xf32>
    %101 = arith.subf %97, %100 : vector<8x1xf32>
    %102 = math.exp %101 : vector<8x1xf32>
    %103 = vector.broadcast %100 : vector<8x1xf32> to vector<8x16xf32>
    %104 = arith.subf %95, %103 : vector<8x16xf32>
    %105 = math.exp %104 : vector<8x16xf32>
    %c2_59 = arith.constant 2 : index
    %c0_60 = arith.constant 0 : index
    %c0_61 = arith.constant 0 : index
    %106 = vector.load %arg44[%c2_59, %c0_60, %c0_61] : memref<4x8x1xf32, #tpu.memory_space<vmem>>, vector<1x8x1xf32>
    %107 = vector.shape_cast %106 : vector<1x8x1xf32> to vector<8x1xf32>
    %108 = arith.mulf %102, %107 : vector<8x1xf32>
    %cst_62 = arith.constant dense<0.000000e+00> : vector<8xf32>
    %109 = vector.multi_reduction <add>, %105, %cst_62 [1] : vector<8x16xf32> to vector<8xf32>
    %110 = vector.shape_cast %109 : vector<8xf32> to vector<8x1xf32>
    %111 = arith.addf %108, %110 : vector<8x1xf32>
    %c2_63 = arith.constant 2 : index
    %c0_64 = arith.constant 0 : index
    %c0_65 = arith.constant 0 : index
    %112 = vector.load %arg44[%c2_63, %c0_64, %c0_65] : memref<4x8x1xf32, #tpu.memory_space<vmem>>, vector<1x8x1xf32>
    %113 = vector.shape_cast %112 : vector<1x8x1xf32> to vector<8x1xf32>
    %114 = vector.shape_cast %111 : vector<8x1xf32> to vector<1x8x1xf32>
    tpu.vector_store %arg44[%c2_63, %c0_64, %c0_65], %114 {strides = array<i32>} : memref<4x8x1xf32, #tpu.memory_space<vmem>>, vector<1x8x1xf32>,
    %c2_66 = arith.constant 2 : index
    %c0_67 = arith.constant 0 : index
    %c0_68 = arith.constant 0 : index
    %115 = vector.load %arg45[%c2_66, %c0_67, %c0_68] : memref<4x8x8xf32, #tpu.memory_space<vmem>>, vector<1x8x8xf32>
    %116 = vector.shape_cast %115 : vector<1x8x8xf32> to vector<8x8xf32>
    %117 = vector.broadcast %102 : vector<8x1xf32> to vector<8x8xf32>
    %118 = arith.mulf %117, %116 : vector<8x8xf32>
    %119 = vector.extract_strided_slice %13 {offsets = [0, 16], sizes = [16, 8], strides = [1, 1]} : vector<16x32xbf16> to vector<16x8xbf16>
    %120 = arith.truncf %105 : vector<8x16xf32> to vector<8x16xbf16>
    %cst_69 = arith.constant dense<0.000000e+00> : vector<8x8xf32>
    %121 = tpu.matmul %120, %119, %cst_69 {dimension_numbers = #tpu.dot_dimension_numbers<[1], [0], [0], [1], [0, 0, 1, 1], [], []>} : vector<8x16xbf16>, vector<16x8xbf16>, vector<8x8xf32> -> vector<8x8xf32>
    %122 = arith.addf %118, %121 : vector<8x8xf32>
    %c2_70 = arith.constant 2 : index
    %c0_71 = arith.constant 0 : index
    %c0_72 = arith.constant 0 : index
    %123 = vector.load %arg45[%c2_70, %c0_71, %c0_72] : memref<4x8x8xf32, #tpu.memory_space<vmem>>, vector<1x8x8xf32>
    %124 = vector.shape_cast %123 : vector<1x8x8xf32> to vector<8x8xf32>
    %125 = vector.shape_cast %122 : vector<8x8xf32> to vector<1x8x8xf32>
    tpu.vector_store %arg45[%c2_70, %c0_71, %c0_72], %125 {strides = array<i32>} : memref<4x8x8xf32, #tpu.memory_space<vmem>>, vector<1x8x8xf32>,
    %c2_73 = arith.constant 2 : index
    %c0_74 = arith.constant 0 : index
    %c0_75 = arith.constant 0 : index
    %126 = vector.load %arg43[%c2_73, %c0_74, %c0_75] : memref<4x8x1xf32, #tpu.memory_space<vmem>>, vector<1x8x1xf32>
    %127 = vector.shape_cast %126 : vector<1x8x1xf32> to vector<8x1xf32>
    %128 = vector.shape_cast %100 : vector<8x1xf32> to vector<1x8x1xf32>
    tpu.vector_store %arg43[%c2_73, %c0_74, %c0_75], %128 {strides = array<i32>} : memref<4x8x1xf32, #tpu.memory_space<vmem>>, vector<1x8x1xf32>,
    %129 = vector.extract_strided_slice %14 {offsets = [0, 24], sizes = [8, 8], strides = [1, 1]} : vector<8x32xbf16> to vector<8x8xbf16>
    %130 = vector.extract_strided_slice %11 {offsets = [0, 24], sizes = [16, 8], strides = [1, 1]} : vector<16x32xbf16> to vector<16x8xbf16>
    %cst_76 = arith.constant dense<0.000000e+00> : vector<8x16xf32>
    %131 = tpu.matmul %129, %130, %cst_76 {dimension_numbers = #tpu.dot_dimension_numbers<[1], [1], [0], [0], [0, 0, 1, 0], [], []>} : vector<8x8xbf16>, vector<16x8xbf16>, vector<8x16xf32> -> vector<8x16xf32>
    %cst_77 = arith.constant 0.353553385 : f32
    %132 = vector.broadcast %cst_77 : f32 to vector<8x16xf32>
    %133 = arith.mulf %131, %132 : vector<8x16xf32>
    %c3 = arith.constant 3 : index
    %c0_78 = arith.constant 0 : index
    %c0_79 = arith.constant 0 : index
    %134 = vector.load %arg43[%c3, %c0_78, %c0_79] : memref<4x8x1xf32, #tpu.memory_space<vmem>>, vector<1x8x1xf32>
    %135 = vector.shape_cast %134 : vector<1x8x1xf32> to vector<8x1xf32>
    %cst_80 = arith.constant dense<0xFF800000> : vector<8xf32>
    %136 = vector.multi_reduction <maximumf>, %133, %cst_80 [1] : vector<8x16xf32> to vector<8xf32>
    %137 = vector.shape_cast %136 : vector<8xf32> to vector<8x1xf32>
    %138 = arith.maximumf %135, %137 : vector<8x1xf32>
    %139 = arith.subf %135, %138 : vector<8x1xf32>
    %140 = math.exp %139 : vector<8x1xf32>
    %141 = vector.broadcast %138 : vector<8x1xf32> to vector<8x16xf32>
    %142 = arith.subf %133, %141 : vector<8x16xf32>
    %143 = math.exp %142 : vector<8x16xf32>
    %c3_81 = arith.constant 3 : index
    %c0_82 = arith.constant 0 : index
    %c0_83 = arith.constant 0 : index
    %144 = vector.load %arg44[%c3_81, %c0_82, %c0_83] : memref<4x8x1xf32, #tpu.memory_space<vmem>>, vector<1x8x1xf32>
    %145 = vector.shape_cast %144 : vector<1x8x1xf32> to vector<8x1xf32>
    %146 = arith.mulf %140, %145 : vector<8x1xf32>
    %cst_84 = arith.constant dense<0.000000e+00> : vector<8xf32>
    %147 = vector.multi_reduction <add>, %143, %cst_84 [1] : vector<8x16xf32> to vector<8xf32>
    %148 = vector.shape_cast %147 : vector<8xf32> to vector<8x1xf32>
    %149 = arith.addf %146, %148 : vector<8x1xf32>
    %c3_85 = arith.constant 3 : index
    %c0_86 = arith.constant 0 : index
    %c0_87 = arith.constant 0 : index
    %150 = vector.load %arg44[%c3_85, %c0_86, %c0_87] : memref<4x8x1xf32, #tpu.memory_space<vmem>>, vector<1x8x1xf32>
    %151 = vector.shape_cast %150 : vector<1x8x1xf32> to vector<8x1xf32>
    %152 = vector.shape_cast %149 : vector<8x1xf32> to vector<1x8x1xf32>
    tpu.vector_store %arg44[%c3_85, %c0_86, %c0_87], %152 {strides = array<i32>} : memref<4x8x1xf32, #tpu.memory_space<vmem>>, vector<1x8x1xf32>,
    %c3_88 = arith.constant 3 : index
    %c0_89 = arith.constant 0 : index
    %c0_90 = arith.constant 0 : index
    %153 = vector.load %arg45[%c3_88, %c0_89, %c0_90] : memref<4x8x8xf32, #tpu.memory_space<vmem>>, vector<1x8x8xf32>
    %154 = vector.shape_cast %153 : vector<1x8x8xf32> to vector<8x8xf32>
    %155 = vector.broadcast %140 : vector<8x1xf32> to vector<8x8xf32>
    %156 = arith.mulf %155, %154 : vector<8x8xf32>
    %157 = vector.extract_strided_slice %13 {offsets = [0, 24], sizes = [16, 8], strides = [1, 1]} : vector<16x32xbf16> to vector<16x8xbf16>
    %158 = arith.truncf %143 : vector<8x16xf32> to vector<8x16xbf16>
    %cst_91 = arith.constant dense<0.000000e+00> : vector<8x8xf32>
    %159 = tpu.matmul %158, %157, %cst_91 {dimension_numbers = #tpu.dot_dimension_numbers<[1], [0], [0], [1], [0, 0, 1, 1], [], []>} : vector<8x16xbf16>, vector<16x8xbf16>, vector<8x8xf32> -> vector<8x8xf32>
    %160 = arith.addf %156, %159 : vector<8x8xf32>
    %c3_92 = arith.constant 3 : index
    %c0_93 = arith.constant 0 : index
    %c0_94 = arith.constant 0 : index
    %161 = vector.load %arg45[%c3_92, %c0_93, %c0_94] : memref<4x8x8xf32, #tpu.memory_space<vmem>>, vector<1x8x8xf32>
    %162 = vector.shape_cast %161 : vector<1x8x8xf32> to vector<8x8xf32>
    %163 = vector.shape_cast %160 : vector<8x8xf32> to vector<1x8x8xf32>
    tpu.vector_store %arg45[%c3_92, %c0_93, %c0_94], %163 {strides = array<i32>} : memref<4x8x8xf32, #tpu.memory_space<vmem>>, vector<1x8x8xf32>,
    %c3_95 = arith.constant 3 : index
    %c0_96 = arith.constant 0 : index
    %c0_97 = arith.constant 0 : index
    %164 = vector.load %arg43[%c3_95, %c0_96, %c0_97] : memref<4x8x1xf32, #tpu.memory_space<vmem>>, vector<1x8x1xf32>
    %165 = vector.shape_cast %164 : vector<1x8x1xf32> to vector<8x1xf32>
    %166 = vector.shape_cast %138 : vector<8x1xf32> to vector<1x8x1xf32>
    tpu.vector_store %arg43[%c3_95, %c0_96, %c0_97], %166 {strides = array<i32>} : memref<4x8x1xf32, #tpu.memory_space<vmem>>, vector<1x8x1xf32>,
    %c0_i32_98 = arith.constant 0 : i32
    %167 = arith.cmpi eq, %arg1, %c0_i32_98 : i32
    %168 = arith.extui %167 : i1 to i32
    %c0_i32_99 = arith.constant 0 : i32
    %169 = arith.cmpi ne, %168, %c0_i32_99 : i32
    scf.if %169 {
      %c0_100 = arith.constant 0 : index
      %c0_101 = arith.constant 0 : index
      %c0_102 = arith.constant 0 : index
      %170 = vector.load %arg45[%c0_100, %c0_101, %c0_102] : memref<4x8x8xf32, #tpu.memory_space<vmem>>, vector<4x8x8xf32>
      %c0_103 = arith.constant 0 : index
      %c0_104 = arith.constant 0 : index
      %c0_105 = arith.constant 0 : index
      %171 = vector.load %arg44[%c0_103, %c0_104, %c0_105] : memref<4x8x1xf32, #tpu.memory_space<vmem>>, vector<4x8x1xf32>
      %172 = vector.broadcast %171 : vector<4x8x1xf32> to vector<4x8x8xf32>
      %173 = arith.divf %170, %172 : vector<4x8x8xf32>
      %174 = vector.extract_strided_slice %173 {offsets = [0, 0, 0], sizes = [1, 8, 8], strides = [1, 1, 1]} : vector<4x8x8xf32> to vector<1x8x8xf32>
      %175 = vector.shape_cast %174 : vector<1x8x8xf32> to vector<8x8xf32>
      %176 = vector.extract_strided_slice %173 {offsets = [1, 0, 0], sizes = [1, 8, 8], strides = [1, 1, 1]} : vector<4x8x8xf32> to vector<1x8x8xf32>
      %177 = vector.shape_cast %176 : vector<1x8x8xf32> to vector<8x8xf32>
      %178 = vector.extract_strided_slice %173 {offsets = [2, 0, 0], sizes = [1, 8, 8], strides = [1, 1, 1]} : vector<4x8x8xf32> to vector<1x8x8xf32>
      %179 = vector.shape_cast %178 : vector<1x8x8xf32> to vector<8x8xf32>
      %180 = vector.extract_strided_slice %173 {offsets = [3, 0, 0], sizes = [1, 8, 8], strides = [1, 1, 1]} : vector<4x8x8xf32> to vector<1x8x8xf32>
      %181 = vector.shape_cast %180 : vector<1x8x8xf32> to vector<8x8xf32>
      %182 = tpu.concatenate %175, %177, %179, %181 in 1 : vector<8x8xf32>, vector<8x8xf32>, vector<8x8xf32>, vector<8x8xf32> -> vector<8x32xf32>
      %c0_106 = arith.constant 0 : index
      %c0_107 = arith.constant 0 : index
      %183 = vector.load %arg21[%c0_106, %c0_107] : memref<32x32xbf16, #tpu.memory_space<vmem>>, vector<32x32xbf16>
      %184 = arith.truncf %182 : vector<8x32xf32> to vector<8x32xbf16>
      %cst_108 = arith.constant dense<0.000000e+00> : vector<8x32xf32>
      %185 = tpu.matmul %184, %183, %cst_108 {dimension_numbers = #tpu.dot_dimension_numbers<[1], [0], [0], [1], [0, 0, 1, 1], [], []>} : vector<8x32xbf16>, vector<32x32xbf16>, vector<8x32xf32> -> vector<8x32xf32>
      %c0_109 = arith.constant 0 : index
      %c0_110 = arith.constant 0 : index
      %186 = vector.load %arg22[%c0_109, %c0_110] : memref<1x32xf32, #tpu.memory_space<vmem>>, vector<1x32xf32>
      %187 = vector.broadcast %186 : vector<1x32xf32> to vector<8x32xf32>
      %188 = arith.addf %185, %187 : vector<8x32xf32>
      %c0_111 = arith.constant 0 : index
      %c0_112 = arith.constant 0 : index
      %189 = vector.load %arg41[%c0_111, %c0_112] : memref<8x32xf32, #tpu.memory_space<vmem>>, vector<8x32xf32>
      %190 = arith.addf %189, %188 : vector<8x32xf32>
      %c0_113 = arith.constant 0 : index
      %c0_114 = arith.constant 0 : index
      %191 = vector.load %arg23[%c0_113, %c0_114] : memref<1x32xf32, #tpu.memory_space<vmem>>, vector<1x32xf32>
      %c0_115 = arith.constant 0 : index
      %c0_116 = arith.constant 0 : index
      %192 = vector.load %arg24[%c0_115, %c0_116] : memref<1x32xf32, #tpu.memory_space<vmem>>, vector<1x32xf32>
      %cst_117 = arith.constant dense<0.000000e+00> : vector<8xf32>
      %193 = vector.multi_reduction <add>, %190, %cst_117 [1] : vector<8x32xf32> to vector<8xf32>
      %194 = vector.shape_cast %193 : vector<8xf32> to vector<8x1xf32>
      %cst_118 = arith.constant 3.200000e+01 : f32
      %195 = vector.broadcast %cst_118 : f32 to vector<8x1xf32>
      %196 = arith.divf %194, %195 : vector<8x1xf32>
      %197 = vector.broadcast %196 : vector<8x1xf32> to vector<8x32xf32>
      %198 = arith.subf %190, %197 : vector<8x32xf32>
      %199 = arith.mulf %198, %198 : vector<8x32xf32>
      %cst_119 = arith.constant dense<0.000000e+00> : vector<8xf32>
      %200 = vector.multi_reduction <add>, %199, %cst_119 [1] : vector<8x32xf32> to vector<8xf32>
      %201 = vector.shape_cast %200 : vector<8xf32> to vector<8x1xf32>
      %cst_120 = arith.constant 3.200000e+01 : f32
      %202 = vector.broadcast %cst_120 : f32 to vector<8x1xf32>
      %203 = arith.divf %201, %202 : vector<8x1xf32>
      %204 = vector.broadcast %196 : vector<8x1xf32> to vector<8x32xf32>
      %205 = arith.subf %190, %204 : vector<8x32xf32>
      %cst_121 = arith.constant 9.99999974E-6 : f32
      %206 = vector.broadcast %cst_121 : f32 to vector<8x1xf32>
      %207 = arith.addf %203, %206 : vector<8x1xf32>
      %208 = math.rsqrt %207 : vector<8x1xf32>
      %209 = vector.broadcast %208 : vector<8x1xf32> to vector<8x32xf32>
      %210 = arith.mulf %205, %209 : vector<8x32xf32>
      %211 = vector.broadcast %191 : vector<1x32xf32> to vector<8x32xf32>
      %212 = arith.mulf %210, %211 : vector<8x32xf32>
      %213 = vector.broadcast %192 : vector<1x32xf32> to vector<8x32xf32>
      %214 = arith.addf %212, %213 : vector<8x32xf32>
      %c0_122 = arith.constant 0 : index
      %c0_123 = arith.constant 0 : index
      %215 = vector.load %arg25[%c0_122, %c0_123] : memref<32x64xbf16, #tpu.memory_space<vmem>>, vector<32x64xbf16>
      %216 = arith.truncf %214 : vector<8x32xf32> to vector<8x32xbf16>
      %cst_124 = arith.constant dense<0.000000e+00> : vector<8x64xf32>
      %217 = tpu.matmul %216, %215, %cst_124 {dimension_numbers = #tpu.dot_dimension_numbers<[1], [0], [0], [1], [0, 0, 1, 1], [], []>} : vector<8x32xbf16>, vector<32x64xbf16>, vector<8x64xf32> -> vector<8x64xf32>
      %c0_125 = arith.constant 0 : index
      %c0_126 = arith.constant 0 : index
      %218 = vector.load %arg26[%c0_125, %c0_126] : memref<1x64xf32, #tpu.memory_space<vmem>>, vector<1x64xf32>
      %219 = vector.broadcast %218 : vector<1x64xf32> to vector<8x64xf32>
      %220 = arith.addf %217, %219 : vector<8x64xf32>
      %cst_127 = arith.constant 0.000000e+00 : f32
      %221 = vector.broadcast %cst_127 : f32 to vector<8x64xf32>
      %222 = arith.maximumf %220, %221 : vector<8x64xf32>
      %c0_128 = arith.constant 0 : index
      %c0_129 = arith.constant 0 : index
      %223 = vector.load %arg27[%c0_128, %c0_129] : memref<64x32xbf16, #tpu.memory_space<vmem>>, vector<64x32xbf16>
      %224 = arith.truncf %222 : vector<8x64xf32> to vector<8x64xbf16>
      %cst_130 = arith.constant dense<0.000000e+00> : vector<8x32xf32>
      %225 = tpu.matmul %224, %223, %cst_130 {dimension_numbers = #tpu.dot_dimension_numbers<[1], [0], [0], [1], [0, 0, 1, 1], [], []>} : vector<8x64xbf16>, vector<64x32xbf16>, vector<8x32xf32> -> vector<8x32xf32>
      %226 = arith.addf %214, %225 : vector<8x32xf32>
      %c0_131 = arith.constant 0 : index
      %c0_132 = arith.constant 0 : index
      %227 = vector.load %arg28[%c0_131, %c0_132] : memref<1x32xf32, #tpu.memory_space<vmem>>, vector<1x32xf32>
      %228 = vector.broadcast %227 : vector<1x32xf32> to vector<8x32xf32>
      %229 = arith.addf %226, %228 : vector<8x32xf32>
      %c0_133 = arith.constant 0 : index
      %c0_134 = arith.constant 0 : index
      %230 = vector.load %arg29[%c0_133, %c0_134] : memref<1x32xf32, #tpu.memory_space<vmem>>, vector<1x32xf32>
      %c0_135 = arith.constant 0 : index
      %c0_136 = arith.constant 0 : index
      %231 = vector.load %arg30[%c0_135, %c0_136] : memref<1x32xf32, #tpu.memory_space<vmem>>, vector<1x32xf32>
      %cst_137 = arith.constant dense<0.000000e+00> : vector<8xf32>
      %232 = vector.multi_reduction <add>, %229, %cst_137 [1] : vector<8x32xf32> to vector<8xf32>
      %233 = vector.shape_cast %232 : vector<8xf32> to vector<8x1xf32>
      %cst_138 = arith.constant 3.200000e+01 : f32
      %234 = vector.broadcast %cst_138 : f32 to vector<8x1xf32>
      %235 = arith.divf %233, %234 : vector<8x1xf32>
      %236 = vector.broadcast %235 : vector<8x1xf32> to vector<8x32xf32>
      %237 = arith.subf %229, %236 : vector<8x32xf32>
      %238 = arith.mulf %237, %237 : vector<8x32xf32>
      %cst_139 = arith.constant dense<0.000000e+00> : vector<8xf32>
      %239 = vector.multi_reduction <add>, %238, %cst_139 [1] : vector<8x32xf32> to vector<8xf32>
      %240 = vector.shape_cast %239 : vector<8xf32> to vector<8x1xf32>
      %cst_140 = arith.constant 3.200000e+01 : f32
      %241 = vector.broadcast %cst_140 : f32 to vector<8x1xf32>
      %242 = arith.divf %240, %241 : vector<8x1xf32>
      %243 = vector.broadcast %235 : vector<8x1xf32> to vector<8x32xf32>
      %244 = arith.subf %229, %243 : vector<8x32xf32>
      %cst_141 = arith.constant 9.99999974E-6 : f32
      %245 = vector.broadcast %cst_141 : f32 to vector<8x1xf32>
      %246 = arith.addf %242, %245 : vector<8x1xf32>
      %247 = math.rsqrt %246 : vector<8x1xf32>
      %248 = vector.broadcast %247 : vector<8x1xf32> to vector<8x32xf32>
      %249 = arith.mulf %244, %248 : vector<8x32xf32>
      %250 = vector.broadcast %230 : vector<1x32xf32> to vector<8x32xf32>
      %251 = arith.mulf %249, %250 : vector<8x32xf32>
      %252 = vector.broadcast %231 : vector<1x32xf32> to vector<8x32xf32>
      %253 = arith.addf %251, %252 : vector<8x32xf32>
      %254 = arith.truncf %253 : vector<8x32xf32> to vector<8x32xbf16>
      %c0_142 = arith.constant 0 : index
      %c0_143 = arith.constant 0 : index
      %c0_144 = arith.constant 0 : index
      %255 = vector.load %arg37[%c0_142, %c0_143, %c0_144] : memref<1x8x32xbf16, #tpu.memory_space<vmem>>, vector<1x8x32xbf16>
      %256 = vector.shape_cast %255 : vector<1x8x32xbf16> to vector<8x32xbf16>
      %257 = vector.shape_cast %254 : vector<8x32xbf16> to vector<1x8x32xbf16>
      tpu.vector_store %arg37[%c0_142, %c0_143, %c0_144], %257 {strides = array<i32>} : memref<1x8x32xbf16, #tpu.memory_space<vmem>>, vector<1x8x32xbf16>,
      %c0_145 = arith.constant 0 : index
      %c0_146 = arith.constant 0 : index
      %258 = vector.load %arg31[%c0_145, %c0_146] : memref<32x32xbf16, #tpu.memory_space<vmem>>, vector<32x32xbf16>
      %259 = arith.truncf %253 : vector<8x32xf32> to vector<8x32xbf16>
      %cst_147 = arith.constant dense<0.000000e+00> : vector<8x32xf32>
      %260 = tpu.matmul %259, %258, %cst_147 {dimension_numbers = #tpu.dot_dimension_numbers<[1], [0], [0], [1], [0, 0, 1, 1], [], []>} : vector<8x32xbf16>, vector<32x32xbf16>, vector<8x32xf32> -> vector<8x32xf32>
      %c0_148 = arith.constant 0 : index
      %c0_149 = arith.constant 0 : index
      %261 = vector.load %arg32[%c0_148, %c0_149] : memref<1x32xf32, #tpu.memory_space<vmem>>, vector<1x32xf32>
      %262 = vector.broadcast %261 : vector<1x32xf32> to vector<8x32xf32>
      %263 = arith.addf %260, %262 : vector<8x32xf32>
      %cst_150 = arith.constant 0.000000e+00 : f32
      %264 = vector.broadcast %cst_150 : f32 to vector<8x32xf32>
      %265 = arith.maximumf %263, %264 : vector<8x32xf32>
      %c0_151 = arith.constant 0 : index
      %c0_152 = arith.constant 0 : index
      %266 = vector.load %arg33[%c0_151, %c0_152] : memref<32x32xbf16, #tpu.memory_space<vmem>>, vector<32x32xbf16>
      %267 = arith.truncf %265 : vector<8x32xf32> to vector<8x32xbf16>
      %cst_153 = arith.constant dense<0.000000e+00> : vector<8x32xf32>
      %268 = tpu.matmul %267, %266, %cst_153 {dimension_numbers = #tpu.dot_dimension_numbers<[1], [0], [0], [1], [0, 0, 1, 1], [], []>} : vector<8x32xbf16>, vector<32x32xbf16>, vector<8x32xf32> -> vector<8x32xf32>
      %c0_154 = arith.constant 0 : index
      %c0_155 = arith.constant 0 : index
      %269 = vector.load %arg34[%c0_154, %c0_155] : memref<1x32xf32, #tpu.memory_space<vmem>>, vector<1x32xf32>
      %270 = vector.broadcast %269 : vector<1x32xf32> to vector<8x32xf32>
      %271 = arith.addf %268, %270 : vector<8x32xf32>
      %cst_156 = arith.constant 0.000000e+00 : f32
      %272 = vector.broadcast %cst_156 : f32 to vector<8x32xf32>
      %273 = arith.maximumf %271, %272 : vector<8x32xf32>
      %c0_157 = arith.constant 0 : index
      %c0_158 = arith.constant 0 : index
      %274 = vector.load %arg35[%c0_157, %c0_158] : memref<32x4xbf16, #tpu.memory_space<vmem>>, vector<32x4xbf16>
      %275 = arith.truncf %273 : vector<8x32xf32> to vector<8x32xbf16>
      %cst_159 = arith.constant dense<0.000000e+00> : vector<8x4xf32>
      %276 = tpu.matmul %275, %274, %cst_159 {dimension_numbers = #tpu.dot_dimension_numbers<[1], [0], [0], [1], [0, 0, 1, 1], [], []>} : vector<8x32xbf16>, vector<32x4xbf16>, vector<8x4xf32> -> vector<8x4xf32>
      %c0_160 = arith.constant 0 : index
      %c0_161 = arith.constant 0 : index
      %277 = vector.load %arg36[%c0_160, %c0_161] : memref<1x4xf32, #tpu.memory_space<vmem>>, vector<1x4xf32>
      %278 = vector.broadcast %277 : vector<1x4xf32> to vector<8x4xf32>
      %279 = arith.addf %276, %278 : vector<8x4xf32>
      %c0_162 = arith.constant 0 : index
      %c0_163 = arith.constant 0 : index
      %c0_164 = arith.constant 0 : index
      %280 = vector.load %arg39[%c0_162, %c0_163, %c0_164] : memref<1x8x4xf32, #tpu.memory_space<vmem>>, vector<1x8x4xf32>
      %281 = vector.shape_cast %280 : vector<1x8x4xf32> to vector<8x4xf32>
      %282 = vector.shape_cast %279 : vector<8x4xf32> to vector<1x8x4xf32>
      tpu.vector_store %arg39[%c0_162, %c0_163, %c0_164], %282 {strides = array<i32>} : memref<1x8x4xf32, #tpu.memory_space<vmem>>, vector<1x8x4xf32>,
      %c0_165 = arith.constant 0 : index
      %c0_166 = arith.constant 0 : index
      %c0_167 = arith.constant 0 : index
      %283 = vector.load %arg3[%c0_165, %c0_166, %c0_167] : memref<1x8x4xf32, #tpu.memory_space<vmem>>, vector<1x8x4xf32>
      %284 = vector.shape_cast %283 : vector<1x8x4xf32> to vector<8x4xf32>
      %cst_168 = arith.constant 0.000000e+00 : f32
      %cst_169 = arith.constant 1.000000e+00 : f32
      %285 = vector.broadcast %cst_168 : f32 to vector<8x4xf32>
      %286 = arith.maximumf %285, %284 : vector<8x4xf32>
      %287 = vector.broadcast %cst_169 : f32 to vector<8x4xf32>
      %288 = arith.minimumf %287, %286 : vector<8x4xf32>
      %cst_170 = arith.constant 9.99999974E-6 : f32
      %289 = vector.broadcast %cst_170 : f32 to vector<8x4xf32>
      %290 = arith.maximumf %288, %289 : vector<8x4xf32>
      %cst_171 = arith.constant 1.000000e+00 : f32
      %291 = vector.broadcast %cst_171 : f32 to vector<8x4xf32>
      %292 = arith.subf %291, %288 : vector<8x4xf32>
      %cst_172 = arith.constant 9.99999974E-6 : f32
      %293 = vector.broadcast %cst_172 : f32 to vector<8x4xf32>
      %294 = arith.maximumf %292, %293 : vector<8x4xf32>
      %295 = arith.divf %290, %294 : vector<8x4xf32>
      %296 = math.log %295 : vector<8x4xf32>
      %297 = arith.addf %279, %296 : vector<8x4xf32>
      %298 = arith.negf %297 : vector<8x4xf32>
      %299 = math.exp %298 : vector<8x4xf32>
      %cst_173 = arith.constant 1.000000e+00 : f32
      %300 = vector.broadcast %cst_173 : f32 to vector<8x4xf32>
      %301 = arith.addf %300, %299 : vector<8x4xf32>
      %302 = arith.divf %300, %301 : vector<8x4xf32>
      %c0_174 = arith.constant 0 : index
      %c0_175 = arith.constant 0 : index
      %c0_176 = arith.constant 0 : index
      %303 = vector.load %arg40[%c0_174, %c0_175, %c0_176] : memref<1x8x4xf32, #tpu.memory_space<vmem>>, vector<1x8x4xf32>
      %304 = vector.shape_cast %303 : vector<1x8x4xf32> to vector<8x4xf32>
      %305 = vector.shape_cast %302 : vector<8x4xf32> to vector<1x8x4xf32>
      tpu.vector_store %arg40[%c0_174, %c0_175, %c0_176], %305 {strides = array<i32>} : memref<1x8x4xf32, #tpu.memory_space<vmem>>, vector<1x8x4xf32>,
    } else {
    }
    return
  }
  func.func @transform_0(%arg0: i32, %arg1: i32) -> (i32, i32, i32) {
    %c0_i32 = arith.constant 0 : i32
    %c0_i32_0 = arith.constant 0 : i32
    %c0_i32_1 = arith.constant 0 : i32
    return %arg0, %c0_i32, %c0_i32_0 : i32, i32, i32
  }
  func.func @transform_1(%arg0: i32, %arg1: i32) -> (i32, i32, i32) {
    %c0_i32 = arith.constant 0 : i32
    %c0_i32_0 = arith.constant 0 : i32
    %c0_i32_1 = arith.constant 0 : i32
    return %arg0, %c0_i32, %c0_i32_0 : i32, i32, i32
  }
  func.func @transform_2(%arg0: i32, %arg1: i32) -> (i32, i32, i32) {
    %c0_i32 = arith.constant 0 : i32
    %c0_i32_0 = arith.constant 0 : i32
    return %arg0, %arg1, %c0_i32 : i32, i32, i32
  }
  func.func @transform_3(%arg0: i32, %arg1: i32) -> (i32, i32) {
    %c0_i32 = arith.constant 0 : i32
    %c0_i32_0 = arith.constant 0 : i32
    %c0_i32_1 = arith.constant 0 : i32
    return %c0_i32, %c0_i32_0 : i32, i32
  }
  func.func @transform_4(%arg0: i32, %arg1: i32) -> (i32, i32) {
    %c0_i32 = arith.constant 0 : i32
    %c0_i32_0 = arith.constant 0 : i32
    %c0_i32_1 = arith.constant 0 : i32
    return %c0_i32, %c0_i32_0 : i32, i32
  }
  func.func @transform_5(%arg0: i32, %arg1: i32) -> (i32, i32) {
    %c0_i32 = arith.constant 0 : i32
    %c0_i32_0 = arith.constant 0 : i32
    %c0_i32_1 = arith.constant 0 : i32
    return %c0_i32, %c0_i32_0 : i32, i32
  }
  func.func @transform_6(%arg0: i32, %arg1: i32) -> (i32, i32) {
    %c0_i32 = arith.constant 0 : i32
    %c0_i32_0 = arith.constant 0 : i32
    %c0_i32_1 = arith.constant 0 : i32
    return %c0_i32, %c0_i32_0 : i32, i32
  }
  func.func @transform_7(%arg0: i32, %arg1: i32) -> (i32, i32) {
    %c0_i32 = arith.constant 0 : i32
    %c0_i32_0 = arith.constant 0 : i32
    %c0_i32_1 = arith.constant 0 : i32
    return %c0_i32, %c0_i32_0 : i32, i32
  }
  func.func @transform_8(%arg0: i32, %arg1: i32) -> (i32, i32) {
    %c0_i32 = arith.constant 0 : i32
    %c0_i32_0 = arith.constant 0 : i32
    %c0_i32_1 = arith.constant 0 : i32
    return %c0_i32, %c0_i32_0 : i32, i32
  }
  func.func @transform_9(%arg0: i32, %arg1: i32) -> (i32, i32) {
    %c0_i32 = arith.constant 0 : i32
    %c0_i32_0 = arith.constant 0 : i32
    %c0_i32_1 = arith.constant 0 : i32
    return %c0_i32, %c0_i32_0 : i32, i32
  }
  func.func @transform_10(%arg0: i32, %arg1: i32) -> (i32, i32) {
    %c0_i32 = arith.constant 0 : i32
    %c0_i32_0 = arith.constant 0 : i32
    %c0_i32_1 = arith.constant 0 : i32
    return %c0_i32, %c0_i32_0 : i32, i32
  }
  func.func @transform_11(%arg0: i32, %arg1: i32) -> (i32, i32) {
    %c0_i32 = arith.constant 0 : i32
    %c0_i32_0 = arith.constant 0 : i32
    %c0_i32_1 = arith.constant 0 : i32
    return %c0_i32, %c0_i32_0 : i32, i32
  }
  func.func @transform_12(%arg0: i32, %arg1: i32) -> (i32, i32) {
    %c0_i32 = arith.constant 0 : i32
    %c0_i32_0 = arith.constant 0 : i32
    %c0_i32_1 = arith.constant 0 : i32
    return %c0_i32, %c0_i32_0 : i32, i32
  }
  func.func @transform_13(%arg0: i32, %arg1: i32) -> (i32, i32) {
    %c0_i32 = arith.constant 0 : i32
    %c0_i32_0 = arith.constant 0 : i32
    %c0_i32_1 = arith.constant 0 : i32
    return %c0_i32, %c0_i32_0 : i32, i32
  }
  func.func @transform_14(%arg0: i32, %arg1: i32) -> (i32, i32) {
    %c0_i32 = arith.constant 0 : i32
    %c0_i32_0 = arith.constant 0 : i32
    %c0_i32_1 = arith.constant 0 : i32
    return %c0_i32, %c0_i32_0 : i32, i32
  }
  func.func @transform_15(%arg0: i32, %arg1: i32) -> (i32, i32) {
    %c0_i32 = arith.constant 0 : i32
    %c0_i32_0 = arith.constant 0 : i32
    %c0_i32_1 = arith.constant 0 : i32
    return %c0_i32, %c0_i32_0 : i32, i32
  }
  func.func @transform_16(%arg0: i32, %arg1: i32) -> (i32, i32) {
    %c0_i32 = arith.constant 0 : i32
    %c0_i32_0 = arith.constant 0 : i32
    %c0_i32_1 = arith.constant 0 : i32
    return %c0_i32, %c0_i32_0 : i32, i32
  }
  func.func @transform_17(%arg0: i32, %arg1: i32) -> (i32, i32) {
    %c0_i32 = arith.constant 0 : i32
    %c0_i32_0 = arith.constant 0 : i32
    %c0_i32_1 = arith.constant 0 : i32
    return %c0_i32, %c0_i32_0 : i32, i32
  }
  func.func @transform_18(%arg0: i32, %arg1: i32) -> (i32, i32) {
    %c0_i32 = arith.constant 0 : i32
    %c0_i32_0 = arith.constant 0 : i32
    %c0_i32_1 = arith.constant 0 : i32
    return %c0_i32, %c0_i32_0 : i32, i32
  }
  func.func @transform_19(%arg0: i32, %arg1: i32) -> (i32, i32) {
    %c0_i32 = arith.constant 0 : i32
    %c0_i32_0 = arith.constant 0 : i32
    %c0_i32_1 = arith.constant 0 : i32
    return %c0_i32, %c0_i32_0 : i32, i32
  }
  func.func @transform_20(%arg0: i32, %arg1: i32) -> (i32, i32) {
    %c0_i32 = arith.constant 0 : i32
    %c0_i32_0 = arith.constant 0 : i32
    %c0_i32_1 = arith.constant 0 : i32
    return %c0_i32, %c0_i32_0 : i32, i32
  }
  func.func @transform_21(%arg0: i32, %arg1: i32) -> (i32, i32) {
    %c0_i32 = arith.constant 0 : i32
    %c0_i32_0 = arith.constant 0 : i32
    %c0_i32_1 = arith.constant 0 : i32
    return %c0_i32, %c0_i32_0 : i32, i32
  }
  func.func @transform_22(%arg0: i32, %arg1: i32) -> (i32, i32) {
    %c0_i32 = arith.constant 0 : i32
    %c0_i32_0 = arith.constant 0 : i32
    %c0_i32_1 = arith.constant 0 : i32
    return %c0_i32, %c0_i32_0 : i32, i32
  }
  func.func @transform_23(%arg0: i32, %arg1: i32) -> (i32, i32) {
    %c0_i32 = arith.constant 0 : i32
    %c0_i32_0 = arith.constant 0 : i32
    %c0_i32_1 = arith.constant 0 : i32
    return %c0_i32, %c0_i32_0 : i32, i32
  }
  func.func @transform_24(%arg0: i32, %arg1: i32) -> (i32, i32) {
    %c0_i32 = arith.constant 0 : i32
    %c0_i32_0 = arith.constant 0 : i32
    %c0_i32_1 = arith.constant 0 : i32
    return %c0_i32, %c0_i32_0 : i32, i32
  }
  func.func @transform_25(%arg0: i32, %arg1: i32) -> (i32, i32) {
    %c0_i32 = arith.constant 0 : i32
    %c0_i32_0 = arith.constant 0 : i32
    %c0_i32_1 = arith.constant 0 : i32
    return %c0_i32, %c0_i32_0 : i32, i32
  }
  func.func @transform_26(%arg0: i32, %arg1: i32) -> (i32, i32) {
    %c0_i32 = arith.constant 0 : i32
    %c0_i32_0 = arith.constant 0 : i32
    %c0_i32_1 = arith.constant 0 : i32
    return %c0_i32, %c0_i32_0 : i32, i32
  }
  func.func @transform_27(%arg0: i32, %arg1: i32) -> (i32, i32) {
    %c0_i32 = arith.constant 0 : i32
    %c0_i32_0 = arith.constant 0 : i32
    %c0_i32_1 = arith.constant 0 : i32
    return %c0_i32, %c0_i32_0 : i32, i32
  }
  func.func @transform_28(%arg0: i32, %arg1: i32) -> (i32, i32) {
    %c0_i32 = arith.constant 0 : i32
    %c0_i32_0 = arith.constant 0 : i32
    %c0_i32_1 = arith.constant 0 : i32
    return %c0_i32, %c0_i32_0 : i32, i32
  }
  func.func @transform_29(%arg0: i32, %arg1: i32) -> (i32, i32) {
    %c0_i32 = arith.constant 0 : i32
    %c0_i32_0 = arith.constant 0 : i32
    %c0_i32_1 = arith.constant 0 : i32
    return %c0_i32, %c0_i32_0 : i32, i32
  }
  func.func @transform_30(%arg0: i32, %arg1: i32) -> (i32, i32) {
    %c0_i32 = arith.constant 0 : i32
    %c0_i32_0 = arith.constant 0 : i32
    %c0_i32_1 = arith.constant 0 : i32
    return %c0_i32, %c0_i32_0 : i32, i32
  }
  func.func @transform_31(%arg0: i32, %arg1: i32) -> (i32, i32) {
    %c0_i32 = arith.constant 0 : i32
    %c0_i32_0 = arith.constant 0 : i32
    %c0_i32_1 = arith.constant 0 : i32
    return %c0_i32, %c0_i32_0 : i32, i32
  }
  func.func @transform_32(%arg0: i32, %arg1: i32) -> (i32, i32) {
    %c0_i32 = arith.constant 0 : i32
    %c0_i32_0 = arith.constant 0 : i32
    %c0_i32_1 = arith.constant 0 : i32
    return %c0_i32, %c0_i32_0 : i32, i32
  }
  func.func @transform_33(%arg0: i32, %arg1: i32) -> (i32, i32) {
    %c0_i32 = arith.constant 0 : i32
    %c0_i32_0 = arith.constant 0 : i32
    %c0_i32_1 = arith.constant 0 : i32
    return %c0_i32, %c0_i32_0 : i32, i32
  }
  func.func @transform_34(%arg0: i32, %arg1: i32) -> (i32, i32) {
    %c0_i32 = arith.constant 0 : i32
    %c0_i32_0 = arith.constant 0 : i32
    %c0_i32_1 = arith.constant 0 : i32
    return %c0_i32, %c0_i32_0 : i32, i32
  }
  func.func @transform_35(%arg0: i32, %arg1: i32) -> (i32, i32, i32) {
    %c0_i32 = arith.constant 0 : i32
    %c0_i32_0 = arith.constant 0 : i32
    %c0_i32_1 = arith.constant 0 : i32
    return %arg0, %c0_i32, %c0_i32_0 : i32, i32, i32
  }
  func.func @transform_36(%arg0: i32, %arg1: i32) -> (i32, i32, i32) {
    %c0_i32 = arith.constant 0 : i32
    %c0_i32_0 = arith.constant 0 : i32
    %c0_i32_1 = arith.constant 0 : i32
    return %arg0, %c0_i32, %c0_i32_0 : i32, i32, i32
  }
  func.func @transform_37(%arg0: i32, %arg1: i32) -> (i32, i32, i32) {
    %c0_i32 = arith.constant 0 : i32
    %c0_i32_0 = arith.constant 0 : i32
    %c0_i32_1 = arith.constant 0 : i32
    return %arg0, %c0_i32, %c0_i32_0 : i32, i32, i32
  }
  func.func @transform_38(%arg0: i32, %arg1: i32) -> (i32, i32, i32) {
    %c0_i32 = arith.constant 0 : i32
    %c0_i32_0 = arith.constant 0 : i32
    %c0_i32_1 = arith.constant 0 : i32
    return %arg0, %c0_i32, %c0_i32_0 : i32, i32, i32
  }
}

</mosaic_0001>

<llo_original>
// kernel: run.5
$region0: #{run.5}
  #allocation0 [shape = 'u32[]', space=smem, size = 0x4, offset = 0x4, fixed_abs, tag = 'smem constant byte address 0x4 - core index']
  #allocation1 [shape = 'u32[144,128]{1,0:T(1,128)}', space=vmem, size = 0x12000, scoped, tag = 'internal scratch']
  %s0 = inlined_call_operand.vmem [shape: bf16[2,8,32], index: 0, kind: input, shape index: {}]
  %s1 = inlined_call_operand.vmem [shape: f32[2,5,32], index: 1, kind: input, shape index: {}]
  %s2 = inlined_call_operand.vmem [shape: bf16[32,32], index: 2, kind: input, shape index: {}]
  %s3 = inlined_call_operand.vmem [shape: f32[1,32], index: 3, kind: input, shape index: {}]
  %s4 = inlined_call_operand.vmem [shape: f32[2,8,5], index: 4, kind: output, shape index: {}]
  %s5 = sld [smem:[#allocation0]]
  $region49: #{run.5} parent=0
    _
  %s7 = ssub.s32 1, %s5
  %s8 = scalar_select 0, %s7, %s5
  loop: start=0, step=1, limit=4
  $region2: #{run.5} parent=0 // loop_pre_header
    _
  $region3: #{run.5} parent=0 // loop_header
    %s10 = sphi 0, %s14
    %p11 = scmp.ge.s32.totalorder %s10, 4
    %s20 = sphi 0, %s22
    %s23 = sphi 0, %s20
    %s24 = sphi 0, %s23
    %s40 = sphi 0, %s24
    %s46 = sphi 0, %s48
    %s49 = sphi 0, %s46
    %s50 = sphi 0, %s49
    %s66 = sphi 0, %s50
    %s70 = sphi 0, %s70
    %s72 = sphi 0, %s70
    %s73 = sphi 0, %s72
    %s87 = sphi 0, %s73
    %s91 = sphi 0, %s91
    %s93 = sphi 0, %s91
    %s94 = sphi 0, %s93
    %s108 = sphi 0, %s94
    %s114 = sphi 0, %s116
    %s117 = sphi 0, %s114
    %s118 = sphi 0, %s117
    %s134 = sphi 0, %s118
  $region4: #{run.5} parent=0 // loop_header_branch
    %13 = sbr.rel (%p11) target = $region8
  $region5: #{run.5} parent=0 // loop_body
    %s15 = ssub.s32 %s10, 1
    %s16 = ssub.s32 %s10, 2
    %s17 = sadd.s32 %s10, 1
    %s18 = ssub.s32 %s10, %s17
    %p19 = scmp.eq.s32.totalorder %s18, 0
    %s21 = sadd.s32 %s20, 1
    %s22 = scalar_select %p19, %s20, %s21
    %p25 = pneg %p19
    %p26 = scmp.eq.s32.totalorder %s10, 1
    %p27 = por %p25, %p26
    %p28 = scmp.ne.s32.totalorder %s20, %s23
    %p29 = scmp.eq.s32.totalorder %s10, 0
    %p30 = por %p28, %p29
    %p31 = scmp.ne.s32.totalorder %s20, %s23
    %p32 = scmp.eq.s32.totalorder %s15, 1
    %p33 = por %p31, %p32
    %p34 = scmp.ne.s32.totalorder %s23, %s24
    %p35 = scmp.eq.s32.totalorder %s15, 0
    %p36 = por %p34, %p35
    %p37 = scmp.ne.s32.totalorder %s23, %s24
    %p38 = scmp.eq.s32.totalorder %s16, 1
    %p39 = por %p37, %p38
    %p41 = scmp.ne.s32.totalorder %s24, %s40
    %p42 = scmp.eq.s32.totalorder %s16, 0
    %p43 = por %p41, %p42
    %s44 = ssub.s32 %s10, %s17
    %p45 = scmp.eq.s32.totalorder %s44, 0
    %s47 = sadd.s32 %s46, 1
    %s48 = scalar_select %p45, %s46, %s47
    %p51 = pneg %p45
    %p52 = scmp.eq.s32.totalorder %s10, 1
    %p53 = por %p51, %p52
    %p54 = scmp.ne.s32.totalorder %s46, %s49
    %p55 = scmp.eq.s32.totalorder %s10, 0
    %p56 = por %p54, %p55
    %p57 = scmp.ne.s32.totalorder %s46, %s49
    %p58 = scmp.eq.s32.totalorder %s15, 1
    %p59 = por %p57, %p58
    %p60 = scmp.ne.s32.totalorder %s49, %s50
    %p61 = scmp.eq.s32.totalorder %s15, 0
    %p62 = por %p60, %p61
    %p63 = scmp.ne.s32.totalorder %s49, %s50
    %p64 = scmp.eq.s32.totalorder %s16, 1
    %p65 = por %p63, %p64
    %p67 = scmp.ne.s32.totalorder %s50, %s66
    %p68 = scmp.eq.s32.totalorder %s16, 0
    %p69 = por %p67, %p68
    %s71 = sadd.s32 %s70, 1
    %p74 = scmp.eq.s32.totalorder %s10, 1
    %p75 = scmp.ne.s32.totalorder %s70, %s72
    %p76 = scmp.eq.s32.totalorder %s10, 0
    %p77 = por %p75, %p76
    %p78 = scmp.ne.s32.totalorder %s70, %s72
    %p79 = scmp.eq.s32.totalorder %s15, 1
    %p80 = por %p78, %p79
    %p81 = scmp.ne.s32.totalorder %s72, %s73
    %p82 = scmp.eq.s32.totalorder %s15, 0
    %p83 = por %p81, %p82
    %p84 = scmp.ne.s32.totalorder %s72, %s73
    %p85 = scmp.eq.s32.totalorder %s16, 1
    %p86 = por %p84, %p85
    %p88 = scmp.ne.s32.totalorder %s73, %s87
    %p89 = scmp.eq.s32.totalorder %s16, 0
    %p90 = por %p88, %p89
    %s92 = sadd.s32 %s91, 1
    %p95 = scmp.eq.s32.totalorder %s10, 1
    %p96 = scmp.ne.s32.totalorder %s91, %s93
    %p97 = scmp.eq.s32.totalorder %s10, 0
    %p98 = por %p96, %p97
    %p99 = scmp.ne.s32.totalorder %s91, %s93
    %p100 = scmp.eq.s32.totalorder %s15, 1
    %p101 = por %p99, %p100
    %p102 = scmp.ne.s32.totalorder %s93, %s94
    %p103 = scmp.eq.s32.totalorder %s15, 0
    %p104 = por %p102, %p103
    %p105 = scmp.ne.s32.totalorder %s93, %s94
    %p106 = scmp.eq.s32.totalorder %s16, 1
    %p107 = por %p105, %p106
    %p109 = scmp.ne.s32.totalorder %s94, %s108
    %p110 = scmp.eq.s32.totalorder %s16, 0
    %p111 = por %p109, %p110
    %s112 = ssub.s32 %s10, %s17
    %p113 = scmp.eq.s32.totalorder %s112, 0
    %s115 = sadd.s32 %s114, 1
    %s116 = scalar_select %p113, %s114, %s115
    %p119 = pneg %p113
    %p120 = scmp.eq.s32.totalorder %s10, 1
    %p121 = por %p119, %p120
    %p122 = scmp.ne.s32.totalorder %s114, %s117
    %p123 = scmp.eq.s32.totalorder %s10, 0
    %p124 = por %p122, %p123
    %p125 = scmp.ne.s32.totalorder %s114, %s117
    %p126 = scmp.eq.s32.totalorder %s15, 1
    %p127 = por %p125, %p126
    %p128 = scmp.ne.s32.totalorder %s117, %s118
    %p129 = scmp.eq.s32.totalorder %s15, 0
    %p130 = por %p128, %p129
    %p131 = scmp.ne.s32.totalorder %s117, %s118
    %p132 = scmp.eq.s32.totalorder %s16, 1
    %p133 = por %p131, %p132
    %p135 = scmp.ne.s32.totalorder %s118, %s134
    %p136 = scmp.eq.s32.totalorder %s16, 0
    %p137 = por %p135, %p136
    %p138 = scmp.le.s32.totalorder 1, %s10
    %p139 = scmp.lt.s32.totalorder %s10, 3
    %p140 = pnand %p138, %p139
    %p141 = pneg %p140
    // Predicated region
    $region9: #{run.5} parent=5 // pred_check
      _
    $region10: #{run.5} parent=5 // pred_check_branch
      %143 = sbr.rel (%p140) target = $region12
    $region11: #{run.5} parent=5 // pred_region
      %s144 = ssub.s32 %s10, 1
      // Predicated region
      $region13: #{run.5} parent=11 // pred_check
        %p145 = pneg %p83
      $region14: #{run.5} parent=11 // pred_check_branch
        %147 = sbr.rel (%p145) target = $region16
      $region15: #{run.5} parent=11 // pred_region
        _
      $region16: #{run.5} parent=11 // pred_fallthru
        _
      // Predicated region
      $region17: #{run.5} parent=11 // pred_check
        %p148 = pneg %p104
      $region18: #{run.5} parent=11 // pred_check_branch
        %150 = sbr.rel (%p148) target = $region20
      $region19: #{run.5} parent=11 // pred_region
        _
      $region20: #{run.5} parent=11 // pred_fallthru
        _
    $region12: #{run.5} parent=5 // pred_fallthru
      _
    %p151 = scmp.lt.s32.totalorder %s10, 2
    // Predicated region
    $region21: #{run.5} parent=5 // pred_check
      %p152 = pneg %p151
    $region22: #{run.5} parent=5 // pred_check_branch
      %154 = sbr.rel (%p152) target = $region24
    $region23: #{run.5} parent=5 // pred_region
      // Predicated region
      $region25: #{run.5} parent=23 // pred_check
        %p155 = pneg %p30
      $region26: #{run.5} parent=23 // pred_check_branch
        %157 = sbr.rel (%p155) target = $region28
      $region27: #{run.5} parent=23 // pred_region
        %p158 = scmp.lt.s32.totalorder %s10, 1
        %s159 = scalar_select %p158, %s10, 1
        %s160 = smul.addr %s159, 4
        %s161 = scalar_lea.vmem %s0, %s160
      $region28: #{run.5} parent=23 // pred_fallthru
        _
      // Predicated region
      $region29: #{run.5} parent=23 // pred_check
        %p162 = pneg %p56
      $region30: #{run.5} parent=23 // pred_check_branch
        %164 = sbr.rel (%p162) target = $region32
      $region31: #{run.5} parent=23 // pred_region
        %p165 = scmp.lt.s32.totalorder %s10, 1
        %s166 = scalar_select %p165, %s10, 1
        %s167 = smul.addr %s166, 8
        %s168 = scalar_lea.vmem %s1, %s167
      $region32: #{run.5} parent=23 // pred_fallthru
        _
    $region24: #{run.5} parent=5 // pred_fallthru
      _
    %p169 = scmp.le.s32.totalorder 1, %s10
    %p170 = scmp.lt.s32.totalorder %s10, 3
    %p171 = pnand %p169, %p170
    %p172 = pneg %p171
    // Predicated region
    $region33: #{run.5} parent=5 // pred_check
      _
    $region34: #{run.5} parent=5 // pred_check_branch
      %174 = sbr.rel (%p171) target = $region36
    $region35: #{run.5} parent=5 // pred_region
      %s175 = ssub.s32 %s10, 1
      %p176 = scmp.lt.s32.totalorder %s15, 1
      %s177 = scalar_select %p176, %s15, 1
      %s178 = smul.addr %s177, 4
      %s179 = scalar_lea.vmem %s0, %s178
      %p180 = pneg %p36
      %p181 = pneg %p33
      %p182 = scmp.lt.s32.totalorder %s15, 1
      %s183 = scalar_select %p182, %s15, 1
      %s184 = smul.addr %s183, 8
      %s185 = scalar_lea.vmem %s1, %s184
      %p186 = pneg %p62
      %p187 = pneg %p59
      %p188 = pneg %p83
      %p189 = pneg %p80
      %p190 = pneg %p104
      %p191 = pneg %p101
      %p192 = pneg %p130
      %p193 = pneg %p127
      %p194 = scmp.lt.s32.totalorder %s15, 1
      %s195 = scalar_select %p194, %s15, 1
      %s196 = smul.addr %s195, 8
      %s197 = scalar_lea.vmem %s4, %s196
      %p198 = scmp.lt.s32.totalorder %s15, 1
      %s199 = scalar_select %p198, %s15, 1
      %s200 = smul.addr %s199, 4
      %s201 = scalar_lea.vmem %s0, %s200
      %p202 = scmp.lt.s32.totalorder %s15, 1
      %s203 = scalar_select %p202, %s15, 1
      %s204 = smul.addr %s203, 8
      %s205 = scalar_lea.vmem %s1, %s204
      %p206 = scmp.lt.s32.totalorder %s15, 1
      %s207 = scalar_select %p206, %s15, 1
      %s208 = smul.addr %s207, 8
      %s209 = scalar_lea.vmem %s4, %s208
      %v211 = vld [vmem:[%s201] sm:$0xf]
      %v212 = vunpack.c.l.bf16 %v211
      %v213 = vld [vmem:[%s205] sm:$0x1f]
      %v214 = vld [vmem:[%s2] sm:$0xf]
      %v215 = vld [vmem:[%s2 + $0x4] sm:$0xf]
      %v216 = vld [vmem:[%s2 + $0x8] sm:$0xf]
      %v217 = vld [vmem:[%s2 + $0xc] sm:$0xf]
      %v218 = vpack.c.bf16 %v213, %v213
      %v219 = vld [vmem:[%s3] sm:$0x1]
      %v221 = vlaneseq
      %v222 = vshrl.u32 %v221, 7
      %v223 = vsub.s32 0, %v222
      %v224 = vrot.slane %v219, %v223
      %v230 = vunpack.c.l.b16 %v214
      %v231 = vunpack.c.l.b16 %v215
      %v232 = vunpack.c.l.b16 %v216
      %v233 = vunpack.c.l.b16 %v217
      %v234 = vpack.c.b16 %v231, %v230
      %v235 = vpack.c.b16 %v233, %v232
      %vm238 = vcmask 261120
      %v240 = vsel %vm238, %v218, 0
      %242 = vmatprep.subr.bf16.mxu0 0
      %243 = vmatpush1.bf16.msra.mxu0 %v234
      %244 = vmatprep.subr.bf16.mxu0 0
      %245 = vmatpush1.bf16.msra.mxu0 %v235
      %246 = vmatprep.subr.bf16.mxu0 0
      %247 = vmatpush1.bf16.msra.mxu0 0
      %248 = vmatprep.subr.bf16.mxu0 0
      %249 = vmatpush1.bf16.msra.mxu0 0
      %250 = vmatprep.subr.bf16.mxu0 0
      %251 = vmatpush1.bf16.msra.mxu0 0
      %252 = vmatprep.subr.bf16.mxu0 0
      %253 = vmatpush1.bf16.msra.mxu0 0
      %254 = vmatprep.subr.bf16.mxu0 0
      %255 = vmatpush1.bf16.msra.mxu0 0
      %256 = vmatprep.subr.bf16.mxu0 0
      %257 = vmatpush1.bf16.msra.mxu0 0
      %258 = vmatprep.subr.bf16.mxu0 0
      %259 = vmatpush1.bf16.msra.mxu0 0
      %260 = vmatprep.subr.bf16.mxu0 0
      %261 = vmatpush1.bf16.msra.mxu0 0
      %262 = vmatprep.subr.bf16.mxu0 0
      %263 = vmatpush1.bf16.msra.mxu0 0
      %264 = vmatprep.subr.bf16.mxu0 0
      %265 = vmatpush1.bf16.msra.mxu0 0
      %266 = vmatprep.subr.bf16.mxu0 0
      %267 = vmatpush1.bf16.msra.mxu0 0
      %268 = vmatprep.subr.bf16.mxu0 0
      %269 = vmatpush1.bf16.msra.mxu0 0
      %270 = vmatprep.subr.bf16.mxu0 0
      %271 = vmatpush1.bf16.msra.mxu0 0
      %272 = vmatprep.subr.bf16.mxu0 0
      %273 = vmatpush1.bf16.msra.mxu0 0
      %274 = vmatprep.mubr.bf16.mxu0 0
      %275 = vmatmul.mubr.bf16.gmra.mrb[0].mxu0 %v240
      %v276 = vpop.f32.mrb[0].mxu0
      %v277 = vadd.f32 %v224, %v276
      %v278 = vpop.f32.mrb[0].mxu0
      %v279 = vpop.f32.mrb[0].mxu0
      %v280 = vpop.f32.mrb[0].mxu0
      %281 = vdwg.mxu0
      %v282 = vmul.f32 %v212, %v212
      %v283 = vsel %vm238, %v282, 0.0
      %284 = vadd.xlane.f32.xlu0 %v283
      %v285 = vpop.xlane.xlu0 %284
      %v286 = vmax.f32 %v285, 1e-24
      %v287 = vrsqrt.pop %v286
      %v288 = vmul.f32 %v212, %v287
      %v289 = vmul.f32 %v277, %v277
      %vm290 = vcmask 258048
      %v291 = vsel %vm290, %v289, 0.0
      %292 = vadd.xlane.f32.xlu0 %v291
      %v293 = vpop.xlane.xlu0 %292
      %v294 = vmax.f32 %v293, 1e-24
      %v295 = vrsqrt.pop %v294
      %v296 = vmul.f32 %v277, %v295
      %v297 = vpack.c.bf16 %v288, %v288
      %v298 = vpack.c.bf16 %v296, %v296
      %v300 = vsel %vm238, %v297, 0
      %v303 = vsel %vm238, %v298, 0
      %305 = vmatprep.subr.bf16.mxu0 0
      %306 = vmatpush1.bf16.xpose.msra.mxu0 %v303
      %307 = vmatprep.subr.bf16.mxu0 0
      %308 = vmatpush1.bf16.xpose.msra.mxu0 0
      %309 = vmatprep.subr.bf16.mxu0 0
      %310 = vmatpush1.bf16.xpose.msra.mxu0 0
      %311 = vmatprep.subr.bf16.mxu0 0
      %312 = vmatpush1.bf16.xpose.msra.mxu0 0
      %313 = vmatprep.subr.bf16.mxu0 0
      %314 = vmatpush1.bf16.xpose.msra.mxu0 0
      %315 = vmatprep.subr.bf16.mxu0 0
      %316 = vmatpush1.bf16.xpose.msra.mxu0 0
      %317 = vmatprep.subr.bf16.mxu0 0
      %318 = vmatpush1.bf16.xpose.msra.mxu0 0
      %319 = vmatprep.subr.bf16.mxu0 0
      %320 = vmatpush1.bf16.xpose.msra.mxu0 0
      %321 = vmatprep.subr.bf16.mxu0 0
      %322 = vmatpush1.bf16.xpose.msra.mxu0 0
      %323 = vmatprep.subr.bf16.mxu0 0
      %324 = vmatpush1.bf16.xpose.msra.mxu0 0
      %325 = vmatprep.subr.bf16.mxu0 0
      %326 = vmatpush1.bf16.xpose.msra.mxu0 0
      %327 = vmatprep.subr.bf16.mxu0 0
      %328 = vmatpush1.bf16.xpose.msra.mxu0 0
      %329 = vmatprep.subr.bf16.mxu0 0
      %330 = vmatpush1.bf16.xpose.msra.mxu0 0
      %331 = vmatprep.subr.bf16.mxu0 0
      %332 = vmatpush1.bf16.xpose.msra.mxu0 0
      %333 = vmatprep.subr.bf16.mxu0 0
      %334 = vmatpush1.bf16.xpose.msra.mxu0 0
      %335 = vmatprep.subr.bf16.mxu0 0
      %336 = vmatpush1.bf16.xpose.msra.mxu0 0
      %337 = vmatprep.mubr.bf16.mxu0 0
      %338 = vmatmul.mubr.bf16.gmra.mrb[0].mxu0 %v300
      %v339 = vpop.f32.mrb[0].mxu0
      %v340 = vadd.f32 0.0, %v339
      %v341 = vpop.f32.mrb[0].mxu0
      %v342 = vpop.f32.mrb[0].mxu0
      %v343 = vpop.f32.mrb[0].mxu0
      %344 = vdwg.mxu0
      %v345 = vmul.f32 %v340, 14.285714
      %vm346 = vcmask 39936
      %347 = vst.msk [vmem:[%s209] sm:$0xff] %vm346, %v345
      %p348 = scmp.lt.s32.totalorder %s15, 1
      %s349 = scalar_select %p348, %s15, 1
      %s350 = smul.addr %s349, 8
      %s351 = scalar_lea.vmem %s4, %s350
      // Predicated region
      $region37: #{run.5} parent=35 // pred_check
        %p352 = pneg %p127
      $region38: #{run.5} parent=35 // pred_check_branch
        %354 = sbr.rel (%p352) target = $region40
      $region39: #{run.5} parent=35 // pred_region
        _
      $region40: #{run.5} parent=35 // pred_fallthru
        _
    $region36: #{run.5} parent=5 // pred_fallthru
      _
    %p355 = scmp.le.s32.totalorder 2, %s10
    // Predicated region
    $region41: #{run.5} parent=5 // pred_check
      %p356 = pneg %p355
    $region42: #{run.5} parent=5 // pred_check_branch
      %358 = sbr.rel (%p356) target = $region44
    $region43: #{run.5} parent=5 // pred_region
      %s359 = ssub.s32 %s10, 2
      // Predicated region
      $region45: #{run.5} parent=43 // pred_check
        %p360 = pneg %p133
      $region46: #{run.5} parent=43 // pred_check_branch
        %362 = sbr.rel (%p360) target = $region48
      $region47: #{run.5} parent=43 // pred_region
        %p363 = scmp.lt.s32.totalorder %s16, 1
        %s364 = scalar_select %p363, %s16, 1
        %s365 = smul.addr %s364, 8
        %s366 = scalar_lea.vmem %s4, %s365
      $region48: #{run.5} parent=43 // pred_fallthru
        _
    $region44: #{run.5} parent=5 // pred_fallthru
      _
  $region6: #{run.5} parent=0 // loop_footer
    %s14 = sadd.s32 1, %s10
  $region7: #{run.5} parent=0 // loop_footer_branch
    %9 = sbr.rel target = $region3
  $region8: #{run.5} parent=0 // loop_exit
    _

// kernel: run.3
$region0: #{run.3}
  #allocation0 [shape = 'u32[]', space=smem, size = 0x4, offset = 0x4, fixed_abs, tag = 'smem constant byte address 0x4 - core index']
  #allocation1 [shape = 'u32[144,128]{1,0:T(1,128)}', space=vmem, size = 0x12000, scoped, tag = 'internal scratch']
  #allocation2 [shape = 'f32[8,32]{1,0:T(8,128)}', space=vmem, size = 0x1000, scoped, tag = 'scratch operand']
  #allocation3 [shape = 'bf16[8,32]{1,0:T(8,128)(2,1)}', space=vmem, size = 0x800, scoped, tag = 'scratch operand']
  #allocation4 [shape = 'f32[4,8,1]{2,1,0:T(8,128)}', space=vmem, size = 0x4000, scoped, tag = 'scratch operand']
  #allocation5 [shape = 'f32[4,8,1]{2,1,0:T(8,128)}', space=vmem, size = 0x4000, scoped, tag = 'scratch operand']
  #allocation6 [shape = 'f32[4,8,8]{2,1,0:T(8,128)}', space=vmem, size = 0x4000, scoped, tag = 'scratch operand']
  %s0 = inlined_call_operand.smem [shape: u32[39], index: -1, kind: input, shape index: {}]
  %s1 = sld [smem:[%s0]]
  %s2 = scalar_lea.smem %s0, 1
  %s3 = sld [smem:[%s2]]
  %s4 = scalar_lea.smem %s0, 2
  %s5 = sld [smem:[%s4]]
  %s6 = scalar_lea.smem %s0, 3
  %s7 = sld [smem:[%s6]]
  %s8 = scalar_lea.smem %s0, 4
  %s9 = sld [smem:[%s8]]
  %s10 = scalar_lea.smem %s0, 5
  %s11 = sld [smem:[%s10]]
  %s12 = scalar_lea.smem %s0, 6
  %s13 = sld [smem:[%s12]]
  %s14 = scalar_lea.smem %s0, 7
  %s15 = sld [smem:[%s14]]
  %s16 = scalar_lea.smem %s0, 8
  %s17 = sld [smem:[%s16]]
  %s18 = scalar_lea.smem %s0, 9
  %s19 = sld [smem:[%s18]]
  %s20 = scalar_lea.smem %s0, 10
  %s21 = sld [smem:[%s20]]
  %s22 = scalar_lea.smem %s0, 11
  %s23 = sld [smem:[%s22]]
  %s24 = scalar_lea.smem %s0, 12
  %s25 = sld [smem:[%s24]]
  %s26 = scalar_lea.smem %s0, 13
  %s27 = sld [smem:[%s26]]
  %s28 = scalar_lea.smem %s0, 14
  %s29 = sld [smem:[%s28]]
  %s30 = scalar_lea.smem %s0, 15
  %s31 = sld [smem:[%s30]]
  %s32 = scalar_lea.smem %s0, 16
  %s33 = sld [smem:[%s32]]
  %s34 = scalar_lea.smem %s0, 17
  %s35 = sld [smem:[%s34]]
  %s36 = scalar_lea.smem %s0, 18
  %s37 = sld [smem:[%s36]]
  %s38 = scalar_lea.smem %s0, 19
  %s39 = sld [smem:[%s38]]
  %s40 = scalar_lea.smem %s0, 20
  %s41 = sld [smem:[%s40]]
  %s42 = scalar_lea.smem %s0, 21
  %s43 = sld [smem:[%s42]]
  %s44 = scalar_lea.smem %s0, 22
  %s45 = sld [smem:[%s44]]
  %s46 = scalar_lea.smem %s0, 23
  %s47 = sld [smem:[%s46]]
  %s48 = scalar_lea.smem %s0, 24
  %s49 = sld [smem:[%s48]]
  %s50 = scalar_lea.smem %s0, 25
  %s51 = sld [smem:[%s50]]
  %s52 = scalar_lea.smem %s0, 26
  %s53 = sld [smem:[%s52]]
  %s54 = scalar_lea.smem %s0, 27
  %s55 = sld [smem:[%s54]]
  %s56 = scalar_lea.smem %s0, 28
  %s57 = sld [smem:[%s56]]
  %s58 = scalar_lea.smem %s0, 29
  %s59 = sld [smem:[%s58]]
  %s60 = scalar_lea.smem %s0, 30
  %s61 = sld [smem:[%s60]]
  %s62 = scalar_lea.smem %s0, 31
  %s63 = sld [smem:[%s62]]
  %s64 = scalar_lea.smem %s0, 32
  %s65 = sld [smem:[%s64]]
  %s66 = scalar_lea.smem %s0, 33
  %s67 = sld [smem:[%s66]]
  %s68 = scalar_lea.smem %s0, 34
  %s69 = sld [smem:[%s68]]
  %s70 = scalar_lea.smem %s0, 35
  %s71 = sld [smem:[%s70]]
  %s72 = scalar_lea.smem %s0, 36
  %s73 = sld [smem:[%s72]]
  %s74 = scalar_lea.smem %s0, 37
  %s75 = sld [smem:[%s74]]
  %s76 = scalar_lea.smem %s0, 38
  %s77 = sld [smem:[%s76]]
  %78 = xla_tuple %s71, %s73, %s75, %s77
  %s79 = sld [smem:[#allocation0]]
  $region205: #{run.3} parent=0
    _
  %s81 = ssub.s32 1, %s79
  %s82 = scalar_select 0, %s81, %s79
  $region1: #{run.3} parent=0
    #allocation7 [shape = 'u8[8192]{0}', space=vmem, size = 0x2000, scoped, tag = 'output window, operand 1']
    #allocation8 [shape = 's32[2]{0}', space=sflag, size = 0x8, scoped, tag = 'scoped memory for run.3']
    #allocation9 [shape = 'u8[8192]{0}', space=vmem, size = 0x2000, scoped, tag = 'output window, operand 2']
    #allocation10 [shape = 's32[2]{0}', space=sflag, size = 0x8, scoped, tag = 'scoped memory for run.3']
    %83 = vsyncpa [#allocation8], 0
    %s84 = scalar_lea.sflag [#allocation8], 1
    %85 = vsyncpa %s84, 0
    %86 = vsyncpa [#allocation10], 0
    %s87 = scalar_lea.sflag [#allocation10], 1
    %88 = vsyncpa %s87, 0
    loop: start=0, step=1, limit=4
    $region2: #{run.3} parent=1 // loop_pre_header
      _
    $region3: #{run.3} parent=1 // loop_header
      %s90 = sphi 0, %s94
      %p91 = scmp.ge.s32.totalorder %s90, 4
      %s97 = sphi 0, %s109
      %s98 = sphi 0, %s105
      %s99 = sphi 0, %s97
      %s100 = sphi 0, %s98
      %s101 = sphi 0, %s99
      %s102 = sphi 0, %s100
      %s112 = sphi 0, %s114
      %s115 = sphi 0, %s112
      %s116 = sphi 0, %s115
      %s132 = sphi 0, %s116
      %s138 = sphi 0, %s140
      %s141 = sphi 0, %s138
      %s142 = sphi 0, %s141
      %s158 = sphi 0, %s142
      %s166 = sphi 0, %s168
      %s169 = sphi 0, %s166
      %s170 = sphi 0, %s169
      %s186 = sphi 0, %s170
      %s190 = sphi 0, %s190
      %s192 = sphi 0, %s190
      %s193 = sphi 0, %s192
      %s207 = sphi 0, %s193
      %s211 = sphi 0, %s211
      %s213 = sphi 0, %s211
      %s214 = sphi 0, %s213
      %s228 = sphi 0, %s214
      %s232 = sphi 0, %s232
      %s234 = sphi 0, %s232
      %s235 = sphi 0, %s234
      %s249 = sphi 0, %s235
      %s253 = sphi 0, %s253
      %s255 = sphi 0, %s253
      %s256 = sphi 0, %s255
      %s270 = sphi 0, %s256
      %s274 = sphi 0, %s274
      %s276 = sphi 0, %s274
      %s277 = sphi 0, %s276
      %s291 = sphi 0, %s277
      %s295 = sphi 0, %s295
      %s297 = sphi 0, %s295
      %s298 = sphi 0, %s297
      %s312 = sphi 0, %s298
      %s316 = sphi 0, %s316
      %s318 = sphi 0, %s316
      %s319 = sphi 0, %s318
      %s333 = sphi 0, %s319
      %s337 = sphi 0, %s337
      %s339 = sphi 0, %s337
      %s340 = sphi 0, %s339
      %s354 = sphi 0, %s340
      %s358 = sphi 0, %s358
      %s360 = sphi 0, %s358
      %s361 = sphi 0, %s360
      %s375 = sphi 0, %s361
      %s379 = sphi 0, %s379
      %s381 = sphi 0, %s379
      %s382 = sphi 0, %s381
      %s396 = sphi 0, %s382
      %s400 = sphi 0, %s400
      %s402 = sphi 0, %s400
      %s403 = sphi 0, %s402
      %s417 = sphi 0, %s403
      %s421 = sphi 0, %s421
      %s423 = sphi 0, %s421
      %s424 = sphi 0, %s423
      %s438 = sphi 0, %s424
      %s442 = sphi 0, %s442
      %s444 = sphi 0, %s442
      %s445 = sphi 0, %s444
      %s459 = sphi 0, %s445
      %s463 = sphi 0, %s463
      %s465 = sphi 0, %s463
      %s466 = sphi 0, %s465
      %s480 = sphi 0, %s466
      %s484 = sphi 0, %s484
      %s486 = sphi 0, %s484
      %s487 = sphi 0, %s486
      %s501 = sphi 0, %s487
      %s505 = sphi 0, %s505
      %s507 = sphi 0, %s505
      %s508 = sphi 0, %s507
      %s522 = sphi 0, %s508
      %s526 = sphi 0, %s526
      %s528 = sphi 0, %s526
      %s529 = sphi 0, %s528
      %s543 = sphi 0, %s529
      %s547 = sphi 0, %s547
      %s549 = sphi 0, %s547
      %s550 = sphi 0, %s549
      %s564 = sphi 0, %s550
      %s568 = sphi 0, %s568
      %s570 = sphi 0, %s568
      %s571 = sphi 0, %s570
      %s585 = sphi 0, %s571
      %s589 = sphi 0, %s589
      %s591 = sphi 0, %s589
      %s592 = sphi 0, %s591
      %s606 = sphi 0, %s592
      %s610 = sphi 0, %s610
      %s612 = sphi 0, %s610
      %s613 = sphi 0, %s612
      %s627 = sphi 0, %s613
      %s631 = sphi 0, %s631
      %s633 = sphi 0, %s631
      %s634 = sphi 0, %s633
      %s648 = sphi 0, %s634
      %s652 = sphi 0, %s652
      %s654 = sphi 0, %s652
      %s655 = sphi 0, %s654
      %s669 = sphi 0, %s655
      %s673 = sphi 0, %s673
      %s675 = sphi 0, %s673
      %s676 = sphi 0, %s675
      %s690 = sphi 0, %s676
      %s694 = sphi 0, %s694
      %s696 = sphi 0, %s694
      %s697 = sphi 0, %s696
      %s711 = sphi 0, %s697
      %s715 = sphi 0, %s715
      %s717 = sphi 0, %s715
      %s718 = sphi 0, %s717
      %s732 = sphi 0, %s718
      %s736 = sphi 0, %s736
      %s738 = sphi 0, %s736
      %s739 = sphi 0, %s738
      %s753 = sphi 0, %s739
      %s757 = sphi 0, %s757
      %s759 = sphi 0, %s757
      %s760 = sphi 0, %s759
      %s774 = sphi 0, %s760
      %s778 = sphi 0, %s778
      %s780 = sphi 0, %s778
      %s781 = sphi 0, %s780
      %s795 = sphi 0, %s781
      %s799 = sphi 0, %s799
      %s801 = sphi 0, %s799
      %s802 = sphi 0, %s801
      %s816 = sphi 0, %s802
      %s820 = sphi 0, %s820
      %s822 = sphi 0, %s820
      %s823 = sphi 0, %s822
      %s837 = sphi 0, %s823
      %s841 = sphi 0, %s841
      %s843 = sphi 0, %s841
      %s844 = sphi 0, %s843
      %s858 = sphi 0, %s844
      %s864 = sphi 0, %s866
      %s867 = sphi 0, %s864
      %s868 = sphi 0, %s867
      %s884 = sphi 0, %s868
      %s890 = sphi 0, %s892
      %s893 = sphi 0, %s890
      %s894 = sphi 0, %s893
      %s910 = sphi 0, %s894
      %s916 = sphi 0, %s918
      %s919 = sphi 0, %s916
      %s920 = sphi 0, %s919
      %s936 = sphi 0, %s920
      %s942 = sphi 0, %s944
      %s945 = sphi 0, %s942
      %s946 = sphi 0, %s945
      %s962 = sphi 0, %s946
    $region4: #{run.3} parent=1 // loop_header_branch
      %93 = sbr.rel (%p91) target = $region8
    $region5: #{run.3} parent=1 // loop_body
      %s95 = ssub.s32 %s90, 1
      %s96 = ssub.s32 %s90, 2
      %s103 = sadd.s32 1, %s98
      %p104 = scmp.ge.s32.totalorder %s103, 1
      %s105 = scalar_select %p104, 0, %s103
      %s106 = sadd.s32 1, %s97
      %s107 = scalar_select %p104, %s106, %s97
      %p108 = scmp.ge.s32.totalorder %s107, 2
      %s109 = scalar_select %p108, 0, %s107
      %s110 = ssub.s32 %s97, %s109
      %p111 = scmp.eq.s32.totalorder %s110, 0
      %s113 = sadd.s32 %s112, 1
      %s114 = scalar_select %p111, %s112, %s113
      %p117 = pneg %p111
      %p118 = scmp.eq.s32.totalorder %s90, 1
      %p119 = por %p117, %p118
      %p120 = scmp.ne.s32.totalorder %s112, %s115
      %p121 = scmp.eq.s32.totalorder %s90, 0
      %p122 = por %p120, %p121
      %p123 = scmp.ne.s32.totalorder %s112, %s115
      %p124 = scmp.eq.s32.totalorder %s95, 1
      %p125 = por %p123, %p124
      %p126 = scmp.ne.s32.totalorder %s115, %s116
      %p127 = scmp.eq.s32.totalorder %s95, 0
      %p128 = por %p126, %p127
      %p129 = scmp.ne.s32.totalorder %s115, %s116
      %p130 = scmp.eq.s32.totalorder %s96, 1
      %p131 = por %p129, %p130
      %p133 = scmp.ne.s32.totalorder %s116, %s132
      %p134 = scmp.eq.s32.totalorder %s96, 0
      %p135 = por %p133, %p134
      %s136 = ssub.s32 %s97, %s109
      %p137 = scmp.eq.s32.totalorder %s136, 0
      %s139 = sadd.s32 %s138, 1
      %s140 = scalar_select %p137, %s138, %s139
      %p143 = pneg %p137
      %p144 = scmp.eq.s32.totalorder %s90, 1
      %p145 = por %p143, %p144
      %p146 = scmp.ne.s32.totalorder %s138, %s141
      %p147 = scmp.eq.s32.totalorder %s90, 0
      %p148 = por %p146, %p147
      %p149 = scmp.ne.s32.totalorder %s138, %s141
      %p150 = scmp.eq.s32.totalorder %s95, 1
      %p151 = por %p149, %p150
      %p152 = scmp.ne.s32.totalorder %s141, %s142
      %p153 = scmp.eq.s32.totalorder %s95, 0
      %p154 = por %p152, %p153
      %p155 = scmp.ne.s32.totalorder %s141, %s142
      %p156 = scmp.eq.s32.totalorder %s96, 1
      %p157 = por %p155, %p156
      %p159 = scmp.ne.s32.totalorder %s142, %s158
      %p160 = scmp.eq.s32.totalorder %s96, 0
      %p161 = por %p159, %p160
      %s162 = ssub.s32 %s97, %s109
      %s163 = ssub.s32 %s98, %s105
      %s164 = sor.u32 %s162, %s163
      %p165 = scmp.eq.s32.totalorder %s164, 0
      %s167 = sadd.s32 %s166, 1
      %s168 = scalar_select %p165, %s166, %s167
      %p171 = pneg %p165
      %p172 = scmp.eq.s32.totalorder %s90, 1
      %p173 = por %p171, %p172
      %p174 = scmp.ne.s32.totalorder %s166, %s169
      %p175 = scmp.eq.s32.totalorder %s90, 0
      %p176 = por %p174, %p175
      %p177 = scmp.ne.s32.totalorder %s166, %s169
      %p178 = scmp.eq.s32.totalorder %s95, 1
      %p179 = por %p177, %p178
      %p180 = scmp.ne.s32.totalorder %s169, %s170
      %p181 = scmp.eq.s32.totalorder %s95, 0
      %p182 = por %p180, %p181
      %p183 = scmp.ne.s32.totalorder %s169, %s170
      %p184 = scmp.eq.s32.totalorder %s96, 1
      %p185 = por %p183, %p184
      %p187 = scmp.ne.s32.totalorder %s170, %s186
      %p188 = scmp.eq.s32.totalorder %s96, 0
      %p189 = por %p187, %p188
      %s191 = sadd.s32 %s190, 1
      %p194 = scmp.eq.s32.totalorder %s90, 1
      %p195 = scmp.ne.s32.totalorder %s190, %s192
      %p196 = scmp.eq.s32.totalorder %s90, 0
      %p197 = por %p195, %p196
      %p198 = scmp.ne.s32.totalorder %s190, %s192
      %p199 = scmp.eq.s32.totalorder %s95, 1
      %p200 = por %p198, %p199
      %p201 = scmp.ne.s32.totalorder %s192, %s193
      %p202 = scmp.eq.s32.totalorder %s95, 0
      %p203 = por %p201, %p202
      %p204 = scmp.ne.s32.totalorder %s192, %s193
      %p205 = scmp.eq.s32.totalorder %s96, 1
      %p206 = por %p204, %p205
      %p208 = scmp.ne.s32.totalorder %s193, %s207
      %p209 = scmp.eq.s32.totalorder %s96, 0
      %p210 = por %p208, %p209
      %s212 = sadd.s32 %s211, 1
      %p215 = scmp.eq.s32.totalorder %s90, 1
      %p216 = scmp.ne.s32.totalorder %s211, %s213
      %p217 = scmp.eq.s32.totalorder %s90, 0
      %p218 = por %p216, %p217
      %p219 = scmp.ne.s32.totalorder %s211, %s213
      %p220 = scmp.eq.s32.totalorder %s95, 1
      %p221 = por %p219, %p220
      %p222 = scmp.ne.s32.totalorder %s213, %s214
      %p223 = scmp.eq.s32.totalorder %s95, 0
      %p224 = por %p222, %p223
      %p225 = scmp.ne.s32.totalorder %s213, %s214
      %p226 = scmp.eq.s32.totalorder %s96, 1
      %p227 = por %p225, %p226
      %p229 = scmp.ne.s32.totalorder %s214, %s228
      %p230 = scmp.eq.s32.totalorder %s96, 0
      %p231 = por %p229, %p230
      %s233 = sadd.s32 %s232, 1
      %p236 = scmp.eq.s32.totalorder %s90, 1
      %p237 = scmp.ne.s32.totalorder %s232, %s234
      %p238 = scmp.eq.s32.totalorder %s90, 0
      %p239 = por %p237, %p238
      %p240 = scmp.ne.s32.totalorder %s232, %s234
      %p241 = scmp.eq.s32.totalorder %s95, 1
      %p242 = por %p240, %p241
      %p243 = scmp.ne.s32.totalorder %s234, %s235
      %p244 = scmp.eq.s32.totalorder %s95, 0
      %p245 = por %p243, %p244
      %p246 = scmp.ne.s32.totalorder %s234, %s235
      %p247 = scmp.eq.s32.totalorder %s96, 1
      %p248 = por %p246, %p247
      %p250 = scmp.ne.s32.totalorder %s235, %s249
      %p251 = scmp.eq.s32.totalorder %s96, 0
      %p252 = por %p250, %p251
      %s254 = sadd.s32 %s253, 1
      %p257 = scmp.eq.s32.totalorder %s90, 1
      %p258 = scmp.ne.s32.totalorder %s253, %s255
      %p259 = scmp.eq.s32.totalorder %s90, 0
      %p260 = por %p258, %p259
      %p261 = scmp.ne.s32.totalorder %s253, %s255
      %p262 = scmp.eq.s32.totalorder %s95, 1
      %p263 = por %p261, %p262
      %p264 = scmp.ne.s32.totalorder %s255, %s256
      %p265 = scmp.eq.s32.totalorder %s95, 0
      %p266 = por %p264, %p265
      %p267 = scmp.ne.s32.totalorder %s255, %s256
      %p268 = scmp.eq.s32.totalorder %s96, 1
      %p269 = por %p267, %p268
      %p271 = scmp.ne.s32.totalorder %s256, %s270
      %p272 = scmp.eq.s32.totalorder %s96, 0
      %p273 = por %p271, %p272
      %s275 = sadd.s32 %s274, 1
      %p278 = scmp.eq.s32.totalorder %s90, 1
      %p279 = scmp.ne.s32.totalorder %s274, %s276
      %p280 = scmp.eq.s32.totalorder %s90, 0
      %p281 = por %p279, %p280
      %p282 = scmp.ne.s32.totalorder %s274, %s276
      %p283 = scmp.eq.s32.totalorder %s95, 1
      %p284 = por %p282, %p283
      %p285 = scmp.ne.s32.totalorder %s276, %s277
      %p286 = scmp.eq.s32.totalorder %s95, 0
      %p287 = por %p285, %p286
      %p288 = scmp.ne.s32.totalorder %s276, %s277
      %p289 = scmp.eq.s32.totalorder %s96, 1
      %p290 = por %p288, %p289
      %p292 = scmp.ne.s32.totalorder %s277, %s291
      %p293 = scmp.eq.s32.totalorder %s96, 0
      %p294 = por %p292, %p293
      %s296 = sadd.s32 %s295, 1
      %p299 = scmp.eq.s32.totalorder %s90, 1
      %p300 = scmp.ne.s32.totalorder %s295, %s297
      %p301 = scmp.eq.s32.totalorder %s90, 0
      %p302 = por %p300, %p301
      %p303 = scmp.ne.s32.totalorder %s295, %s297
      %p304 = scmp.eq.s32.totalorder %s95, 1
      %p305 = por %p303, %p304
      %p306 = scmp.ne.s32.totalorder %s297, %s298
      %p307 = scmp.eq.s32.totalorder %s95, 0
      %p308 = por %p306, %p307
      %p309 = scmp.ne.s32.totalorder %s297, %s298
      %p310 = scmp.eq.s32.totalorder %s96, 1
      %p311 = por %p309, %p310
      %p313 = scmp.ne.s32.totalorder %s298, %s312
      %p314 = scmp.eq.s32.totalorder %s96, 0
      %p315 = por %p313, %p314
      %s317 = sadd.s32 %s316, 1
      %p320 = scmp.eq.s32.totalorder %s90, 1
      %p321 = scmp.ne.s32.totalorder %s316, %s318
      %p322 = scmp.eq.s32.totalorder %s90, 0
      %p323 = por %p321, %p322
      %p324 = scmp.ne.s32.totalorder %s316, %s318
      %p325 = scmp.eq.s32.totalorder %s95, 1
      %p326 = por %p324, %p325
      %p327 = scmp.ne.s32.totalorder %s318, %s319
      %p328 = scmp.eq.s32.totalorder %s95, 0
      %p329 = por %p327, %p328
      %p330 = scmp.ne.s32.totalorder %s318, %s319
      %p331 = scmp.eq.s32.totalorder %s96, 1
      %p332 = por %p330, %p331
      %p334 = scmp.ne.s32.totalorder %s319, %s333
      %p335 = scmp.eq.s32.totalorder %s96, 0
      %p336 = por %p334, %p335
      %s338 = sadd.s32 %s337, 1
      %p341 = scmp.eq.s32.totalorder %s90, 1
      %p342 = scmp.ne.s32.totalorder %s337, %s339
      %p343 = scmp.eq.s32.totalorder %s90, 0
      %p344 = por %p342, %p343
      %p345 = scmp.ne.s32.totalorder %s337, %s339
      %p346 = scmp.eq.s32.totalorder %s95, 1
      %p347 = por %p345, %p346
      %p348 = scmp.ne.s32.totalorder %s339, %s340
      %p349 = scmp.eq.s32.totalorder %s95, 0
      %p350 = por %p348, %p349
      %p351 = scmp.ne.s32.totalorder %s339, %s340
      %p352 = scmp.eq.s32.totalorder %s96, 1
      %p353 = por %p351, %p352
      %p355 = scmp.ne.s32.totalorder %s340, %s354
      %p356 = scmp.eq.s32.totalorder %s96, 0
      %p357 = por %p355, %p356
      %s359 = sadd.s32 %s358, 1
      %p362 = scmp.eq.s32.totalorder %s90, 1
      %p363 = scmp.ne.s32.totalorder %s358, %s360
      %p364 = scmp.eq.s32.totalorder %s90, 0
      %p365 = por %p363, %p364
      %p366 = scmp.ne.s32.totalorder %s358, %s360
      %p367 = scmp.eq.s32.totalorder %s95, 1
      %p368 = por %p366, %p367
      %p369 = scmp.ne.s32.totalorder %s360, %s361
      %p370 = scmp.eq.s32.totalorder %s95, 0
      %p371 = por %p369, %p370
      %p372 = scmp.ne.s32.totalorder %s360, %s361
      %p373 = scmp.eq.s32.totalorder %s96, 1
      %p374 = por %p372, %p373
      %p376 = scmp.ne.s32.totalorder %s361, %s375
      %p377 = scmp.eq.s32.totalorder %s96, 0
      %p378 = por %p376, %p377
      %s380 = sadd.s32 %s379, 1
      %p383 = scmp.eq.s32.totalorder %s90, 1
      %p384 = scmp.ne.s32.totalorder %s379, %s381
      %p385 = scmp.eq.s32.totalorder %s90, 0
      %p386 = por %p384, %p385
      %p387 = scmp.ne.s32.totalorder %s379, %s381
      %p388 = scmp.eq.s32.totalorder %s95, 1
      %p389 = por %p387, %p388
      %p390 = scmp.ne.s32.totalorder %s381, %s382
      %p391 = scmp.eq.s32.totalorder %s95, 0
      %p392 = por %p390, %p391
      %p393 = scmp.ne.s32.totalorder %s381, %s382
      %p394 = scmp.eq.s32.totalorder %s96, 1
      %p395 = por %p393, %p394
      %p397 = scmp.ne.s32.totalorder %s382, %s396
      %p398 = scmp.eq.s32.totalorder %s96, 0
      %p399 = por %p397, %p398
      %s401 = sadd.s32 %s400, 1
      %p404 = scmp.eq.s32.totalorder %s90, 1
      %p405 = scmp.ne.s32.totalorder %s400, %s402
      %p406 = scmp.eq.s32.totalorder %s90, 0
      %p407 = por %p405, %p406
      %p408 = scmp.ne.s32.totalorder %s400, %s402
      %p409 = scmp.eq.s32.totalorder %s95, 1
      %p410 = por %p408, %p409
      %p411 = scmp.ne.s32.totalorder %s402, %s403
      %p412 = scmp.eq.s32.totalorder %s95, 0
      %p413 = por %p411, %p412
      %p414 = scmp.ne.s32.totalorder %s402, %s403
      %p415 = scmp.eq.s32.totalorder %s96, 1
      %p416 = por %p414, %p415
      %p418 = scmp.ne.s32.totalorder %s403, %s417
      %p419 = scmp.eq.s32.totalorder %s96, 0
      %p420 = por %p418, %p419
      %s422 = sadd.s32 %s421, 1
      %p425 = scmp.eq.s32.totalorder %s90, 1
      %p426 = scmp.ne.s32.totalorder %s421, %s423
      %p427 = scmp.eq.s32.totalorder %s90, 0
      %p428 = por %p426, %p427
      %p429 = scmp.ne.s32.totalorder %s421, %s423
      %p430 = scmp.eq.s32.totalorder %s95, 1
      %p431 = por %p429, %p430
      %p432 = scmp.ne.s32.totalorder %s423, %s424
      %p433 = scmp.eq.s32.totalorder %s95, 0
      %p434 = por %p432, %p433
      %p435 = scmp.ne.s32.totalorder %s423, %s424
      %p436 = scmp.eq.s32.totalorder %s96, 1
      %p437 = por %p435, %p436
      %p439 = scmp.ne.s32.totalorder %s424, %s438
      %p440 = scmp.eq.s32.totalorder %s96, 0
      %p441 = por %p439, %p440
      %s443 = sadd.s32 %s442, 1
      %p446 = scmp.eq.s32.totalorder %s90, 1
      %p447 = scmp.ne.s32.totalorder %s442, %s444
      %p448 = scmp.eq.s32.totalorder %s90, 0
      %p449 = por %p447, %p448
      %p450 = scmp.ne.s32.totalorder %s442, %s444
      %p451 = scmp.eq.s32.totalorder %s95, 1
      %p452 = por %p450, %p451
      %p453 = scmp.ne.s32.totalorder %s444, %s445
      %p454 = scmp.eq.s32.totalorder %s95, 0
      %p455 = por %p453, %p454
      %p456 = scmp.ne.s32.totalorder %s444, %s445
      %p457 = scmp.eq.s32.totalorder %s96, 1
      %p458 = por %p456, %p457
      %p460 = scmp.ne.s32.totalorder %s445, %s459
      %p461 = scmp.eq.s32.totalorder %s96, 0
      %p462 = por %p460, %p461
      %s464 = sadd.s32 %s463, 1
      %p467 = scmp.eq.s32.totalorder %s90, 1
      %p468 = scmp.ne.s32.totalorder %s463, %s465
      %p469 = scmp.eq.s32.totalorder %s90, 0
      %p470 = por %p468, %p469
      %p471 = scmp.ne.s32.totalorder %s463, %s465
      %p472 = scmp.eq.s32.totalorder %s95, 1
      %p473 = por %p471, %p472
      %p474 = scmp.ne.s32.totalorder %s465, %s466
      %p475 = scmp.eq.s32.totalorder %s95, 0
      %p476 = por %p474, %p475
      %p477 = scmp.ne.s32.totalorder %s465, %s466
      %p478 = scmp.eq.s32.totalorder %s96, 1
      %p479 = por %p477, %p478
      %p481 = scmp.ne.s32.totalorder %s466, %s480
      %p482 = scmp.eq.s32.totalorder %s96, 0
      %p483 = por %p481, %p482
      %s485 = sadd.s32 %s484, 1
      %p488 = scmp.eq.s32.totalorder %s90, 1
      %p489 = scmp.ne.s32.totalorder %s484, %s486
      %p490 = scmp.eq.s32.totalorder %s90, 0
      %p491 = por %p489, %p490
      %p492 = scmp.ne.s32.totalorder %s484, %s486
      %p493 = scmp.eq.s32.totalorder %s95, 1
      %p494 = por %p492, %p493
      %p495 = scmp.ne.s32.totalorder %s486, %s487
      %p496 = scmp.eq.s32.totalorder %s95, 0
      %p497 = por %p495, %p496
      %p498 = scmp.ne.s32.totalorder %s486, %s487
      %p499 = scmp.eq.s32.totalorder %s96, 1
      %p500 = por %p498, %p499
      %p502 = scmp.ne.s32.totalorder %s487, %s501
      %p503 = scmp.eq.s32.totalorder %s96, 0
      %p504 = por %p502, %p503
      %s506 = sadd.s32 %s505, 1
      %p509 = scmp.eq.s32.totalorder %s90, 1
      %p510 = scmp.ne.s32.totalorder %s505, %s507
      %p511 = scmp.eq.s32.totalorder %s90, 0
      %p512 = por %p510, %p511
      %p513 = scmp.ne.s32.totalorder %s505, %s507
      %p514 = scmp.eq.s32.totalorder %s95, 1
      %p515 = por %p513, %p514
      %p516 = scmp.ne.s32.totalorder %s507, %s508
      %p517 = scmp.eq.s32.totalorder %s95, 0
      %p518 = por %p516, %p517
      %p519 = scmp.ne.s32.totalorder %s507, %s508
      %p520 = scmp.eq.s32.totalorder %s96, 1
      %p521 = por %p519, %p520
      %p523 = scmp.ne.s32.totalorder %s508, %s522
      %p524 = scmp.eq.s32.totalorder %s96, 0
      %p525 = por %p523, %p524
      %s527 = sadd.s32 %s526, 1
      %p530 = scmp.eq.s32.totalorder %s90, 1
      %p531 = scmp.ne.s32.totalorder %s526, %s528
      %p532 = scmp.eq.s32.totalorder %s90, 0
      %p533 = por %p531, %p532
      %p534 = scmp.ne.s32.totalorder %s526, %s528
      %p535 = scmp.eq.s32.totalorder %s95, 1
      %p536 = por %p534, %p535
      %p537 = scmp.ne.s32.totalorder %s528, %s529
      %p538 = scmp.eq.s32.totalorder %s95, 0
      %p539 = por %p537, %p538
      %p540 = scmp.ne.s32.totalorder %s528, %s529
      %p541 = scmp.eq.s32.totalorder %s96, 1
      %p542 = por %p540, %p541
      %p544 = scmp.ne.s32.totalorder %s529, %s543
      %p545 = scmp.eq.s32.totalorder %s96, 0
      %p546 = por %p544, %p545
      %s548 = sadd.s32 %s547, 1
      %p551 = scmp.eq.s32.totalorder %s90, 1
      %p552 = scmp.ne.s32.totalorder %s547, %s549
      %p553 = scmp.eq.s32.totalorder %s90, 0
      %p554 = por %p552, %p553
      %p555 = scmp.ne.s32.totalorder %s547, %s549
      %p556 = scmp.eq.s32.totalorder %s95, 1
      %p557 = por %p555, %p556
      %p558 = scmp.ne.s32.totalorder %s549, %s550
      %p559 = scmp.eq.s32.totalorder %s95, 0
      %p560 = por %p558, %p559
      %p561 = scmp.ne.s32.totalorder %s549, %s550
      %p562 = scmp.eq.s32.totalorder %s96, 1
      %p563 = por %p561, %p562
      %p565 = scmp.ne.s32.totalorder %s550, %s564
      %p566 = scmp.eq.s32.totalorder %s96, 0
      %p567 = por %p565, %p566
      %s569 = sadd.s32 %s568, 1
      %p572 = scmp.eq.s32.totalorder %s90, 1
      %p573 = scmp.ne.s32.totalorder %s568, %s570
      %p574 = scmp.eq.s32.totalorder %s90, 0
      %p575 = por %p573, %p574
      %p576 = scmp.ne.s32.totalorder %s568, %s570
      %p577 = scmp.eq.s32.totalorder %s95, 1
      %p578 = por %p576, %p577
      %p579 = scmp.ne.s32.totalorder %s570, %s571
      %p580 = scmp.eq.s32.totalorder %s95, 0
      %p581 = por %p579, %p580
      %p582 = scmp.ne.s32.totalorder %s570, %s571
      %p583 = scmp.eq.s32.totalorder %s96, 1
      %p584 = por %p582, %p583
      %p586 = scmp.ne.s32.totalorder %s571, %s585
      %p587 = scmp.eq.s32.totalorder %s96, 0
      %p588 = por %p586, %p587
      %s590 = sadd.s32 %s589, 1
      %p593 = scmp.eq.s32.totalorder %s90, 1
      %p594 = scmp.ne.s32.totalorder %s589, %s591
      %p595 = scmp.eq.s32.totalorder %s90, 0
      %p596 = por %p594, %p595
      %p597 = scmp.ne.s32.totalorder %s589, %s591
      %p598 = scmp.eq.s32.totalorder %s95, 1
      %p599 = por %p597, %p598
      %p600 = scmp.ne.s32.totalorder %s591, %s592
      %p601 = scmp.eq.s32.totalorder %s95, 0
      %p602 = por %p600, %p601
      %p603 = scmp.ne.s32.totalorder %s591, %s592
      %p604 = scmp.eq.s32.totalorder %s96, 1
      %p605 = por %p603, %p604
      %p607 = scmp.ne.s32.totalorder %s592, %s606
      %p608 = scmp.eq.s32.totalorder %s96, 0
      %p609 = por %p607, %p608
      %s611 = sadd.s32 %s610, 1
      %p614 = scmp.eq.s32.totalorder %s90, 1
      %p615 = scmp.ne.s32.totalorder %s610, %s612
      %p616 = scmp.eq.s32.totalorder %s90, 0
      %p617 = por %p615, %p616
      %p618 = scmp.ne.s32.totalorder %s610, %s612
      %p619 = scmp.eq.s32.totalorder %s95, 1
      %p620 = por %p618, %p619
      %p621 = scmp.ne.s32.totalorder %s612, %s613
      %p622 = scmp.eq.s32.totalorder %s95, 0
      %p623 = por %p621, %p622
      %p624 = scmp.ne.s32.totalorder %s612, %s613
      %p625 = scmp.eq.s32.totalorder %s96, 1
      %p626 = por %p624, %p625
      %p628 = scmp.ne.s32.totalorder %s613, %s627
      %p629 = scmp.eq.s32.totalorder %s96, 0
      %p630 = por %p628, %p629
      %s632 = sadd.s32 %s631, 1
      %p635 = scmp.eq.s32.totalorder %s90, 1
      %p636 = scmp.ne.s32.totalorder %s631, %s633
      %p637 = scmp.eq.s32.totalorder %s90, 0
      %p638 = por %p636, %p637
      %p639 = scmp.ne.s32.totalorder %s631, %s633
      %p640 = scmp.eq.s32.totalorder %s95, 1
      %p641 = por %p639, %p640
      %p642 = scmp.ne.s32.totalorder %s633, %s634
      %p643 = scmp.eq.s32.totalorder %s95, 0
      %p644 = por %p642, %p643
      %p645 = scmp.ne.s32.totalorder %s633, %s634
      %p646 = scmp.eq.s32.totalorder %s96, 1
      %p647 = por %p645, %p646
      %p649 = scmp.ne.s32.totalorder %s634, %s648
      %p650 = scmp.eq.s32.totalorder %s96, 0
      %p651 = por %p649, %p650
      %s653 = sadd.s32 %s652, 1
      %p656 = scmp.eq.s32.totalorder %s90, 1
      %p657 = scmp.ne.s32.totalorder %s652, %s654
      %p658 = scmp.eq.s32.totalorder %s90, 0
      %p659 = por %p657, %p658
      %p660 = scmp.ne.s32.totalorder %s652, %s654
      %p661 = scmp.eq.s32.totalorder %s95, 1
      %p662 = por %p660, %p661
      %p663 = scmp.ne.s32.totalorder %s654, %s655
      %p664 = scmp.eq.s32.totalorder %s95, 0
      %p665 = por %p663, %p664
      %p666 = scmp.ne.s32.totalorder %s654, %s655
      %p667 = scmp.eq.s32.totalorder %s96, 1
      %p668 = por %p666, %p667
      %p670 = scmp.ne.s32.totalorder %s655, %s669
      %p671 = scmp.eq.s32.totalorder %s96, 0
      %p672 = por %p670, %p671
      %s674 = sadd.s32 %s673, 1
      %p677 = scmp.eq.s32.totalorder %s90, 1
      %p678 = scmp.ne.s32.totalorder %s673, %s675
      %p679 = scmp.eq.s32.totalorder %s90, 0
      %p680 = por %p678, %p679
      %p681 = scmp.ne.s32.totalorder %s673, %s675
      %p682 = scmp.eq.s32.totalorder %s95, 1
      %p683 = por %p681, %p682
      %p684 = scmp.ne.s32.totalorder %s675, %s676
      %p685 = scmp.eq.s32.totalorder %s95, 0
      %p686 = por %p684, %p685
      %p687 = scmp.ne.s32.totalorder %s675, %s676
      %p688 = scmp.eq.s32.totalorder %s96, 1
      %p689 = por %p687, %p688
      %p691 = scmp.ne.s32.totalorder %s676, %s690
      %p692 = scmp.eq.s32.totalorder %s96, 0
      %p693 = por %p691, %p692
      %s695 = sadd.s32 %s694, 1
      %p698 = scmp.eq.s32.totalorder %s90, 1
      %p699 = scmp.ne.s32.totalorder %s694, %s696
      %p700 = scmp.eq.s32.totalorder %s90, 0
      %p701 = por %p699, %p700
      %p702 = scmp.ne.s32.totalorder %s694, %s696
      %p703 = scmp.eq.s32.totalorder %s95, 1
      %p704 = por %p702, %p703
      %p705 = scmp.ne.s32.totalorder %s696, %s697
      %p706 = scmp.eq.s32.totalorder %s95, 0
      %p707 = por %p705, %p706
      %p708 = scmp.ne.s32.totalorder %s696, %s697
      %p709 = scmp.eq.s32.totalorder %s96, 1
      %p710 = por %p708, %p709
      %p712 = scmp.ne.s32.totalorder %s697, %s711
      %p713 = scmp.eq.s32.totalorder %s96, 0
      %p714 = por %p712, %p713
      %s716 = sadd.s32 %s715, 1
      %p719 = scmp.eq.s32.totalorder %s90, 1
      %p720 = scmp.ne.s32.totalorder %s715, %s717
      %p721 = scmp.eq.s32.totalorder %s90, 0
      %p722 = por %p720, %p721
      %p723 = scmp.ne.s32.totalorder %s715, %s717
      %p724 = scmp.eq.s32.totalorder %s95, 1
      %p725 = por %p723, %p724
      %p726 = scmp.ne.s32.totalorder %s717, %s718
      %p727 = scmp.eq.s32.totalorder %s95, 0
      %p728 = por %p726, %p727
      %p729 = scmp.ne.s32.totalorder %s717, %s718
      %p730 = scmp.eq.s32.totalorder %s96, 1
      %p731 = por %p729, %p730
      %p733 = scmp.ne.s32.totalorder %s718, %s732
      %p734 = scmp.eq.s32.totalorder %s96, 0
      %p735 = por %p733, %p734
      %s737 = sadd.s32 %s736, 1
      %p740 = scmp.eq.s32.totalorder %s90, 1
      %p741 = scmp.ne.s32.totalorder %s736, %s738
      %p742 = scmp.eq.s32.totalorder %s90, 0
      %p743 = por %p741, %p742
      %p744 = scmp.ne.s32.totalorder %s736, %s738
      %p745 = scmp.eq.s32.totalorder %s95, 1
      %p746 = por %p744, %p745
      %p747 = scmp.ne.s32.totalorder %s738, %s739
      %p748 = scmp.eq.s32.totalorder %s95, 0
      %p749 = por %p747, %p748
      %p750 = scmp.ne.s32.totalorder %s738, %s739
      %p751 = scmp.eq.s32.totalorder %s96, 1
      %p752 = por %p750, %p751
      %p754 = scmp.ne.s32.totalorder %s739, %s753
      %p755 = scmp.eq.s32.totalorder %s96, 0
      %p756 = por %p754, %p755
      %s758 = sadd.s32 %s757, 1
      %p761 = scmp.eq.s32.totalorder %s90, 1
      %p762 = scmp.ne.s32.totalorder %s757, %s759
      %p763 = scmp.eq.s32.totalorder %s90, 0
      %p764 = por %p762, %p763
      %p765 = scmp.ne.s32.totalorder %s757, %s759
      %p766 = scmp.eq.s32.totalorder %s95, 1
      %p767 = por %p765, %p766
      %p768 = scmp.ne.s32.totalorder %s759, %s760
      %p769 = scmp.eq.s32.totalorder %s95, 0
      %p770 = por %p768, %p769
      %p771 = scmp.ne.s32.totalorder %s759, %s760
      %p772 = scmp.eq.s32.totalorder %s96, 1
      %p773 = por %p771, %p772
      %p775 = scmp.ne.s32.totalorder %s760, %s774
      %p776 = scmp.eq.s32.totalorder %s96, 0
      %p777 = por %p775, %p776
      %s779 = sadd.s32 %s778, 1
      %p782 = scmp.eq.s32.totalorder %s90, 1
      %p783 = scmp.ne.s32.totalorder %s778, %s780
      %p784 = scmp.eq.s32.totalorder %s90, 0
      %p785 = por %p783, %p784
      %p786 = scmp.ne.s32.totalorder %s778, %s780
      %p787 = scmp.eq.s32.totalorder %s95, 1
      %p788 = por %p786, %p787
      %p789 = scmp.ne.s32.totalorder %s780, %s781
      %p790 = scmp.eq.s32.totalorder %s95, 0
      %p791 = por %p789, %p790
      %p792 = scmp.ne.s32.totalorder %s780, %s781
      %p793 = scmp.eq.s32.totalorder %s96, 1
      %p794 = por %p792, %p793
      %p796 = scmp.ne.s32.totalorder %s781, %s795
      %p797 = scmp.eq.s32.totalorder %s96, 0
      %p798 = por %p796, %p797
      %s800 = sadd.s32 %s799, 1
      %p803 = scmp.eq.s32.totalorder %s90, 1
      %p804 = scmp.ne.s32.totalorder %s799, %s801
      %p805 = scmp.eq.s32.totalorder %s90, 0
      %p806 = por %p804, %p805
      %p807 = scmp.ne.s32.totalorder %s799, %s801
      %p808 = scmp.eq.s32.totalorder %s95, 1
      %p809 = por %p807, %p808
      %p810 = scmp.ne.s32.totalorder %s801, %s802
      %p811 = scmp.eq.s32.totalorder %s95, 0
      %p812 = por %p810, %p811
      %p813 = scmp.ne.s32.totalorder %s801, %s802
      %p814 = scmp.eq.s32.totalorder %s96, 1
      %p815 = por %p813, %p814
      %p817 = scmp.ne.s32.totalorder %s802, %s816
      %p818 = scmp.eq.s32.totalorder %s96, 0
      %p819 = por %p817, %p818
      %s821 = sadd.s32 %s820, 1
      %p824 = scmp.eq.s32.totalorder %s90, 1
      %p825 = scmp.ne.s32.totalorder %s820, %s822
      %p826 = scmp.eq.s32.totalorder %s90, 0
      %p827 = por %p825, %p826
      %p828 = scmp.ne.s32.totalorder %s820, %s822
      %p829 = scmp.eq.s32.totalorder %s95, 1
      %p830 = por %p828, %p829
      %p831 = scmp.ne.s32.totalorder %s822, %s823
      %p832 = scmp.eq.s32.totalorder %s95, 0
      %p833 = por %p831, %p832
      %p834 = scmp.ne.s32.totalorder %s822, %s823
      %p835 = scmp.eq.s32.totalorder %s96, 1
      %p836 = por %p834, %p835
      %p838 = scmp.ne.s32.totalorder %s823, %s837
      %p839 = scmp.eq.s32.totalorder %s96, 0
      %p840 = por %p838, %p839
      %s842 = sadd.s32 %s841, 1
      %p845 = scmp.eq.s32.totalorder %s90, 1
      %p846 = scmp.ne.s32.totalorder %s841, %s843
      %p847 = scmp.eq.s32.totalorder %s90, 0
      %p848 = por %p846, %p847
      %p849 = scmp.ne.s32.totalorder %s841, %s843
      %p850 = scmp.eq.s32.totalorder %s95, 1
      %p851 = por %p849, %p850
      %p852 = scmp.ne.s32.totalorder %s843, %s844
      %p853 = scmp.eq.s32.totalorder %s95, 0
      %p854 = por %p852, %p853
      %p855 = scmp.ne.s32.totalorder %s843, %s844
      %p856 = scmp.eq.s32.totalorder %s96, 1
      %p857 = por %p855, %p856
      %p859 = scmp.ne.s32.totalorder %s844, %s858
      %p860 = scmp.eq.s32.totalorder %s96, 0
      %p861 = por %p859, %p860
      %s862 = ssub.s32 %s97, %s109
      %p863 = scmp.eq.s32.totalorder %s862, 0
      %s865 = sadd.s32 %s864, 1
      %s866 = scalar_select %p863, %s864, %s865
      %p869 = pneg %p863
      %p870 = scmp.eq.s32.totalorder %s90, 1
      %p871 = por %p869, %p870
      %p872 = scmp.ne.s32.totalorder %s864, %s867
      %p873 = scmp.eq.s32.totalorder %s90, 0
      %p874 = por %p872, %p873
      %p875 = scmp.ne.s32.totalorder %s864, %s867
      %p876 = scmp.eq.s32.totalorder %s95, 1
      %p877 = por %p875, %p876
      %p878 = scmp.ne.s32.totalorder %s867, %s868
      %p879 = scmp.eq.s32.totalorder %s95, 0
      %p880 = por %p878, %p879
      %p881 = scmp.ne.s32.totalorder %s867, %s868
      %p882 = scmp.eq.s32.totalorder %s96, 1
      %p883 = por %p881, %p882
      %p885 = scmp.ne.s32.totalorder %s868, %s884
      %p886 = scmp.eq.s32.totalorder %s96, 0
      %p887 = por %p885, %p886
      %s888 = ssub.s32 %s97, %s109
      %p889 = scmp.eq.s32.totalorder %s888, 0
      %s891 = sadd.s32 %s890, 1
      %s892 = scalar_select %p889, %s890, %s891
      %p895 = pneg %p889
      %p896 = scmp.eq.s32.totalorder %s90, 1
      %p897 = por %p895, %p896
      %p898 = scmp.ne.s32.totalorder %s890, %s893
      %p899 = scmp.eq.s32.totalorder %s90, 0
      %p900 = por %p898, %p899
      %p901 = scmp.ne.s32.totalorder %s890, %s893
      %p902 = scmp.eq.s32.totalorder %s95, 1
      %p903 = por %p901, %p902
      %p904 = scmp.ne.s32.totalorder %s893, %s894
      %p905 = scmp.eq.s32.totalorder %s95, 0
      %p906 = por %p904, %p905
      %p907 = scmp.ne.s32.totalorder %s893, %s894
      %p908 = scmp.eq.s32.totalorder %s96, 1
      %p909 = por %p907, %p908
      %p911 = scmp.ne.s32.totalorder %s894, %s910
      %p912 = scmp.eq.s32.totalorder %s96, 0
      %p913 = por %p911, %p912
      %s914 = ssub.s32 %s97, %s109
      %p915 = scmp.eq.s32.totalorder %s914, 0
      %s917 = sadd.s32 %s916, 1
      %s918 = scalar_select %p915, %s916, %s917
      %p921 = pneg %p915
      %p922 = scmp.eq.s32.totalorder %s90, 1
      %p923 = por %p921, %p922
      %p924 = scmp.ne.s32.totalorder %s916, %s919
      %p925 = scmp.eq.s32.totalorder %s90, 0
      %p926 = por %p924, %p925
      %p927 = scmp.ne.s32.totalorder %s916, %s919
      %p928 = scmp.eq.s32.totalorder %s95, 1
      %p929 = por %p927, %p928
      %p930 = scmp.ne.s32.totalorder %s919, %s920
      %p931 = scmp.eq.s32.totalorder %s95, 0
      %p932 = por %p930, %p931
      %p933 = scmp.ne.s32.totalorder %s919, %s920
      %p934 = scmp.eq.s32.totalorder %s96, 1
      %p935 = por %p933, %p934
      %p937 = scmp.ne.s32.totalorder %s920, %s936
      %p938 = scmp.eq.s32.totalorder %s96, 0
      %p939 = por %p937, %p938
      %s940 = ssub.s32 %s97, %s109
      %p941 = scmp.eq.s32.totalorder %s940, 0
      %s943 = sadd.s32 %s942, 1
      %s944 = scalar_select %p941, %s942, %s943
      %p947 = pneg %p941
      %p948 = scmp.eq.s32.totalorder %s90, 1
      %p949 = por %p947, %p948
      %p950 = scmp.ne.s32.totalorder %s942, %s945
      %p951 = scmp.eq.s32.totalorder %s90, 0
      %p952 = por %p950, %p951
      %p953 = scmp.ne.s32.totalorder %s942, %s945
      %p954 = scmp.eq.s32.totalorder %s95, 1
      %p955 = por %p953, %p954
      %p956 = scmp.ne.s32.totalorder %s945, %s946
      %p957 = scmp.eq.s32.totalorder %s95, 0
      %p958 = por %p956, %p957
      %p959 = scmp.ne.s32.totalorder %s945, %s946
      %p960 = scmp.eq.s32.totalorder %s96, 1
      %p961 = por %p959, %p960
      %p963 = scmp.ne.s32.totalorder %s946, %s962
      %p964 = scmp.eq.s32.totalorder %s96, 0
      %p965 = por %p963, %p964
      %p966 = scmp.le.s32.totalorder 1, %s90
      %p967 = scmp.lt.s32.totalorder %s90, 3
      %p968 = pnand %p966, %p967
      %p969 = pneg %p968
      // Predicated region
      $region9: #{run.3} parent=5 // pred_check
        _
      $region10: #{run.3} parent=5 // pred_check_branch
        %971 = sbr.rel (%p968) target = $region12
      $region11: #{run.3} parent=5 // pred_region
        %s972 = ssub.s32 %s90, 1
        // Predicated region
        $region13: #{run.3} parent=11 // pred_check
          %p973 = pneg %p203
        $region14: #{run.3} parent=11 // pred_check_branch
          %975 = sbr.rel (%p973) target = $region16
        $region15: #{run.3} parent=11 // pred_region
          _
        $region16: #{run.3} parent=11 // pred_fallthru
          _
        // Predicated region
        $region17: #{run.3} parent=11 // pred_check
          %p976 = pneg %p224
        $region18: #{run.3} parent=11 // pred_check_branch
          %978 = sbr.rel (%p976) target = $region20
        $region19: #{run.3} parent=11 // pred_region
          _
        $region20: #{run.3} parent=11 // pred_fallthru
          _
        // Predicated region
        $region21: #{run.3} parent=11 // pred_check
          %p979 = pneg %p245
        $region22: #{run.3} parent=11 // pred_check_branch
          %981 = sbr.rel (%p979) target = $region24
        $region23: #{run.3} parent=11 // pred_region
          _
        $region24: #{run.3} parent=11 // pred_fallthru
          _
        // Predicated region
        $region25: #{run.3} parent=11 // pred_check
          %p982 = pneg %p266
        $region26: #{run.3} parent=11 // pred_check_branch
          %984 = sbr.rel (%p982) target = $region28
        $region27: #{run.3} parent=11 // pred_region
          _
        $region28: #{run.3} parent=11 // pred_fallthru
          _
        // Predicated region
        $region29: #{run.3} parent=11 // pred_check
          %p985 = pneg %p287
        $region30: #{run.3} parent=11 // pred_check_branch
          %987 = sbr.rel (%p985) target = $region32
        $region31: #{run.3} parent=11 // pred_region
          _
        $region32: #{run.3} parent=11 // pred_fallthru
          _
        // Predicated region
        $region33: #{run.3} parent=11 // pred_check
          %p988 = pneg %p308
        $region34: #{run.3} parent=11 // pred_check_branch
          %990 = sbr.rel (%p988) target = $region36
        $region35: #{run.3} parent=11 // pred_region
          _
        $region36: #{run.3} parent=11 // pred_fallthru
          _
        // Predicated region
        $region37: #{run.3} parent=11 // pred_check
          %p991 = pneg %p329
        $region38: #{run.3} parent=11 // pred_check_branch
          %993 = sbr.rel (%p991) target = $region40
        $region39: #{run.3} parent=11 // pred_region
          _
        $region40: #{run.3} parent=11 // pred_fallthru
          _
        // Predicated region
        $region41: #{run.3} parent=11 // pred_check
          %p994 = pneg %p350
        $region42: #{run.3} parent=11 // pred_check_branch
          %996 = sbr.rel (%p994) target = $region44
        $region43: #{run.3} parent=11 // pred_region
          _
        $region44: #{run.3} parent=11 // pred_fallthru
          _
        // Predicated region
        $region45: #{run.3} parent=11 // pred_check
          %p997 = pneg %p371
        $region46: #{run.3} parent=11 // pred_check_branch
          %999 = sbr.rel (%p997) target = $region48
        $region47: #{run.3} parent=11 // pred_region
          _
        $region48: #{run.3} parent=11 // pred_fallthru
          _
        // Predicated region
        $region49: #{run.3} parent=11 // pred_check
          %p1000 = pneg %p392
        $region50: #{run.3} parent=11 // pred_check_branch
          %1002 = sbr.rel (%p1000) target = $region52
        $region51: #{run.3} parent=11 // pred_region
          _
        $region52: #{run.3} parent=11 // pred_fallthru
          _
        // Predicated region
        $region53: #{run.3} parent=11 // pred_check
          %p1003 = pneg %p413
        $region54: #{run.3} parent=11 // pred_check_branch
          %1005 = sbr.rel (%p1003) target = $region56
        $region55: #{run.3} parent=11 // pred_region
          _
        $region56: #{run.3} parent=11 // pred_fallthru
          _
        // Predicated region
        $region57: #{run.3} parent=11 // pred_check
          %p1006 = pneg %p434
        $region58: #{run.3} parent=11 // pred_check_branch
          %1008 = sbr.rel (%p1006) target = $region60
        $region59: #{run.3} parent=11 // pred_region
          _
        $region60: #{run.3} parent=11 // pred_fallthru
          _
        // Predicated region
        $region61: #{run.3} parent=11 // pred_check
          %p1009 = pneg %p455
        $region62: #{run.3} parent=11 // pred_check_branch
          %1011 = sbr.rel (%p1009) target = $region64
        $region63: #{run.3} parent=11 // pred_region
          _
        $region64: #{run.3} parent=11 // pred_fallthru
          _
        // Predicated region
        $region65: #{run.3} parent=11 // pred_check
          %p1012 = pneg %p476
        $region66: #{run.3} parent=11 // pred_check_branch
          %1014 = sbr.rel (%p1012) target = $region68
        $region67: #{run.3} parent=11 // pred_region
          _
        $region68: #{run.3} parent=11 // pred_fallthru
          _
        // Predicated region
        $region69: #{run.3} parent=11 // pred_check
          %p1015 = pneg %p497
        $region70: #{run.3} parent=11 // pred_check_branch
          %1017 = sbr.rel (%p1015) target = $region72
        $region71: #{run.3} parent=11 // pred_region
          _
        $region72: #{run.3} parent=11 // pred_fallthru
          _
        // Predicated region
        $region73: #{run.3} parent=11 // pred_check
          %p1018 = pneg %p518
        $region74: #{run.3} parent=11 // pred_check_branch
          %1020 = sbr.rel (%p1018) target = $region76
        $region75: #{run.3} parent=11 // pred_region
          _
        $region76: #{run.3} parent=11 // pred_fallthru
          _
        // Predicated region
        $region77: #{run.3} parent=11 // pred_check
          %p1021 = pneg %p539
        $region78: #{run.3} parent=11 // pred_check_branch
          %1023 = sbr.rel (%p1021) target = $region80
        $region79: #{run.3} parent=11 // pred_region
          _
        $region80: #{run.3} parent=11 // pred_fallthru
          _
        // Predicated region
        $region81: #{run.3} parent=11 // pred_check
          %p1024 = pneg %p560
        $region82: #{run.3} parent=11 // pred_check_branch
          %1026 = sbr.rel (%p1024) target = $region84
        $region83: #{run.3} parent=11 // pred_region
          _
        $region84: #{run.3} parent=11 // pred_fallthru
          _
        // Predicated region
        $region85: #{run.3} parent=11 // pred_check
          %p1027 = pneg %p581
        $region86: #{run.3} parent=11 // pred_check_branch
          %1029 = sbr.rel (%p1027) target = $region88
        $region87: #{run.3} parent=11 // pred_region
          _
        $region88: #{run.3} parent=11 // pred_fallthru
          _
        // Predicated region
        $region89: #{run.3} parent=11 // pred_check
          %p1030 = pneg %p602
        $region90: #{run.3} parent=11 // pred_check_branch
          %1032 = sbr.rel (%p1030) target = $region92
        $region91: #{run.3} parent=11 // pred_region
          _
        $region92: #{run.3} parent=11 // pred_fallthru
          _
        // Predicated region
        $region93: #{run.3} parent=11 // pred_check
          %p1033 = pneg %p623
        $region94: #{run.3} parent=11 // pred_check_branch
          %1035 = sbr.rel (%p1033) target = $region96
        $region95: #{run.3} parent=11 // pred_region
          _
        $region96: #{run.3} parent=11 // pred_fallthru
          _
        // Predicated region
        $region97: #{run.3} parent=11 // pred_check
          %p1036 = pneg %p644
        $region98: #{run.3} parent=11 // pred_check_branch
          %1038 = sbr.rel (%p1036) target = $region100
        $region99: #{run.3} parent=11 // pred_region
          _
        $region100: #{run.3} parent=11 // pred_fallthru
          _
        // Predicated region
        $region101: #{run.3} parent=11 // pred_check
          %p1039 = pneg %p665
        $region102: #{run.3} parent=11 // pred_check_branch
          %1041 = sbr.rel (%p1039) target = $region104
        $region103: #{run.3} parent=11 // pred_region
          _
        $region104: #{run.3} parent=11 // pred_fallthru
          _
        // Predicated region
        $region105: #{run.3} parent=11 // pred_check
          %p1042 = pneg %p686
        $region106: #{run.3} parent=11 // pred_check_branch
          %1044 = sbr.rel (%p1042) target = $region108
        $region107: #{run.3} parent=11 // pred_region
          _
        $region108: #{run.3} parent=11 // pred_fallthru
          _
        // Predicated region
        $region109: #{run.3} parent=11 // pred_check
          %p1045 = pneg %p707
        $region110: #{run.3} parent=11 // pred_check_branch
          %1047 = sbr.rel (%p1045) target = $region112
        $region111: #{run.3} parent=11 // pred_region
          _
        $region112: #{run.3} parent=11 // pred_fallthru
          _
        // Predicated region
        $region113: #{run.3} parent=11 // pred_check
          %p1048 = pneg %p728
        $region114: #{run.3} parent=11 // pred_check_branch
          %1050 = sbr.rel (%p1048) target = $region116
        $region115: #{run.3} parent=11 // pred_region
          _
        $region116: #{run.3} parent=11 // pred_fallthru
          _
        // Predicated region
        $region117: #{run.3} parent=11 // pred_check
          %p1051 = pneg %p749
        $region118: #{run.3} parent=11 // pred_check_branch
          %1053 = sbr.rel (%p1051) target = $region120
        $region119: #{run.3} parent=11 // pred_region
          _
        $region120: #{run.3} parent=11 // pred_fallthru
          _
        // Predicated region
        $region121: #{run.3} parent=11 // pred_check
          %p1054 = pneg %p770
        $region122: #{run.3} parent=11 // pred_check_branch
          %1056 = sbr.rel (%p1054) target = $region124
        $region123: #{run.3} parent=11 // pred_region
          _
        $region124: #{run.3} parent=11 // pred_fallthru
          _
        // Predicated region
        $region125: #{run.3} parent=11 // pred_check
          %p1057 = pneg %p791
        $region126: #{run.3} parent=11 // pred_check_branch
          %1059 = sbr.rel (%p1057) target = $region128
        $region127: #{run.3} parent=11 // pred_region
          _
        $region128: #{run.3} parent=11 // pred_fallthru
          _
        // Predicated region
        $region129: #{run.3} parent=11 // pred_check
          %p1060 = pneg %p812
        $region130: #{run.3} parent=11 // pred_check_branch
          %1062 = sbr.rel (%p1060) target = $region132
        $region131: #{run.3} parent=11 // pred_region
          _
        $region132: #{run.3} parent=11 // pred_fallthru
          _
        // Predicated region
        $region133: #{run.3} parent=11 // pred_check
          %p1063 = pneg %p833
        $region134: #{run.3} parent=11 // pred_check_branch
          %1065 = sbr.rel (%p1063) target = $region136
        $region135: #{run.3} parent=11 // pred_region
          _
        $region136: #{run.3} parent=11 // pred_fallthru
          _
        // Predicated region
        $region137: #{run.3} parent=11 // pred_check
          %p1066 = pneg %p854
        $region138: #{run.3} parent=11 // pred_check_branch
          %1068 = sbr.rel (%p1066) target = $region140
        $region139: #{run.3} parent=11 // pred_region
          _
        $region140: #{run.3} parent=11 // pred_fallthru
          _
      $region12: #{run.3} parent=5 // pred_fallthru
        _
      %p1069 = scmp.lt.s32.totalorder %s90, 2
      // Predicated region
      $region141: #{run.3} parent=5 // pred_check
        %p1070 = pneg %p1069
      $region142: #{run.3} parent=5 // pred_check_branch
        %1072 = sbr.rel (%p1070) target = $region144
      $region143: #{run.3} parent=5 // pred_region
        // Predicated region
        $region145: #{run.3} parent=143 // pred_check
          %p1073 = pneg %p122
        $region146: #{run.3} parent=143 // pred_check_branch
          %1075 = sbr.rel (%p1073) target = $region148
        $region147: #{run.3} parent=143 // pred_region
          %p1076 = scmp.lt.s32.totalorder %s97, 1
          %s1077 = scalar_select %p1076, %s97, 1
          %s1078 = smul.addr %s1077, 4
          %s1079 = scalar_lea.vmem %s1, %s1078
        $region148: #{run.3} parent=143 // pred_fallthru
          _
        // Predicated region
        $region149: #{run.3} parent=143 // pred_check
          %p1080 = pneg %p148
        $region150: #{run.3} parent=143 // pred_check_branch
          %1082 = sbr.rel (%p1080) target = $region152
        $region151: #{run.3} parent=143 // pred_region
          %p1083 = scmp.lt.s32.totalorder %s97, 1
          %s1084 = scalar_select %p1083, %s97, 1
          %s1085 = smul.addr %s1084, 8
          %s1086 = scalar_lea.vmem %s3, %s1085
        $region152: #{run.3} parent=143 // pred_fallthru
          _
        // Predicated region
        $region153: #{run.3} parent=143 // pred_check
          %p1087 = pneg %p176
        $region154: #{run.3} parent=143 // pred_check_branch
          %1089 = sbr.rel (%p1087) target = $region156
        $region155: #{run.3} parent=143 // pred_region
          %s1090 = smul.u32 2, %s98
          %p1091 = scmp.lt.s32.totalorder %s97, 1
          %s1092 = scalar_select %p1091, %s97, 1
          %p1093 = scmp.lt.s32.totalorder %s1090, 1
          %s1094 = scalar_select %p1093, %s1090, 1
          %s1095 = smul.addr %s1092, 2
          %s1096 = sadd.s32 %s1094, %s1095
          %s1097 = smul.addr %s1096, 4
          %s1098 = scalar_lea.vmem %s5, %s1097
          %s1099 = smul.u32 2, %s98
        $region156: #{run.3} parent=143 // pred_fallthru
          _
      $region144: #{run.3} parent=5 // pred_fallthru
        _
      %p1100 = scmp.le.s32.totalorder 1, %s90
      %p1101 = scmp.lt.s32.totalorder %s90, 3
      %p1102 = pnand %p1100, %p1101
      %p1103 = pneg %p1102
      // Predicated region
      $region157: #{run.3} parent=5 // pred_check
        _
      $region158: #{run.3} parent=5 // pred_check_branch
        %1105 = sbr.rel (%p1102) target = $region160
      $region159: #{run.3} parent=5 // pred_region
        %s1106 = ssub.s32 %s90, 1
        %p1107 = scmp.lt.s32.totalorder %s99, 1
        %s1108 = scalar_select %p1107, %s99, 1
        %s1109 = smul.addr %s1108, 4
        %s1110 = scalar_lea.vmem %s1, %s1109
        %p1111 = pneg %p128
        %p1112 = pneg %p125
        %p1113 = scmp.lt.s32.totalorder %s99, 1
        %s1114 = scalar_select %p1113, %s99, 1
        %s1115 = smul.addr %s1114, 8
        %s1116 = scalar_lea.vmem %s3, %s1115
        %p1117 = pneg %p154
        %p1118 = pneg %p151
        %s1119 = smul.u32 2, %s100
        %p1120 = scmp.lt.s32.totalorder %s99, 1
        %s1121 = scalar_select %p1120, %s99, 1
        %p1122 = scmp.lt.s32.totalorder %s1119, 1
        %s1123 = scalar_select %p1122, %s1119, 1
        %s1124 = smul.addr %s1121, 2
        %s1125 = sadd.s32 %s1123, %s1124
        %s1126 = smul.addr %s1125, 4
        %s1127 = scalar_lea.vmem %s5, %s1126
        %p1128 = pneg %p182
        %p1129 = pneg %p179
        %p1130 = pneg %p203
        %p1131 = pneg %p200
        %p1132 = pneg %p224
        %p1133 = pneg %p221
        %p1134 = pneg %p245
        %p1135 = pneg %p242
        %p1136 = pneg %p266
        %p1137 = pneg %p263
        %p1138 = pneg %p287
        %p1139 = pneg %p284
        %p1140 = pneg %p308
        %p1141 = pneg %p305
        %p1142 = pneg %p329
        %p1143 = pneg %p326
        %p1144 = pneg %p350
        %p1145 = pneg %p347
        %p1146 = pneg %p371
        %p1147 = pneg %p368
        %p1148 = pneg %p392
        %p1149 = pneg %p389
        %p1150 = pneg %p413
        %p1151 = pneg %p410
        %p1152 = pneg %p434
        %p1153 = pneg %p431
        %p1154 = pneg %p455
        %p1155 = pneg %p452
        %p1156 = pneg %p476
        %p1157 = pneg %p473
        %p1158 = pneg %p497
        %p1159 = pneg %p494
        %p1160 = pneg %p518
        %p1161 = pneg %p515
        %p1162 = pneg %p539
        %p1163 = pneg %p536
        %p1164 = pneg %p560
        %p1165 = pneg %p557
        %p1166 = pneg %p581
        %p1167 = pneg %p578
        %p1168 = pneg %p602
        %p1169 = pneg %p599
        %p1170 = pneg %p623
        %p1171 = pneg %p620
        %p1172 = pneg %p644
        %p1173 = pneg %p641
        %p1174 = pneg %p665
        %p1175 = pneg %p662
        %p1176 = pneg %p686
        %p1177 = pneg %p683
        %p1178 = pneg %p707
        %p1179 = pneg %p704
        %p1180 = pneg %p728
        %p1181 = pneg %p725
        %p1182 = pneg %p749
        %p1183 = pneg %p746
        %p1184 = pneg %p770
        %p1185 = pneg %p767
        %p1186 = pneg %p791
        %p1187 = pneg %p788
        %p1188 = pneg %p812
        %p1189 = pneg %p809
        %p1190 = pneg %p833
        %p1191 = pneg %p830
        %p1192 = pneg %p854
        %p1193 = pneg %p851
        %p1194 = pneg %p880
        %p1195 = pneg %p877
        %p1196 = scmp.lt.s32.totalorder %s99, 1
        %s1197 = scalar_select %p1196, %s99, 1
        %s1198 = smul.addr %s1197, 4
        %s1199 = scalar_lea.vmem %s71, %s1198
        %p1200 = pneg %p906
        %p1201 = pneg %p903
        %s1202 = sand.u32 %s893, 1
        %s1203 = scalar_lea.sflag [#allocation8], %s1202
        %s1204 = sand.u32 %s893, 1
        %s1205 = smul.addr %s1204, 8
        %s1206 = scalar_lea.vmem [#allocation7], %s1205
        %p1207 = pneg %p932
        %p1208 = pneg %p929
        %s1209 = sand.u32 %s919, 1
        %s1210 = scalar_lea.sflag [#allocation10], %s1209
        %s1211 = sand.u32 %s919, 1
        %s1212 = smul.addr %s1211, 8
        %s1213 = scalar_lea.vmem [#allocation9], %s1212
        %p1214 = pneg %p958
        %p1215 = pneg %p955
        %p1216 = scmp.lt.s32.totalorder %s99, 1
        %s1217 = scalar_select %p1216, %s99, 1
        %s1218 = smul.addr %s1217, 8
        %s1219 = scalar_lea.vmem %s77, %s1218
        %p1220 = scmp.lt.s32.totalorder %s99, 1
        %s1221 = scalar_select %p1220, %s99, 1
        %s1222 = smul.addr %s1221, 4
        %s1223 = scalar_lea.vmem %s1, %s1222
        %p1224 = scmp.lt.s32.totalorder %s99, 1
        %s1225 = scalar_select %p1224, %s99, 1
        %s1226 = smul.addr %s1225, 8
        %s1227 = scalar_lea.vmem %s3, %s1226
        %s1228 = smul.u32 2, %s100
        %p1229 = scmp.lt.s32.totalorder %s99, 1
        %s1230 = scalar_select %p1229, %s99, 1
        %p1231 = scmp.lt.s32.totalorder %s1228, 1
        %s1232 = scalar_select %p1231, %s1228, 1
        %s1233 = smul.addr %s1230, 2
        %s1234 = sadd.s32 %s1232, %s1233
        %s1235 = smul.addr %s1234, 4
        %s1236 = scalar_lea.vmem %s5, %s1235
        %s1237 = smul.u32 2, %s100
        %p1238 = scmp.lt.s32.totalorder %s99, 1
        %s1239 = scalar_select %p1238, %s99, 1
        %s1240 = smul.addr %s1239, 4
        %s1241 = scalar_lea.vmem %s71, %s1240
        %p1242 = scmp.lt.s32.totalorder %s99, 1
        %s1243 = scalar_select %p1242, %s99, 1
        %s1244 = smul.addr %s1243, 8
        %s1245 = scalar_lea.vmem %s77, %s1244
        %p1247 = scmp.eq.s32.totalorder %s100, 0
        // Predicated region
        $region161: #{run.3} parent=159 // pred_check
          %p1248 = pneg %p1247
        $region162: #{run.3} parent=159 // pred_check_branch
          %1250 = sbr.rel (%p1248) target = $region164
        $region163: #{run.3} parent=159 // pred_region
          %v1251 = vld [vmem:[%s1223] sm:$0xf]
          %v1252 = vunpack.c.l.bf16 %v1251
          %v1253 = vld [vmem:[%s1227] sm:$0xff]
          %v1254 = vld [vmem:[%s7] sm:$0x3]
          %v1255 = vunpack.c.l.bf16 %v1254
          %v1256 = vld [vmem:[%s9] sm:$0x1]
          %1258 = vset.pattern.permute.xlu0 0
          %1259 = vperm.xlu0 %1258, %v1253
          %v1260 = vpop.permute.xlu0 %1259
          %v1262 = vlaneseq
          %v1263 = vshrl.u32 %v1262, 7
          %v1264 = vsub.s32 0, %v1263
          %v1265 = vrot.slane %v1255, %v1264
          %v1266 = vmul.f32 %v1260, %v1265
          %v1268 = vlaneseq
          %v1269 = vshrl.u32 %v1268, 7
          %v1270 = vsub.s32 0, %v1269
          %v1271 = vrot.slane %v1256, %v1270
          %v1273 = vadd.f32 %v1271, %v1266
          %1274 = vset.pattern.permute.xlu0 1
          %1275 = vperm.xlu0 %1274, %v1253
          %v1276 = vpop.permute.xlu0 %1275
          %v1278 = vlaneseq
          %v1279 = vshrl.u32 %v1278, 7
          %v1280 = vsub.s32 1, %v1279
          %v1281 = vrot.slane %v1255, %v1280
          %v1282 = vmul.f32 %v1276, %v1281
          %v1283 = vadd.f32 %v1273, %v1282
          %1284 = vset.pattern.permute.xlu0 2
          %1285 = vperm.xlu0 %1284, %v1253
          %v1286 = vpop.permute.xlu0 %1285
          %v1288 = vlaneseq
          %v1289 = vshrl.u32 %v1288, 7
          %v1290 = vsub.s32 2, %v1289
          %v1291 = vrot.slane %v1255, %v1290
          %v1292 = vmul.f32 %v1286, %v1291
          %v1293 = vadd.f32 %v1283, %v1292
          %1294 = vset.pattern.permute.xlu0 3
          %1295 = vperm.xlu0 %1294, %v1253
          %v1296 = vpop.permute.xlu0 %1295
          %v1298 = vlaneseq
          %v1299 = vshrl.u32 %v1298, 7
          %v1300 = vsub.s32 3, %v1299
          %v1301 = vrot.slane %v1255, %v1300
          %v1302 = vmul.f32 %v1296, %v1301
          %v1303 = vadd.f32 %v1293, %v1302
          %v1304 = vmax.f32 %v1303, 0.0
          %v1305 = vld [vmem:[%s11] sm:$0xf]
          %v1306 = vld [vmem:[%s11 + $0x4] sm:$0xf]
          %v1307 = vld [vmem:[%s11 + $0x8] sm:$0xf]
          %v1308 = vld [vmem:[%s11 + $0xc] sm:$0xf]
          %v1309 = vld [vmem:[%s11 + $0x10] sm:$0xf]
          %v1310 = vld [vmem:[%s11 + $0x14] sm:$0xf]
          %v1311 = vld [vmem:[%s11 + $0x18] sm:$0xf]
          %v1312 = vld [vmem:[%s11 + $0x1c] sm:$0xf]
          %v1313 = vpack.c.bf16 %v1304, %v1304
          %v1314 = vld [vmem:[%s13] sm:$0x1]
          %v1316 = vlaneseq
          %v1317 = vshrl.u32 %v1316, 7
          %v1318 = vsub.s32 0, %v1317
          %v1319 = vrot.slane %v1314, %v1318
          %v1329 = vunpack.c.l.b16 %v1305
          %v1330 = vunpack.c.l.b16 %v1306
          %v1331 = vunpack.c.l.b16 %v1307
          %v1332 = vunpack.c.l.b16 %v1308
          %v1333 = vunpack.c.l.b16 %v1309
          %v1334 = vunpack.c.l.b16 %v1310
          %v1335 = vunpack.c.l.b16 %v1311
          %v1336 = vunpack.c.l.b16 %v1312
          %v1337 = vpack.c.b16 %v1330, %v1329
          %v1338 = vpack.c.b16 %v1332, %v1331
          %v1339 = vpack.c.b16 %v1334, %v1333
          %v1340 = vpack.c.b16 %v1336, %v1335
          %vm1345 = vcmask 523264
          %v1347 = vsel %vm1345, %v1313, 0
          %1349 = vmatprep.subr.bf16.mxu0 0
          %1350 = vmatpush1.bf16.msra.mxu0 %v1337
          %1351 = vmatprep.subr.bf16.mxu0 0
          %1352 = vmatpush1.bf16.msra.mxu0 %v1338
          %1353 = vmatprep.subr.bf16.mxu0 0
          %1354 = vmatpush1.bf16.msra.mxu0 %v1339
          %1355 = vmatprep.subr.bf16.mxu0 0
          %1356 = vmatpush1.bf16.msra.mxu0 %v1340
          %1357 = vmatprep.subr.bf16.mxu0 0
          %1358 = vmatpush1.bf16.msra.mxu0 0
          %1359 = vmatprep.subr.bf16.mxu0 0
          %1360 = vmatpush1.bf16.msra.mxu0 0
          %1361 = vmatprep.subr.bf16.mxu0 0
          %1362 = vmatpush1.bf16.msra.mxu0 0
          %1363 = vmatprep.subr.bf16.mxu0 0
          %1364 = vmatpush1.bf16.msra.mxu0 0
          %1365 = vmatprep.subr.bf16.mxu0 0
          %1366 = vmatpush1.bf16.msra.mxu0 0
          %1367 = vmatprep.subr.bf16.mxu0 0
          %1368 = vmatpush1.bf16.msra.mxu0 0
          %1369 = vmatprep.subr.bf16.mxu0 0
          %1370 = vmatpush1.bf16.msra.mxu0 0
          %1371 = vmatprep.subr.bf16.mxu0 0
          %1372 = vmatpush1.bf16.msra.mxu0 0
          %1373 = vmatprep.subr.bf16.mxu0 0
          %1374 = vmatpush1.bf16.msra.mxu0 0
          %1375 = vmatprep.subr.bf16.mxu0 0
          %1376 = vmatpush1.bf16.msra.mxu0 0
          %1377 = vmatprep.subr.bf16.mxu0 0
          %1378 = vmatpush1.bf16.msra.mxu0 0
          %1379 = vmatprep.subr.bf16.mxu0 0
          %1380 = vmatpush1.bf16.msra.mxu0 0
          %1381 = vmatprep.mubr.bf16.mxu0 0
          %1382 = vmatmul.mubr.bf16.gmra.mrb[0].mxu0 %v1347
          %v1383 = vpop.f32.mrb[0].mxu0
          %v1384 = vadd.f32 %v1319, %v1383
          %v1385 = vpop.f32.mrb[0].mxu0
          %v1386 = vpop.f32.mrb[0].mxu0
          %v1387 = vpop.f32.mrb[0].mxu0
          %1388 = vdwg.mxu0
          %vm1389 = vcmask 261120
          %1390 = vst.msk [vmem:[%s1206] sm:$0xff] %vm1389, %v1384
          %v1391 = vadd.f32 %v1252, %v1384
          %v1392 = vld [vmem:[%s15] sm:$0xf]
          %v1393 = vld [vmem:[%s15 + $0x4] sm:$0xf]
          %v1394 = vld [vmem:[%s15 + $0x8] sm:$0xf]
          %v1395 = vld [vmem:[%s15 + $0xc] sm:$0xf]
          %v1396 = vpack.c.bf16 %v1391, %v1391
          %v1397 = vld [vmem:[%s17] sm:$0x1]
          %v1399 = vlaneseq
          %v1400 = vshrl.u32 %v1399, 7
          %v1401 = vsub.s32 0, %v1400
          %v1402 = vrot.slane %v1397, %v1401
          %v1408 = vunpack.c.l.b16 %v1392
          %v1409 = vunpack.c.l.b16 %v1393
          %v1410 = vunpack.c.l.b16 %v1394
          %v1411 = vunpack.c.l.b16 %v1395
          %v1412 = vpack.c.b16 %v1409, %v1408
          %v1413 = vpack.c.b16 %v1411, %v1410
          %v1417 = vsel %vm1389, %v1396, 0
          %1419 = vmatprep.subr.bf16.mxu0 0
          %1420 = vmatpush1.bf16.msra.mxu0 %v1412
          %1421 = vmatprep.subr.bf16.mxu0 0
          %1422 = vmatpush1.bf16.msra.mxu0 %v1413
          %1423 = vmatprep.subr.bf16.mxu0 0
          %1424 = vmatpush1.bf16.msra.mxu0 0
          %1425 = vmatprep.subr.bf16.mxu0 0
          %1426 = vmatpush1.bf16.msra.mxu0 0
          %1427 = vmatprep.subr.bf16.mxu0 0
          %1428 = vmatpush1.bf16.msra.mxu0 0
          %1429 = vmatprep.subr.bf16.mxu0 0
          %1430 = vmatpush1.bf16.msra.mxu0 0
          %1431 = vmatprep.subr.bf16.mxu0 0
          %1432 = vmatpush1.bf16.msra.mxu0 0
          %1433 = vmatprep.subr.bf16.mxu0 0
          %1434 = vmatpush1.bf16.msra.mxu0 0
          %1435 = vmatprep.subr.bf16.mxu0 0
          %1436 = vmatpush1.bf16.msra.mxu0 0
          %1437 = vmatprep.subr.bf16.mxu0 0
          %1438 = vmatpush1.bf16.msra.mxu0 0
          %1439 = vmatprep.subr.bf16.mxu0 0
          %1440 = vmatpush1.bf16.msra.mxu0 0
          %1441 = vmatprep.subr.bf16.mxu0 0
          %1442 = vmatpush1.bf16.msra.mxu0 0
          %1443 = vmatprep.subr.bf16.mxu0 0
          %1444 = vmatpush1.bf16.msra.mxu0 0
          %1445 = vmatprep.subr.bf16.mxu0 0
          %1446 = vmatpush1.bf16.msra.mxu0 0
          %1447 = vmatprep.subr.bf16.mxu0 0
          %1448 = vmatpush1.bf16.msra.mxu0 0
          %1449 = vmatprep.subr.bf16.mxu0 0
          %1450 = vmatpush1.bf16.msra.mxu0 0
          %1451 = vmatprep.mubr.bf16.mxu0 0
          %1452 = vmatmul.mubr.bf16.gmra.mrb[0].mxu0 %v1417
          %v1453 = vpop.f32.mrb[0].mxu0
          %v1454 = vadd.f32 %v1402, %v1453
          %v1455 = vpop.f32.mrb[0].mxu0
          %v1456 = vpop.f32.mrb[0].mxu0
          %v1457 = vpop.f32.mrb[0].mxu0
          %1458 = vdwg.mxu0
          %v1459 = vpack.c.bf16 %v1454, %v1454
          %v1460 = vld [vmem:[%s19] sm:$0xf]
          %v1461 = vld [vmem:[%s19 + $0x4] sm:$0xf]
          %v1462 = vld [vmem:[%s19 + $0x8] sm:$0xf]
          %v1463 = vld [vmem:[%s19 + $0xc] sm:$0xf]
          %v1464 = vld [vmem:[%s21] sm:$0x1]
          %v1466 = vlaneseq
          %v1467 = vshrl.u32 %v1466, 7
          %v1468 = vsub.s32 0, %v1467
          %v1469 = vrot.slane %v1464, %v1468
          %v1475 = vunpack.c.l.b16 %v1460
          %v1476 = vunpack.c.l.b16 %v1461
          %v1477 = vunpack.c.l.b16 %v1462
          %v1478 = vunpack.c.l.b16 %v1463
          %v1479 = vpack.c.b16 %v1476, %v1475
          %v1480 = vpack.c.b16 %v1478, %v1477
          %v1484 = vsel %vm1389, %v1251, 0
          %1486 = vmatprep.subr.bf16.mxu0 0
          %1487 = vmatpush1.bf16.msra.mxu0 %v1479
          %1488 = vmatprep.subr.bf16.mxu0 0
          %1489 = vmatpush1.bf16.msra.mxu0 %v1480
          %1490 = vmatprep.subr.bf16.mxu0 0
          %1491 = vmatpush1.bf16.msra.mxu0 0
          %1492 = vmatprep.subr.bf16.mxu0 0
          %1493 = vmatpush1.bf16.msra.mxu0 0
          %1494 = vmatprep.subr.bf16.mxu0 0
          %1495 = vmatpush1.bf16.msra.mxu0 0
          %1496 = vmatprep.subr.bf16.mxu0 0
          %1497 = vmatpush1.bf16.msra.mxu0 0
          %1498 = vmatprep.subr.bf16.mxu0 0
          %1499 = vmatpush1.bf16.msra.mxu0 0
          %1500 = vmatprep.subr.bf16.mxu0 0
          %1501 = vmatpush1.bf16.msra.mxu0 0
          %1502 = vmatprep.subr.bf16.mxu0 0
          %1503 = vmatpush1.bf16.msra.mxu0 0
          %1504 = vmatprep.subr.bf16.mxu0 0
          %1505 = vmatpush1.bf16.msra.mxu0 0
          %1506 = vmatprep.subr.bf16.mxu0 0
          %1507 = vmatpush1.bf16.msra.mxu0 0
          %1508 = vmatprep.subr.bf16.mxu0 0
          %1509 = vmatpush1.bf16.msra.mxu0 0
          %1510 = vmatprep.subr.bf16.mxu0 0
          %1511 = vmatpush1.bf16.msra.mxu0 0
          %1512 = vmatprep.subr.bf16.mxu0 0
          %1513 = vmatpush1.bf16.msra.mxu0 0
          %1514 = vmatprep.subr.bf16.mxu0 0
          %1515 = vmatpush1.bf16.msra.mxu0 0
          %1516 = vmatprep.subr.bf16.mxu0 0
          %1517 = vmatpush1.bf16.msra.mxu0 0
          %1518 = vmatprep.mubr.bf16.mxu0 0
          %1519 = vmatmul.mubr.bf16.gmra.mrb[0].mxu0 %v1484
          %v1520 = vpop.f32.mrb[0].mxu0
          %v1521 = vadd.f32 %v1469, %v1520
          %v1522 = vpop.f32.mrb[0].mxu0
          %v1523 = vpop.f32.mrb[0].mxu0
          %v1524 = vpop.f32.mrb[0].mxu0
          %1525 = vdwg.mxu0
          %v1526 = vpack.c.bf16 %v1521, %v1521
          %1528 = vrot.lane.b32.xlu0 %v1459, 96
          %v1529 = vpop.permute.xlu0 %1528
          %vm1530 = vcmask 64512
          %v1532 = vsel %vm1530, %v1459, 0
          %v1535 = vsel %vm1530, %v1529, 0
          %1537 = vmatprep.subr.bf16.mxu0 0
          %1538 = vmatpush1.bf16.xpose.msra.mxu0 %v1535
          %1539 = vmatprep.subr.bf16.mxu0 0
          %1540 = vmatpush1.bf16.xpose.msra.mxu0 0
          %1541 = vmatprep.subr.bf16.mxu0 0
          %1542 = vmatpush1.bf16.xpose.msra.mxu0 0
          %1543 = vmatprep.subr.bf16.mxu0 0
          %1544 = vmatpush1.bf16.xpose.msra.mxu0 0
          %1545 = vmatprep.subr.bf16.mxu0 0
          %1546 = vmatpush1.bf16.xpose.msra.mxu0 0
          %1547 = vmatprep.subr.bf16.mxu0 0
          %1548 = vmatpush1.bf16.xpose.msra.mxu0 0
          %1549 = vmatprep.subr.bf16.mxu0 0
          %1550 = vmatpush1.bf16.xpose.msra.mxu0 0
          %1551 = vmatprep.subr.bf16.mxu0 0
          %1552 = vmatpush1.bf16.xpose.msra.mxu0 0
          %1553 = vmatprep.subr.bf16.mxu0 0
          %1554 = vmatpush1.bf16.xpose.msra.mxu0 0
          %1555 = vmatprep.subr.bf16.mxu0 0
          %1556 = vmatpush1.bf16.xpose.msra.mxu0 0
          %1557 = vmatprep.subr.bf16.mxu0 0
          %1558 = vmatpush1.bf16.xpose.msra.mxu0 0
          %1559 = vmatprep.subr.bf16.mxu0 0
          %1560 = vmatpush1.bf16.xpose.msra.mxu0 0
          %1561 = vmatprep.subr.bf16.mxu0 0
          %1562 = vmatpush1.bf16.xpose.msra.mxu0 0
          %1563 = vmatprep.subr.bf16.mxu0 0
          %1564 = vmatpush1.bf16.xpose.msra.mxu0 0
          %1565 = vmatprep.subr.bf16.mxu0 0
          %1566 = vmatpush1.bf16.xpose.msra.mxu0 0
          %1567 = vmatprep.subr.bf16.mxu0 0
          %1568 = vmatpush1.bf16.xpose.msra.mxu0 0
          %1569 = vmatprep.mubr.bf16.mxu0 0
          %1570 = vmatmul.mubr.bf16.gmra.mrb[0].mxu0 %v1532
          %v1571 = vpop.f32.mrb[0].mxu0
          %v1572 = vadd.f32 0.0, %v1571
          %v1573 = vpop.f32.mrb[0].mxu0
          %v1574 = vpop.f32.mrb[0].mxu0
          %v1575 = vpop.f32.mrb[0].mxu0
          %1576 = vdwg.mxu0
          %v1577 = vmul.f32 %v1572, 0.35355338
          %v1578 = vsel %vm1530, %v1577, -inf
          %1579 = vmax.xlane.f32.xlu0 %v1578
          %v1580 = vpop.xlane.xlu0 %1579
          %v1581 = vsub.f32 %v1577, %v1580
          %v1582 = vmul.f32 %v1581, 1.442695
          %v1583 = vpow.pop %v1582
          %v1584 = vsel %vm1530, %v1583, 0.0
          %1585 = vadd.xlane.f32.xlu0 %v1584
          %v1586 = vpop.xlane.xlu0 %1585
          %v1587 = vrcp.pop %v1586
          %v1588 = vmul.f32 %v1583, %v1587
          %v1589 = vpack.c.bf16 %v1588, %v1588
          %v1591 = vsel %vm1530, %v1589, 0
          %vm1593 = vcmask 1043456
          %v1595 = vsel %vm1593, %v1526, 0
          %1597 = vmatprep.subr.bf16.mxu0 0
          %1598 = vmatpush1.bf16.msra.mxu0 %v1595
          %1599 = vmatprep.subr.bf16.mxu0 0
          %1600 = vmatpush1.bf16.msra.mxu0 0
          %1601 = vmatprep.subr.bf16.mxu0 0
          %1602 = vmatpush1.bf16.msra.mxu0 0
          %1603 = vmatprep.subr.bf16.mxu0 0
          %1604 = vmatpush1.bf16.msra.mxu0 0
          %1605 = vmatprep.subr.bf16.mxu0 0
          %1606 = vmatpush1.bf16.msra.mxu0 0
          %1607 = vmatprep.subr.bf16.mxu0 0
          %1608 = vmatpush1.bf16.msra.mxu0 0
          %1609 = vmatprep.subr.bf16.mxu0 0
          %1610 = vmatpush1.bf16.msra.mxu0 0
          %1611 = vmatprep.subr.bf16.mxu0 0
          %1612 = vmatpush1.bf16.msra.mxu0 0
          %1613 = vmatprep.subr.bf16.mxu0 0
          %1614 = vmatpush1.bf16.msra.mxu0 0
          %1615 = vmatprep.subr.bf16.mxu0 0
          %1616 = vmatpush1.bf16.msra.mxu0 0
          %1617 = vmatprep.subr.bf16.mxu0 0
          %1618 = vmatpush1.bf16.msra.mxu0 0
          %1619 = vmatprep.subr.bf16.mxu0 0
          %1620 = vmatpush1.bf16.msra.mxu0 0
          %1621 = vmatprep.subr.bf16.mxu0 0
          %1622 = vmatpush1.bf16.msra.mxu0 0
          %1623 = vmatprep.subr.bf16.mxu0 0
          %1624 = vmatpush1.bf16.msra.mxu0 0
          %1625 = vmatprep.subr.bf16.mxu0 0
          %1626 = vmatpush1.bf16.msra.mxu0 0
          %1627 = vmatprep.subr.bf16.mxu0 0
          %1628 = vmatpush1.bf16.msra.mxu0 0
          %1629 = vmatprep.mubr.bf16.mxu0 0
          %1630 = vmatmul.mubr.bf16.gmra.mrb[0].mxu0 %v1591
          %v1631 = vpop.f32.mrb[0].mxu0
          %v1632 = vadd.f32 0.0, %v1631
          %v1633 = vpop.f32.mrb[0].mxu0
          %v1634 = vpop.f32.mrb[0].mxu0
          %v1635 = vpop.f32.mrb[0].mxu0
          %1636 = vdwg.mxu0
          %1637 = vrot.lane.b32.xlu0 %v1459, 120
          %v1638 = vpop.permute.xlu0 %1637
          %1639 = vrot.lane.b32.xlu0 %v1459, 88
          %v1640 = vpop.permute.xlu0 %1639
          %v1642 = vsel %vm1530, %v1638, 0
          %v1645 = vsel %vm1530, %v1640, 0
          %1647 = vmatprep.subr.bf16.mxu0 0
          %1648 = vmatpush1.bf16.xpose.msra.mxu0 %v1645
          %1649 = vmatprep.subr.bf16.mxu0 0
          %1650 = vmatpush1.bf16.xpose.msra.mxu0 0
          %1651 = vmatprep.subr.bf16.mxu0 0
          %1652 = vmatpush1.bf16.xpose.msra.mxu0 0
          %1653 = vmatprep.subr.bf16.mxu0 0
          %1654 = vmatpush1.bf16.xpose.msra.mxu0 0
          %1655 = vmatprep.subr.bf16.mxu0 0
          %1656 = vmatpush1.bf16.xpose.msra.mxu0 0
          %1657 = vmatprep.subr.bf16.mxu0 0
          %1658 = vmatpush1.bf16.xpose.msra.mxu0 0
          %1659 = vmatprep.subr.bf16.mxu0 0
          %1660 = vmatpush1.bf16.xpose.msra.mxu0 0
          %1661 = vmatprep.subr.bf16.mxu0 0
          %1662 = vmatpush1.bf16.xpose.msra.mxu0 0
          %1663 = vmatprep.subr.bf16.mxu0 0
          %1664 = vmatpush1.bf16.xpose.msra.mxu0 0
          %1665 = vmatprep.subr.bf16.mxu0 0
          %1666 = vmatpush1.bf16.xpose.msra.mxu0 0
          %1667 = vmatprep.subr.bf16.mxu0 0
          %1668 = vmatpush1.bf16.xpose.msra.mxu0 0
          %1669 = vmatprep.subr.bf16.mxu0 0
          %1670 = vmatpush1.bf16.xpose.msra.mxu0 0
          %1671 = vmatprep.subr.bf16.mxu0 0
          %1672 = vmatpush1.bf16.xpose.msra.mxu0 0
          %1673 = vmatprep.subr.bf16.mxu0 0
          %1674 = vmatpush1.bf16.xpose.msra.mxu0 0
          %1675 = vmatprep.subr.bf16.mxu0 0
          %1676 = vmatpush1.bf16.xpose.msra.mxu0 0
          %1677 = vmatprep.subr.bf16.mxu0 0
          %1678 = vmatpush1.bf16.xpose.msra.mxu0 0
          %1679 = vmatprep.mubr.bf16.mxu0 0
          %1680 = vmatmul.mubr.bf16.gmra.mrb[0].mxu0 %v1642
          %v1681 = vpop.f32.mrb[0].mxu0
          %v1682 = vadd.f32 0.0, %v1681
          %v1683 = vpop.f32.mrb[0].mxu0
          %v1684 = vpop.f32.mrb[0].mxu0
          %v1685 = vpop.f32.mrb[0].mxu0
          %1686 = vdwg.mxu0
          %v1687 = vmul.f32 %v1682, 0.35355338
          %v1688 = vsel %vm1530, %v1687, -inf
          %1689 = vmax.xlane.f32.xlu0 %v1688
          %v1690 = vpop.xlane.xlu0 %1689
          %v1691 = vsub.f32 %v1687, %v1690
          %v1692 = vmul.f32 %v1691, 1.442695
          %v1693 = vpow.pop %v1692
          %v1694 = vsel %vm1530, %v1693, 0.0
          %1695 = vadd.xlane.f32.xlu0 %v1694
          %v1696 = vpop.xlane.xlu0 %1695
          %v1697 = vrcp.pop %v1696
          %v1698 = vmul.f32 %v1693, %v1697
          %v1699 = vpack.c.bf16 %v1698, %v1698
          %1701 = vrot.lane.b32.xlu0 %v1526, 120
          %v1702 = vpop.permute.xlu0 %1701
          %v1704 = vsel %vm1530, %v1699, 0
          %v1707 = vsel %vm1593, %v1702, 0
          %1709 = vmatprep.subr.bf16.mxu0 0
          %1710 = vmatpush1.bf16.msra.mxu0 %v1707
          %1711 = vmatprep.subr.bf16.mxu0 0
          %1712 = vmatpush1.bf16.msra.mxu0 0
          %1713 = vmatprep.subr.bf16.mxu0 0
          %1714 = vmatpush1.bf16.msra.mxu0 0
          %1715 = vmatprep.subr.bf16.mxu0 0
          %1716 = vmatpush1.bf16.msra.mxu0 0
          %1717 = vmatprep.subr.bf16.mxu0 0
          %1718 = vmatpush1.bf16.msra.mxu0 0
          %1719 = vmatprep.subr.bf16.mxu0 0
          %1720 = vmatpush1.bf16.msra.mxu0 0
          %1721 = vmatprep.subr.bf16.mxu0 0
          %1722 = vmatpush1.bf16.msra.mxu0 0
          %1723 = vmatprep.subr.bf16.mxu0 0
          %1724 = vmatpush1.bf16.msra.mxu0 0
          %1725 = vmatprep.subr.bf16.mxu0 0
          %1726 = vmatpush1.bf16.msra.mxu0 0
          %1727 = vmatprep.subr.bf16.mxu0 0
          %1728 = vmatpush1.bf16.msra.mxu0 0
          %1729 = vmatprep.subr.bf16.mxu0 0
          %1730 = vmatpush1.bf16.msra.mxu0 0
          %1731 = vmatprep.subr.bf16.mxu0 0
          %1732 = vmatpush1.bf16.msra.mxu0 0
          %1733 = vmatprep.subr.bf16.mxu0 0
          %1734 = vmatpush1.bf16.msra.mxu0 0
          %1735 = vmatprep.subr.bf16.mxu0 0
          %1736 = vmatpush1.bf16.msra.mxu0 0
          %1737 = vmatprep.subr.bf16.mxu0 0
          %1738 = vmatpush1.bf16.msra.mxu0 0
          %1739 = vmatprep.subr.bf16.mxu0 0
          %1740 = vmatpush1.bf16.msra.mxu0 0
          %1741 = vmatprep.mubr.bf16.mxu0 0
          %1742 = vmatmul.mubr.bf16.gmra.mrb[0].mxu0 %v1704
          %v1743 = vpop.f32.mrb[0].mxu0
          %v1744 = vadd.f32 0.0, %v1743
          %v1745 = vpop.f32.mrb[0].mxu0
          %v1746 = vpop.f32.mrb[0].mxu0
          %v1747 = vpop.f32.mrb[0].mxu0
          %1748 = vdwg.mxu0
          %1749 = vrot.lane.b32.xlu0 %v1459, 112
          %v1750 = vpop.permute.xlu0 %1749
          %1751 = vrot.lane.b32.xlu0 %v1459, 80
          %v1752 = vpop.permute.xlu0 %1751
          %v1754 = vsel %vm1530, %v1750, 0
          %v1757 = vsel %vm1530, %v1752, 0
          %1759 = vmatprep.subr.bf16.mxu0 0
          %1760 = vmatpush1.bf16.xpose.msra.mxu0 %v1757
          %1761 = vmatprep.subr.bf16.mxu0 0
          %1762 = vmatpush1.bf16.xpose.msra.mxu0 0
          %1763 = vmatprep.subr.bf16.mxu0 0
          %1764 = vmatpush1.bf16.xpose.msra.mxu0 0
          %1765 = vmatprep.subr.bf16.mxu0 0
          %1766 = vmatpush1.bf16.xpose.msra.mxu0 0
          %1767 = vmatprep.subr.bf16.mxu0 0
          %1768 = vmatpush1.bf16.xpose.msra.mxu0 0
          %1769 = vmatprep.subr.bf16.mxu0 0
          %1770 = vmatpush1.bf16.xpose.msra.mxu0 0
          %1771 = vmatprep.subr.bf16.mxu0 0
          %1772 = vmatpush1.bf16.xpose.msra.mxu0 0
          %1773 = vmatprep.subr.bf16.mxu0 0
          %1774 = vmatpush1.bf16.xpose.msra.mxu0 0
          %1775 = vmatprep.subr.bf16.mxu0 0
          %1776 = vmatpush1.bf16.xpose.msra.mxu0 0
          %1777 = vmatprep.subr.bf16.mxu0 0
          %1778 = vmatpush1.bf16.xpose.msra.mxu0 0
          %1779 = vmatprep.subr.bf16.mxu0 0
          %1780 = vmatpush1.bf16.xpose.msra.mxu0 0
          %1781 = vmatprep.subr.bf16.mxu0 0
          %1782 = vmatpush1.bf16.xpose.msra.mxu0 0
          %1783 = vmatprep.subr.bf16.mxu0 0
          %1784 = vmatpush1.bf16.xpose.msra.mxu0 0
          %1785 = vmatprep.subr.bf16.mxu0 0
          %1786 = vmatpush1.bf16.xpose.msra.mxu0 0
          %1787 = vmatprep.subr.bf16.mxu0 0
          %1788 = vmatpush1.bf16.xpose.msra.mxu0 0
          %1789 = vmatprep.subr.bf16.mxu0 0
          %1790 = vmatpush1.bf16.xpose.msra.mxu0 0
          %1791 = vmatprep.mubr.bf16.mxu0 0
          %1792 = vmatmul.mubr.bf16.gmra.mrb[0].mxu0 %v1754
          %v1793 = vpop.f32.mrb[0].mxu0
          %v1794 = vadd.f32 0.0, %v1793
          %v1795 = vpop.f32.mrb[0].mxu0
          %v1796 = vpop.f32.mrb[0].mxu0
          %v1797 = vpop.f32.mrb[0].mxu0
          %1798 = vdwg.mxu0
          %v1799 = vmul.f32 %v1794, 0.35355338
          %v1800 = vsel %vm1530, %v1799, -inf
          %1801 = vmax.xlane.f32.xlu0 %v1800
          %v1802 = vpop.xlane.xlu0 %1801
          %v1803 = vsub.f32 %v1799, %v1802
          %v1804 = vmul.f32 %v1803, 1.442695
          %v1805 = vpow.pop %v1804
          %v1806 = vsel %vm1530, %v1805, 0.0
          %1807 = vadd.xlane.f32.xlu0 %v1806
          %v1808 = vpop.xlane.xlu0 %1807
          %v1809 = vrcp.pop %v1808
          %v1810 = vmul.f32 %v1805, %v1809
          %v1811 = vpack.c.bf16 %v1810, %v1810
          %1812 = vrot.lane.b32.xlu0 %v1526, 112
          %v1813 = vpop.permute.xlu0 %1812
          %v1815 = vsel %vm1530, %v1811, 0
          %v1818 = vsel %vm1593, %v1813, 0
          %1820 = vmatprep.subr.bf16.mxu0 0
          %1821 = vmatpush1.bf16.msra.mxu0 %v1818
          %1822 = vmatprep.subr.bf16.mxu0 0
          %1823 = vmatpush1.bf16.msra.mxu0 0
          %1824 = vmatprep.subr.bf16.mxu0 0
          %1825 = vmatpush1.bf16.msra.mxu0 0
          %1826 = vmatprep.subr.bf16.mxu0 0
          %1827 = vmatpush1.bf16.msra.mxu0 0
          %1828 = vmatprep.subr.bf16.mxu0 0
          %1829 = vmatpush1.bf16.msra.mxu0 0
          %1830 = vmatprep.subr.bf16.mxu0 0
          %1831 = vmatpush1.bf16.msra.mxu0 0
          %1832 = vmatprep.subr.bf16.mxu0 0
          %1833 = vmatpush1.bf16.msra.mxu0 0
          %1834 = vmatprep.subr.bf16.mxu0 0
          %1835 = vmatpush1.bf16.msra.mxu0 0
          %1836 = vmatprep.subr.bf16.mxu0 0
          %1837 = vmatpush1.bf16.msra.mxu0 0
          %1838 = vmatprep.subr.bf16.mxu0 0
          %1839 = vmatpush1.bf16.msra.mxu0 0
          %1840 = vmatprep.subr.bf16.mxu0 0
          %1841 = vmatpush1.bf16.msra.mxu0 0
          %1842 = vmatprep.subr.bf16.mxu0 0
          %1843 = vmatpush1.bf16.msra.mxu0 0
          %1844 = vmatprep.subr.bf16.mxu0 0
          %1845 = vmatpush1.bf16.msra.mxu0 0
          %1846 = vmatprep.subr.bf16.mxu0 0
          %1847 = vmatpush1.bf16.msra.mxu0 0
          %1848 = vmatprep.subr.bf16.mxu0 0
          %1849 = vmatpush1.bf16.msra.mxu0 0
          %1850 = vmatprep.subr.bf16.mxu0 0
          %1851 = vmatpush1.bf16.msra.mxu0 0
          %1852 = vmatprep.mubr.bf16.mxu0 0
          %1853 = vmatmul.mubr.bf16.gmra.mrb[0].mxu0 %v1815
          %v1854 = vpop.f32.mrb[0].mxu0
          %v1855 = vadd.f32 0.0, %v1854
          %v1856 = vpop.f32.mrb[0].mxu0
          %v1857 = vpop.f32.mrb[0].mxu0
          %v1858 = vpop.f32.mrb[0].mxu0
          %1859 = vdwg.mxu0
          %1860 = vrot.lane.b32.xlu0 %v1459, 104
          %v1861 = vpop.permute.xlu0 %1860
          %1862 = vrot.lane.b32.xlu0 %v1459, 72
          %v1863 = vpop.permute.xlu0 %1862
          %v1865 = vsel %vm1530, %v1861, 0
          %v1868 = vsel %vm1530, %v1863, 0
          %1870 = vmatprep.subr.bf16.mxu0 0
          %1871 = vmatpush1.bf16.xpose.msra.mxu0 %v1868
          %1872 = vmatprep.subr.bf16.mxu0 0
          %1873 = vmatpush1.bf16.xpose.msra.mxu0 0
          %1874 = vmatprep.subr.bf16.mxu0 0
          %1875 = vmatpush1.bf16.xpose.msra.mxu0 0
          %1876 = vmatprep.subr.bf16.mxu0 0
          %1877 = vmatpush1.bf16.xpose.msra.mxu0 0
          %1878 = vmatprep.subr.bf16.mxu0 0
          %1879 = vmatpush1.bf16.xpose.msra.mxu0 0
          %1880 = vmatprep.subr.bf16.mxu0 0
          %1881 = vmatpush1.bf16.xpose.msra.mxu0 0
          %1882 = vmatprep.subr.bf16.mxu0 0
          %1883 = vmatpush1.bf16.xpose.msra.mxu0 0
          %1884 = vmatprep.subr.bf16.mxu0 0
          %1885 = vmatpush1.bf16.xpose.msra.mxu0 0
          %1886 = vmatprep.subr.bf16.mxu0 0
          %1887 = vmatpush1.bf16.xpose.msra.mxu0 0
          %1888 = vmatprep.subr.bf16.mxu0 0
          %1889 = vmatpush1.bf16.xpose.msra.mxu0 0
          %1890 = vmatprep.subr.bf16.mxu0 0
          %1891 = vmatpush1.bf16.xpose.msra.mxu0 0
          %1892 = vmatprep.subr.bf16.mxu0 0
          %1893 = vmatpush1.bf16.xpose.msra.mxu0 0
          %1894 = vmatprep.subr.bf16.mxu0 0
          %1895 = vmatpush1.bf16.xpose.msra.mxu0 0
          %1896 = vmatprep.subr.bf16.mxu0 0
          %1897 = vmatpush1.bf16.xpose.msra.mxu0 0
          %1898 = vmatprep.subr.bf16.mxu0 0
          %1899 = vmatpush1.bf16.xpose.msra.mxu0 0
          %1900 = vmatprep.subr.bf16.mxu0 0
          %1901 = vmatpush1.bf16.xpose.msra.mxu0 0
          %1902 = vmatprep.mubr.bf16.mxu0 0
          %1903 = vmatmul.mubr.bf16.gmra.mrb[0].mxu0 %v1865
          %v1904 = vpop.f32.mrb[0].mxu0
          %v1905 = vadd.f32 0.0, %v1904
          %v1906 = vpop.f32.mrb[0].mxu0
          %v1907 = vpop.f32.mrb[0].mxu0
          %v1908 = vpop.f32.mrb[0].mxu0
          %1909 = vdwg.mxu0
          %v1910 = vmul.f32 %v1905, 0.35355338
          %v1911 = vsel %vm1530, %v1910, -inf
          %1912 = vmax.xlane.f32.xlu0 %v1911
          %v1913 = vpop.xlane.xlu0 %1912
          %v1914 = vsub.f32 %v1910, %v1913
          %v1915 = vmul.f32 %v1914, 1.442695
          %v1916 = vpow.pop %v1915
          %v1917 = vsel %vm1530, %v1916, 0.0
          %1918 = vadd.xlane.f32.xlu0 %v1917
          %v1919 = vpop.xlane.xlu0 %1918
          %v1920 = vrcp.pop %v1919
          %v1921 = vmul.f32 %v1916, %v1920
          %v1922 = vpack.c.bf16 %v1921, %v1921
          %1923 = vrot.lane.b32.xlu0 %v1526, 104
          %v1924 = vpop.permute.xlu0 %1923
          %v1926 = vsel %vm1530, %v1922, 0
          %v1929 = vsel %vm1593, %v1924, 0
          %1931 = vmatprep.subr.bf16.mxu0 0
          %1932 = vmatpush1.bf16.msra.mxu0 %v1929
          %1933 = vmatprep.subr.bf16.mxu0 0
          %1934 = vmatpush1.bf16.msra.mxu0 0
          %1935 = vmatprep.subr.bf16.mxu0 0
          %1936 = vmatpush1.bf16.msra.mxu0 0
          %1937 = vmatprep.subr.bf16.mxu0 0
          %1938 = vmatpush1.bf16.msra.mxu0 0
          %1939 = vmatprep.subr.bf16.mxu0 0
          %1940 = vmatpush1.bf16.msra.mxu0 0
          %1941 = vmatprep.subr.bf16.mxu0 0
          %1942 = vmatpush1.bf16.msra.mxu0 0
          %1943 = vmatprep.subr.bf16.mxu0 0
          %1944 = vmatpush1.bf16.msra.mxu0 0
          %1945 = vmatprep.subr.bf16.mxu0 0
          %1946 = vmatpush1.bf16.msra.mxu0 0
          %1947 = vmatprep.subr.bf16.mxu0 0
          %1948 = vmatpush1.bf16.msra.mxu0 0
          %1949 = vmatprep.subr.bf16.mxu0 0
          %1950 = vmatpush1.bf16.msra.mxu0 0
          %1951 = vmatprep.subr.bf16.mxu0 0
          %1952 = vmatpush1.bf16.msra.mxu0 0
          %1953 = vmatprep.subr.bf16.mxu0 0
          %1954 = vmatpush1.bf16.msra.mxu0 0
          %1955 = vmatprep.subr.bf16.mxu0 0
          %1956 = vmatpush1.bf16.msra.mxu0 0
          %1957 = vmatprep.subr.bf16.mxu0 0
          %1958 = vmatpush1.bf16.msra.mxu0 0
          %1959 = vmatprep.subr.bf16.mxu0 0
          %1960 = vmatpush1.bf16.msra.mxu0 0
          %1961 = vmatprep.subr.bf16.mxu0 0
          %1962 = vmatpush1.bf16.msra.mxu0 0
          %1963 = vmatprep.mubr.bf16.mxu0 0
          %1964 = vmatmul.mubr.bf16.gmra.mrb[0].mxu0 %v1926
          %v1965 = vpop.f32.mrb[0].mxu0
          %v1966 = vadd.f32 0.0, %v1965
          %v1967 = vpop.f32.mrb[0].mxu0
          %v1968 = vpop.f32.mrb[0].mxu0
          %v1969 = vpop.f32.mrb[0].mxu0
          %1970 = vdwg.mxu0
          %1972 = vrot.lane.b32.xlu0 %v1744, 8
          %v1973 = vpop.permute.xlu0 %1972
          %1976 = vrot.lane.b32.xlu0 %v1855, 16
          %v1977 = vpop.permute.xlu0 %1976
          %1980 = vrot.lane.b32.xlu0 %v1966, 24
          %v1981 = vpop.permute.xlu0 %1980
          %v1983 = vsel %vm1530, %v1632, %v1973
          %vm1984 = vcmask 130048
          %v1985 = vsel %vm1984, %v1983, %v1977
          %vm1986 = vcmask 195584
          %v1987 = vsel %vm1986, %v1985, %v1981
          %v1988 = vld [vmem:[%s23] sm:$0xf]
          %v1989 = vld [vmem:[%s23 + $0x4] sm:$0xf]
          %v1990 = vld [vmem:[%s23 + $0x8] sm:$0xf]
          %v1991 = vld [vmem:[%s23 + $0xc] sm:$0xf]
          %v1992 = vpack.c.bf16 %v1987, %v1987
          %v1993 = vld [vmem:[%s25] sm:$0x1]
          %v1995 = vlaneseq
          %v1996 = vshrl.u32 %v1995, 7
          %v1997 = vsub.s32 0, %v1996
          %v1998 = vrot.slane %v1993, %v1997
          %v2004 = vunpack.c.l.b16 %v1988
          %v2005 = vunpack.c.l.b16 %v1989
          %v2006 = vunpack.c.l.b16 %v1990
          %v2007 = vunpack.c.l.b16 %v1991
          %v2008 = vpack.c.b16 %v2005, %v2004
          %v2009 = vpack.c.b16 %v2007, %v2006
          %v2013 = vsel %vm1389, %v1992, 0
          %2015 = vmatprep.subr.bf16.mxu0 0
          %2016 = vmatpush1.bf16.msra.mxu0 %v2008
          %2017 = vmatprep.subr.bf16.mxu0 0
          %2018 = vmatpush1.bf16.msra.mxu0 %v2009
          %2019 = vmatprep.subr.bf16.mxu0 0
          %2020 = vmatpush1.bf16.msra.mxu0 0
          %2021 = vmatprep.subr.bf16.mxu0 0
          %2022 = vmatpush1.bf16.msra.mxu0 0
          %2023 = vmatprep.subr.bf16.mxu0 0
          %2024 = vmatpush1.bf16.msra.mxu0 0
          %2025 = vmatprep.subr.bf16.mxu0 0
          %2026 = vmatpush1.bf16.msra.mxu0 0
          %2027 = vmatprep.subr.bf16.mxu0 0
          %2028 = vmatpush1.bf16.msra.mxu0 0
          %2029 = vmatprep.subr.bf16.mxu0 0
          %2030 = vmatpush1.bf16.msra.mxu0 0
          %2031 = vmatprep.subr.bf16.mxu0 0
          %2032 = vmatpush1.bf16.msra.mxu0 0
          %2033 = vmatprep.subr.bf16.mxu0 0
          %2034 = vmatpush1.bf16.msra.mxu0 0
          %2035 = vmatprep.subr.bf16.mxu0 0
          %2036 = vmatpush1.bf16.msra.mxu0 0
          %2037 = vmatprep.subr.bf16.mxu0 0
          %2038 = vmatpush1.bf16.msra.mxu0 0
          %2039 = vmatprep.subr.bf16.mxu0 0
          %2040 = vmatpush1.bf16.msra.mxu0 0
          %2041 = vmatprep.subr.bf16.mxu0 0
          %2042 = vmatpush1.bf16.msra.mxu0 0
          %2043 = vmatprep.subr.bf16.mxu0 0
          %2044 = vmatpush1.bf16.msra.mxu0 0
          %2045 = vmatprep.subr.bf16.mxu0 0
          %2046 = vmatpush1.bf16.msra.mxu0 0
          %2047 = vmatprep.mubr.bf16.mxu0 0
          %2048 = vmatmul.mubr.bf16.gmra.mrb[0].mxu0 %v2013
          %v2049 = vpop.f32.mrb[0].mxu0
          %v2050 = vadd.f32 %v1998, %v2049
          %v2051 = vpop.f32.mrb[0].mxu0
          %v2052 = vpop.f32.mrb[0].mxu0
          %v2053 = vpop.f32.mrb[0].mxu0
          %2054 = vdwg.mxu0
          %v2055 = vadd.f32 %v1252, %v2050
          %v2056 = vld [vmem:[%s27] sm:$0x1]
          %v2057 = vld [vmem:[%s29] sm:$0x1]
          %v2058 = vsel %vm1389, %v2055, 0.0
          %2059 = vadd.xlane.f32.xlu0 %v2058
          %v2060 = vpop.xlane.xlu0 %2059
          %v2061 = vrcp.pop 32.0
          %v2062 = vmul.f32 %v2060, %v2061
          %v2063 = vsub.f32 %v2055, %v2062
          %v2064 = vmul.f32 %v2063, %v2063
          %v2065 = vsel %vm1389, %v2064, 0.0
          %2066 = vadd.xlane.f32.xlu0 %v2065
          %v2067 = vpop.xlane.xlu0 %2066
          %v2068 = vmul.f32 %v2067, %v2061
          %v2069 = vadd.f32 %v2068, 1e-05
          %v2070 = vrsqrt.pop %v2069
          %v2071 = vmul.f32 %v2063, %v2070
          %v2073 = vlaneseq
          %v2074 = vshrl.u32 %v2073, 7
          %v2075 = vsub.s32 0, %v2074
          %v2076 = vrot.slane %v2056, %v2075
          %v2078 = vmul.f32 %v2071, %v2076
          %v2080 = vlaneseq
          %v2081 = vshrl.u32 %v2080, 7
          %v2082 = vsub.s32 0, %v2081
          %v2083 = vrot.slane %v2057, %v2082
          %v2085 = vadd.f32 %v2078, %v2083
          %2086 = vst.msk [vmem:[#allocation2] sm:$0xff] %vm1389, %v2085
          %v2087 = vadd.f32 %v2085, %v1384
          %v2088 = vld [vmem:[%s31] sm:$0xf]
          %v2089 = vld [vmem:[%s31 + $0x4] sm:$0xf]
          %v2090 = vld [vmem:[%s31 + $0x8] sm:$0xf]
          %v2091 = vld [vmem:[%s31 + $0xc] sm:$0xf]
          %v2092 = vpack.c.bf16 %v2087, %v2087
          %v2093 = vld [vmem:[%s33] sm:$0x1]
          %v2095 = vlaneseq
          %v2096 = vshrl.u32 %v2095, 7
          %v2097 = vsub.s32 0, %v2096
          %v2098 = vrot.slane %v2093, %v2097
          %v2104 = vunpack.c.l.b16 %v2088
          %v2105 = vunpack.c.l.b16 %v2089
          %v2106 = vunpack.c.l.b16 %v2090
          %v2107 = vunpack.c.l.b16 %v2091
          %v2108 = vpack.c.b16 %v2105, %v2104
          %v2109 = vpack.c.b16 %v2107, %v2106
          %v2113 = vsel %vm1389, %v2092, 0
          %2115 = vmatprep.subr.bf16.mxu0 0
          %2116 = vmatpush1.bf16.msra.mxu0 %v2108
          %2117 = vmatprep.subr.bf16.mxu0 0
          %2118 = vmatpush1.bf16.msra.mxu0 %v2109
          %2119 = vmatprep.subr.bf16.mxu0 0
          %2120 = vmatpush1.bf16.msra.mxu0 0
          %2121 = vmatprep.subr.bf16.mxu0 0
          %2122 = vmatpush1.bf16.msra.mxu0 0
          %2123 = vmatprep.subr.bf16.mxu0 0
          %2124 = vmatpush1.bf16.msra.mxu0 0
          %2125 = vmatprep.subr.bf16.mxu0 0
          %2126 = vmatpush1.bf16.msra.mxu0 0
          %2127 = vmatprep.subr.bf16.mxu0 0
          %2128 = vmatpush1.bf16.msra.mxu0 0
          %2129 = vmatprep.subr.bf16.mxu0 0
          %2130 = vmatpush1.bf16.msra.mxu0 0
          %2131 = vmatprep.subr.bf16.mxu0 0
          %2132 = vmatpush1.bf16.msra.mxu0 0
          %2133 = vmatprep.subr.bf16.mxu0 0
          %2134 = vmatpush1.bf16.msra.mxu0 0
          %2135 = vmatprep.subr.bf16.mxu0 0
          %2136 = vmatpush1.bf16.msra.mxu0 0
          %2137 = vmatprep.subr.bf16.mxu0 0
          %2138 = vmatpush1.bf16.msra.mxu0 0
          %2139 = vmatprep.subr.bf16.mxu0 0
          %2140 = vmatpush1.bf16.msra.mxu0 0
          %2141 = vmatprep.subr.bf16.mxu0 0
          %2142 = vmatpush1.bf16.msra.mxu0 0
          %2143 = vmatprep.subr.bf16.mxu0 0
          %2144 = vmatpush1.bf16.msra.mxu0 0
          %2145 = vmatprep.subr.bf16.mxu0 0
          %2146 = vmatpush1.bf16.msra.mxu0 0
          %2147 = vmatprep.mubr.bf16.mxu0 0
          %2148 = vmatmul.mubr.bf16.gmra.mrb[0].mxu0 %v2113
          %v2149 = vpop.f32.mrb[0].mxu0
          %v2150 = vadd.f32 %v2098, %v2149
          %v2151 = vpop.f32.mrb[0].mxu0
          %v2152 = vpop.f32.mrb[0].mxu0
          %v2153 = vpop.f32.mrb[0].mxu0
          %2154 = vdwg.mxu0
          %v2155 = vpack.c.bf16 %v2150, %v2150
          %vm2156 = vcmask 257024
          %2157 = vst.msk [vmem:[#allocation3] sm:$0xf] %vm2156, %v2155
          %vm2158 = vcmask 7168
          %2159 = vst.msk [vmem:[#allocation4] sm:$0xff] %vm2158, -1e+30
          %2160 = vst.msk [vmem:[#allocation4 + $0x8] sm:$0xff] %vm2158, -1e+30
          %2161 = vst.msk [vmem:[#allocation4 + $0x10] sm:$0xff] %vm2158, -1e+30
          %2162 = vst.msk [vmem:[#allocation4 + $0x18] sm:$0xff] %vm2158, -1e+30
          %2163 = vst.msk [vmem:[#allocation5] sm:$0xff] %vm2158, 0.0
          %2164 = vst.msk [vmem:[#allocation5 + $0x8] sm:$0xff] %vm2158, 0.0
          %2165 = vst.msk [vmem:[#allocation5 + $0x10] sm:$0xff] %vm2158, 0.0
          %2166 = vst.msk [vmem:[#allocation5 + $0x18] sm:$0xff] %vm2158, 0.0
          %2167 = vst.msk [vmem:[#allocation6] sm:$0xff] %vm1530, 0.0
          %2168 = vst.msk [vmem:[#allocation6 + $0x8] sm:$0xff] %vm1530, 0.0
          %2169 = vst.msk [vmem:[#allocation6 + $0x10] sm:$0xff] %vm1530, 0.0
          %2170 = vst.msk [vmem:[#allocation6 + $0x18] sm:$0xff] %vm1530, 0.0
        $region164: #{run.3} parent=159 // pred_fallthru
          _
        %v2171 = vld [vmem:[%s1236] sm:$0xf]
        %v2172 = vld [vmem:[%s1236 + $0x4] sm:$0xf]
        %v2173 = vld [vmem:[%s35] sm:$0xf]
        %v2174 = vld [vmem:[%s35 + $0x4] sm:$0xf]
        %v2175 = vld [vmem:[%s35 + $0x8] sm:$0xf]
        %v2176 = vld [vmem:[%s35 + $0xc] sm:$0xf]
        %v2177 = vld [vmem:[%s37] sm:$0x1]
        %v2179 = vlaneseq
        %v2180 = vshrl.u32 %v2179, 7
        %v2181 = vsub.s32 0, %v2180
        %v2182 = vrot.slane %v2177, %v2181
        %v2186 = vunpack.c.l.b16 %v2171
        %v2187 = vunpack.c.l.b16 %v2172
        %v2188 = vpack.c.b16 %v2187, %v2186
        %v2193 = vunpack.c.l.b16 %v2173
        %v2194 = vunpack.c.l.b16 %v2174
        %v2195 = vunpack.c.l.b16 %v2175
        %v2196 = vunpack.c.l.b16 %v2176
        %v2197 = vpack.c.b16 %v2194, %v2193
        %v2198 = vpack.c.b16 %v2196, %v2195
        %vm2201 = vcmask 261120
        %v2203 = vsel %vm2201, %v2188, 0
        %2205 = vmatprep.subr.bf16.mxu0 0
        %2206 = vmatpush1.bf16.msra.mxu0 %v2197
        %2207 = vmatprep.subr.bf16.mxu0 0
        %2208 = vmatpush1.bf16.msra.mxu0 %v2198
        %2209 = vmatprep.subr.bf16.mxu0 0
        %2210 = vmatpush1.bf16.msra.mxu0 0
        %2211 = vmatprep.subr.bf16.mxu0 0
        %2212 = vmatpush1.bf16.msra.mxu0 0
        %2213 = vmatprep.subr.bf16.mxu0 0
        %2214 = vmatpush1.bf16.msra.mxu0 0
        %2215 = vmatprep.subr.bf16.mxu0 0
        %2216 = vmatpush1.bf16.msra.mxu0 0
        %2217 = vmatprep.subr.bf16.mxu0 0
        %2218 = vmatpush1.bf16.msra.mxu0 0
        %2219 = vmatprep.subr.bf16.mxu0 0
        %2220 = vmatpush1.bf16.msra.mxu0 0
        %2221 = vmatprep.subr.bf16.mxu0 0
        %2222 = vmatpush1.bf16.msra.mxu0 0
        %2223 = vmatprep.subr.bf16.mxu0 0
        %2224 = vmatpush1.bf16.msra.mxu0 0
        %2225 = vmatprep.subr.bf16.mxu0 0
        %2226 = vmatpush1.bf16.msra.mxu0 0
        %2227 = vmatprep.subr.bf16.mxu0 0
        %2228 = vmatpush1.bf16.msra.mxu0 0
        %2229 = vmatprep.subr.bf16.mxu0 0
        %2230 = vmatpush1.bf16.msra.mxu0 0
        %2231 = vmatprep.subr.bf16.mxu0 0
        %2232 = vmatpush1.bf16.msra.mxu0 0
        %2233 = vmatprep.subr.bf16.mxu0 0
        %2234 = vmatpush1.bf16.msra.mxu0 0
        %2235 = vmatprep.subr.bf16.mxu0 0
        %2236 = vmatpush1.bf16.msra.mxu0 0
        %2237 = vmatprep.mubr.bf16.mxu0 0
        %2238 = vmatmul.mubr.bf16.gmra.mrb[0].mxu0 %v2203
        %v2239 = vpop.f32.mrb[0].mxu0
        %v2240 = vadd.f32 %v2182, %v2239
        %v2241 = vpop.f32.mrb[0].mxu0
        %v2242 = vpop.f32.mrb[0].mxu0
        %v2243 = vadd.f32 %v2182, %v2242
        %v2244 = vpop.f32.mrb[0].mxu0
        %2245 = vdwg.mxu0
        %v2246 = vpack.c.bf16 %v2243, %v2240
        %v2247 = vld [vmem:[#allocation3] sm:$0xf]
        %vm2248 = vcmask 64512
        %v2250 = vsel %vm2248, %v2247, 0
        %v2253 = vsel %vm2248, %v2246, 0
        %2255 = vmatprep.subr.bf16.mxu0 0
        %2256 = vmatpush1.bf16.xpose.msra.mxu0 %v2253
        %2257 = vmatprep.subr.bf16.mxu0 0
        %2258 = vmatpush1.bf16.xpose.msra.mxu0 0
        %2259 = vmatprep.subr.bf16.mxu0 0
        %2260 = vmatpush1.bf16.xpose.msra.mxu0 0
        %2261 = vmatprep.subr.bf16.mxu0 0
        %2262 = vmatpush1.bf16.xpose.msra.mxu0 0
        %2263 = vmatprep.subr.bf16.mxu0 0
        %2264 = vmatpush1.bf16.xpose.msra.mxu0 0
        %2265 = vmatprep.subr.bf16.mxu0 0
        %2266 = vmatpush1.bf16.xpose.msra.mxu0 0
        %2267 = vmatprep.subr.bf16.mxu0 0
        %2268 = vmatpush1.bf16.xpose.msra.mxu0 0
        %2269 = vmatprep.subr.bf16.mxu0 0
        %2270 = vmatpush1.bf16.xpose.msra.mxu0 0
        %2271 = vmatprep.subr.bf16.mxu0 0
        %2272 = vmatpush1.bf16.xpose.msra.mxu0 0
        %2273 = vmatprep.subr.bf16.mxu0 0
        %2274 = vmatpush1.bf16.xpose.msra.mxu0 0
        %2275 = vmatprep.subr.bf16.mxu0 0
        %2276 = vmatpush1.bf16.xpose.msra.mxu0 0
        %2277 = vmatprep.subr.bf16.mxu0 0
        %2278 = vmatpush1.bf16.xpose.msra.mxu0 0
        %2279 = vmatprep.subr.bf16.mxu0 0
        %2280 = vmatpush1.bf16.xpose.msra.mxu0 0
        %2281 = vmatprep.subr.bf16.mxu0 0
        %2282 = vmatpush1.bf16.xpose.msra.mxu0 0
        %2283 = vmatprep.subr.bf16.mxu0 0
        %2284 = vmatpush1.bf16.xpose.msra.mxu0 0
        %2285 = vmatprep.subr.bf16.mxu0 0
        %2286 = vmatpush1.bf16.xpose.msra.mxu0 0
        %2287 = vmatprep.mubr.bf16.mxu0 0
        %2288 = vmatmul.mubr.bf16.gmra.mrb[0].mxu0 %v2250
        %v2289 = vpop.f32.mrb[0].mxu0
        %v2290 = vadd.f32 0.0, %v2289
        %v2291 = vpop.f32.mrb[0].mxu0
        %v2292 = vpop.f32.mrb[0].mxu0
        %v2293 = vpop.f32.mrb[0].mxu0
        %2294 = vdwg.mxu0
        %v2295 = vmul.f32 %v2290, 0.35355338
        %v2296 = vld [vmem:[#allocation4] sm:$0xff]
        %vm2297 = vcmask 130048
        %v2298 = vsel %vm2297, %v2295, -inf
        %2299 = vmax.xlane.f32.xlu0 %v2298
        %v2300 = vpop.xlane.xlu0 %2299
        %v2301 = vmax.f32 %v2296, %v2300
        %v2302 = vsub.f32 %v2296, %v2301
        %v2303 = vmul.f32 %v2302, 1.442695
        %v2304 = vpow.pop %v2303
        %2306 = vset.pattern.permute.xlu0 0
        %2307 = vperm.xlu0 %2306, %v2301
        %v2308 = vpop.permute.xlu0 %2307
        %v2310 = vsub.f32 %v2295, %v2308
        %v2311 = vmul.f32 %v2310, 1.442695
        %v2312 = vpow.pop %v2311
        %v2313 = vld [vmem:[#allocation5] sm:$0xff]
        %v2314 = vmul.f32 %v2304, %v2313
        %v2315 = vsel %vm2297, %v2312, 0.0
        %2316 = vadd.xlane.f32.xlu0 %v2315
        %v2317 = vpop.xlane.xlu0 %2316
        %v2318 = vadd.f32 %v2314, %v2317
        %vm2319 = vcmask 7168
        %2320 = vst.msk [vmem:[#allocation5] sm:$0xff] %vm2319, %v2318
        %v2321 = vld [vmem:[#allocation6] sm:$0xff]
        %2323 = vset.pattern.permute.xlu0 0
        %2324 = vperm.xlu0 %2323, %v2304
        %v2325 = vpop.permute.xlu0 %2324
        %v2327 = vmul.f32 %v2325, %v2321
        %v2328 = vpack.c.bf16 %v2312, %v2312
        %2330 = vrot.lane.b32.xlu0 %v2246, 96
        %v2331 = vpop.permute.xlu0 %2330
        %v2334 = vsel %vm2297, %v2328, 0
        %2336 = vmatprep.subr.bf16.mxu0 0
        %2337 = vmatpush1.bf16.msra.mxu0 %v2331
        %2338 = vmatprep.subr.bf16.mxu0 0
        %2339 = vmatpush1.bf16.msra.mxu0 0
        %2340 = vmatprep.subr.bf16.mxu0 0
        %2341 = vmatpush1.bf16.msra.mxu0 0
        %2342 = vmatprep.subr.bf16.mxu0 0
        %2343 = vmatpush1.bf16.msra.mxu0 0
        %2344 = vmatprep.subr.bf16.mxu0 0
        %2345 = vmatpush1.bf16.msra.mxu0 0
        %2346 = vmatprep.subr.bf16.mxu0 0
        %2347 = vmatpush1.bf16.msra.mxu0 0
        %2348 = vmatprep.subr.bf16.mxu0 0
        %2349 = vmatpush1.bf16.msra.mxu0 0
        %2350 = vmatprep.subr.bf16.mxu0 0
        %2351 = vmatpush1.bf16.msra.mxu0 0
        %2352 = vmatprep.subr.bf16.mxu0 0
        %2353 = vmatpush1.bf16.msra.mxu0 0
        %2354 = vmatprep.subr.bf16.mxu0 0
        %2355 = vmatpush1.bf16.msra.mxu0 0
        %2356 = vmatprep.subr.bf16.mxu0 0
        %2357 = vmatpush1.bf16.msra.mxu0 0
        %2358 = vmatprep.subr.bf16.mxu0 0
        %2359 = vmatpush1.bf16.msra.mxu0 0
        %2360 = vmatprep.subr.bf16.mxu0 0
        %2361 = vmatpush1.bf16.msra.mxu0 0
        %2362 = vmatprep.subr.bf16.mxu0 0
        %2363 = vmatpush1.bf16.msra.mxu0 0
        %2364 = vmatprep.subr.bf16.mxu0 0
        %2365 = vmatpush1.bf16.msra.mxu0 0
        %2366 = vmatprep.subr.bf16.mxu0 0
        %2367 = vmatpush1.bf16.msra.mxu0 0
        %2368 = vmatprep.mubr.bf16.mxu0 0
        %2369 = vmatmul.mubr.bf16.gmra.mrb[0].mxu0 %v2334
        %v2370 = vpop.f32.mrb[0].mxu0
        %v2371 = vadd.f32 0.0, %v2370
        %v2372 = vpop.f32.mrb[0].mxu0
        %v2373 = vpop.f32.mrb[0].mxu0
        %v2374 = vpop.f32.mrb[0].mxu0
        %2375 = vdwg.mxu0
        %v2376 = vadd.f32 %v2327, %v2371
        %2377 = vst.msk [vmem:[#allocation6] sm:$0xff] %vm2248, %v2376
        %2378 = vst.msk [vmem:[#allocation4] sm:$0xff] %vm2319, %v2301
        %v2380 = vunpack.c.l.b16 %v2247
        %v2381 = vpack.c.b16 %v2380, %v2380
        %2382 = vrot.lane.b32.xlu0 %v2381, 120
        %v2383 = vpop.permute.xlu0 %2382
        %2384 = vrot.lane.b32.xlu0 %v2246, 120
        %v2385 = vpop.permute.xlu0 %2384
        %v2387 = vsel %vm2248, %v2383, 0
        %v2390 = vsel %vm2248, %v2385, 0
        %2392 = vmatprep.subr.bf16.mxu0 0
        %2393 = vmatpush1.bf16.xpose.msra.mxu0 %v2390
        %2394 = vmatprep.subr.bf16.mxu0 0
        %2395 = vmatpush1.bf16.xpose.msra.mxu0 0
        %2396 = vmatprep.subr.bf16.mxu0 0
        %2397 = vmatpush1.bf16.xpose.msra.mxu0 0
        %2398 = vmatprep.subr.bf16.mxu0 0
        %2399 = vmatpush1.bf16.xpose.msra.mxu0 0
        %2400 = vmatprep.subr.bf16.mxu0 0
        %2401 = vmatpush1.bf16.xpose.msra.mxu0 0
        %2402 = vmatprep.subr.bf16.mxu0 0
        %2403 = vmatpush1.bf16.xpose.msra.mxu0 0
        %2404 = vmatprep.subr.bf16.mxu0 0
        %2405 = vmatpush1.bf16.xpose.msra.mxu0 0
        %2406 = vmatprep.subr.bf16.mxu0 0
        %2407 = vmatpush1.bf16.xpose.msra.mxu0 0
        %2408 = vmatprep.subr.bf16.mxu0 0
        %2409 = vmatpush1.bf16.xpose.msra.mxu0 0
        %2410 = vmatprep.subr.bf16.mxu0 0
        %2411 = vmatpush1.bf16.xpose.msra.mxu0 0
        %2412 = vmatprep.subr.bf16.mxu0 0
        %2413 = vmatpush1.bf16.xpose.msra.mxu0 0
        %2414 = vmatprep.subr.bf16.mxu0 0
        %2415 = vmatpush1.bf16.xpose.msra.mxu0 0
        %2416 = vmatprep.subr.bf16.mxu0 0
        %2417 = vmatpush1.bf16.xpose.msra.mxu0 0
        %2418 = vmatprep.subr.bf16.mxu0 0
        %2419 = vmatpush1.bf16.xpose.msra.mxu0 0
        %2420 = vmatprep.subr.bf16.mxu0 0
        %2421 = vmatpush1.bf16.xpose.msra.mxu0 0
        %2422 = vmatprep.subr.bf16.mxu0 0
        %2423 = vmatpush1.bf16.xpose.msra.mxu0 0
        %2424 = vmatprep.mubr.bf16.mxu0 0
        %2425 = vmatmul.mubr.bf16.gmra.mrb[0].mxu0 %v2387
        %v2426 = vpop.f32.mrb[0].mxu0
        %v2427 = vadd.f32 0.0, %v2426
        %v2428 = vpop.f32.mrb[0].mxu0
        %v2429 = vpop.f32.mrb[0].mxu0
        %v2430 = vpop.f32.mrb[0].mxu0
        %2431 = vdwg.mxu0
        %v2432 = vmul.f32 %v2427, 0.35355338
        %s2433 = scalar_lea.vmem [#allocation4], 8
        %v2434 = vld [vmem:[%s2433] sm:$0xff]
        %v2435 = vsel %vm2297, %v2432, -inf
        %2436 = vmax.xlane.f32.xlu0 %v2435
        %v2437 = vpop.xlane.xlu0 %2436
        %v2438 = vmax.f32 %v2434, %v2437
        %v2439 = vsub.f32 %v2434, %v2438
        %v2440 = vmul.f32 %v2439, 1.442695
        %v2441 = vpow.pop %v2440
        %2443 = vset.pattern.permute.xlu0 0
        %2444 = vperm.xlu0 %2443, %v2438
        %v2445 = vpop.permute.xlu0 %2444
        %v2447 = vsub.f32 %v2432, %v2445
        %v2448 = vmul.f32 %v2447, 1.442695
        %v2449 = vpow.pop %v2448
        %s2450 = scalar_lea.vmem [#allocation5], 8
        %v2451 = vld [vmem:[%s2450] sm:$0xff]
        %v2452 = vmul.f32 %v2441, %v2451
        %v2453 = vsel %vm2297, %v2449, 0.0
        %2454 = vadd.xlane.f32.xlu0 %v2453
        %v2455 = vpop.xlane.xlu0 %2454
        %v2456 = vadd.f32 %v2452, %v2455
        %2457 = vst.msk [vmem:[%s2450] sm:$0xff] %vm2319, %v2456
        %s2458 = scalar_lea.vmem [#allocation6], 8
        %v2459 = vld [vmem:[%s2458] sm:$0xff]
        %2461 = vset.pattern.permute.xlu0 0
        %2462 = vperm.xlu0 %2461, %v2441
        %v2463 = vpop.permute.xlu0 %2462
        %v2465 = vmul.f32 %v2463, %v2459
        %v2466 = vpack.c.bf16 %v2449, %v2449
        %2467 = vrot.lane.b32.xlu0 %v2246, 88
        %v2468 = vpop.permute.xlu0 %2467
        %v2471 = vsel %vm2297, %v2466, 0
        %2473 = vmatprep.subr.bf16.mxu0 0
        %2474 = vmatpush1.bf16.msra.mxu0 %v2468
        %2475 = vmatprep.subr.bf16.mxu0 0
        %2476 = vmatpush1.bf16.msra.mxu0 0
        %2477 = vmatprep.subr.bf16.mxu0 0
        %2478 = vmatpush1.bf16.msra.mxu0 0
        %2479 = vmatprep.subr.bf16.mxu0 0
        %2480 = vmatpush1.bf16.msra.mxu0 0
        %2481 = vmatprep.subr.bf16.mxu0 0
        %2482 = vmatpush1.bf16.msra.mxu0 0
        %2483 = vmatprep.subr.bf16.mxu0 0
        %2484 = vmatpush1.bf16.msra.mxu0 0
        %2485 = vmatprep.subr.bf16.mxu0 0
        %2486 = vmatpush1.bf16.msra.mxu0 0
        %2487 = vmatprep.subr.bf16.mxu0 0
        %2488 = vmatpush1.bf16.msra.mxu0 0
        %2489 = vmatprep.subr.bf16.mxu0 0
        %2490 = vmatpush1.bf16.msra.mxu0 0
        %2491 = vmatprep.subr.bf16.mxu0 0
        %2492 = vmatpush1.bf16.msra.mxu0 0
        %2493 = vmatprep.subr.bf16.mxu0 0
        %2494 = vmatpush1.bf16.msra.mxu0 0
        %2495 = vmatprep.subr.bf16.mxu0 0
        %2496 = vmatpush1.bf16.msra.mxu0 0
        %2497 = vmatprep.subr.bf16.mxu0 0
        %2498 = vmatpush1.bf16.msra.mxu0 0
        %2499 = vmatprep.subr.bf16.mxu0 0
        %2500 = vmatpush1.bf16.msra.mxu0 0
        %2501 = vmatprep.subr.bf16.mxu0 0
        %2502 = vmatpush1.bf16.msra.mxu0 0
        %2503 = vmatprep.subr.bf16.mxu0 0
        %2504 = vmatpush1.bf16.msra.mxu0 0
        %2505 = vmatprep.mubr.bf16.mxu0 0
        %2506 = vmatmul.mubr.bf16.gmra.mrb[0].mxu0 %v2471
        %v2507 = vpop.f32.mrb[0].mxu0
        %v2508 = vadd.f32 0.0, %v2507
        %v2509 = vpop.f32.mrb[0].mxu0
        %v2510 = vpop.f32.mrb[0].mxu0
        %v2511 = vpop.f32.mrb[0].mxu0
        %2512 = vdwg.mxu0
        %v2513 = vadd.f32 %v2465, %v2508
        %2514 = vst.msk [vmem:[%s2458] sm:$0xff] %vm2248, %v2513
        %2515 = vst.msk [vmem:[%s2433] sm:$0xff] %vm2319, %v2438
        %2516 = vrot.lane.b32.xlu0 %v2381, 112
        %v2517 = vpop.permute.xlu0 %2516
        %2518 = vrot.lane.b32.xlu0 %v2246, 112
        %v2519 = vpop.permute.xlu0 %2518
        %v2521 = vsel %vm2248, %v2517, 0
        %v2524 = vsel %vm2248, %v2519, 0
        %2526 = vmatprep.subr.bf16.mxu0 0
        %2527 = vmatpush1.bf16.xpose.msra.mxu0 %v2524
        %2528 = vmatprep.subr.bf16.mxu0 0
        %2529 = vmatpush1.bf16.xpose.msra.mxu0 0
        %2530 = vmatprep.subr.bf16.mxu0 0
        %2531 = vmatpush1.bf16.xpose.msra.mxu0 0
        %2532 = vmatprep.subr.bf16.mxu0 0
        %2533 = vmatpush1.bf16.xpose.msra.mxu0 0
        %2534 = vmatprep.subr.bf16.mxu0 0
        %2535 = vmatpush1.bf16.xpose.msra.mxu0 0
        %2536 = vmatprep.subr.bf16.mxu0 0
        %2537 = vmatpush1.bf16.xpose.msra.mxu0 0
        %2538 = vmatprep.subr.bf16.mxu0 0
        %2539 = vmatpush1.bf16.xpose.msra.mxu0 0
        %2540 = vmatprep.subr.bf16.mxu0 0
        %2541 = vmatpush1.bf16.xpose.msra.mxu0 0
        %2542 = vmatprep.subr.bf16.mxu0 0
        %2543 = vmatpush1.bf16.xpose.msra.mxu0 0
        %2544 = vmatprep.subr.bf16.mxu0 0
        %2545 = vmatpush1.bf16.xpose.msra.mxu0 0
        %2546 = vmatprep.subr.bf16.mxu0 0
        %2547 = vmatpush1.bf16.xpose.msra.mxu0 0
        %2548 = vmatprep.subr.bf16.mxu0 0
        %2549 = vmatpush1.bf16.xpose.msra.mxu0 0
        %2550 = vmatprep.subr.bf16.mxu0 0
        %2551 = vmatpush1.bf16.xpose.msra.mxu0 0
        %2552 = vmatprep.subr.bf16.mxu0 0
        %2553 = vmatpush1.bf16.xpose.msra.mxu0 0
        %2554 = vmatprep.subr.bf16.mxu0 0
        %2555 = vmatpush1.bf16.xpose.msra.mxu0 0
        %2556 = vmatprep.subr.bf16.mxu0 0
        %2557 = vmatpush1.bf16.xpose.msra.mxu0 0
        %2558 = vmatprep.mubr.bf16.mxu0 0
        %2559 = vmatmul.mubr.bf16.gmra.mrb[0].mxu0 %v2521
        %v2560 = vpop.f32.mrb[0].mxu0
        %v2561 = vadd.f32 0.0, %v2560
        %v2562 = vpop.f32.mrb[0].mxu0
        %v2563 = vpop.f32.mrb[0].mxu0
        %v2564 = vpop.f32.mrb[0].mxu0
        %2565 = vdwg.mxu0
        %v2566 = vmul.f32 %v2561, 0.35355338
        %s2567 = scalar_lea.vmem [#allocation4], 16
        %v2568 = vld [vmem:[%s2567] sm:$0xff]
        %v2569 = vsel %vm2297, %v2566, -inf
        %2570 = vmax.xlane.f32.xlu0 %v2569
        %v2571 = vpop.xlane.xlu0 %2570
        %v2572 = vmax.f32 %v2568, %v2571
        %v2573 = vsub.f32 %v2568, %v2572
        %v2574 = vmul.f32 %v2573, 1.442695
        %v2575 = vpow.pop %v2574
        %2577 = vset.pattern.permute.xlu0 0
        %2578 = vperm.xlu0 %2577, %v2572
        %v2579 = vpop.permute.xlu0 %2578
        %v2581 = vsub.f32 %v2566, %v2579
        %v2582 = vmul.f32 %v2581, 1.442695
        %v2583 = vpow.pop %v2582
        %s2584 = scalar_lea.vmem [#allocation5], 16
        %v2585 = vld [vmem:[%s2584] sm:$0xff]
        %v2586 = vmul.f32 %v2575, %v2585
        %v2587 = vsel %vm2297, %v2583, 0.0
        %2588 = vadd.xlane.f32.xlu0 %v2587
        %v2589 = vpop.xlane.xlu0 %2588
        %v2590 = vadd.f32 %v2586, %v2589
        %2591 = vst.msk [vmem:[%s2584] sm:$0xff] %vm2319, %v2590
        %s2592 = scalar_lea.vmem [#allocation6], 16
        %v2593 = vld [vmem:[%s2592] sm:$0xff]
        %2595 = vset.pattern.permute.xlu0 0
        %2596 = vperm.xlu0 %2595, %v2575
        %v2597 = vpop.permute.xlu0 %2596
        %v2599 = vmul.f32 %v2597, %v2593
        %v2600 = vpack.c.bf16 %v2583, %v2583
        %2601 = vrot.lane.b32.xlu0 %v2246, 80
        %v2602 = vpop.permute.xlu0 %2601
        %v2605 = vsel %vm2297, %v2600, 0
        %2607 = vmatprep.subr.bf16.mxu0 0
        %2608 = vmatpush1.bf16.msra.mxu0 %v2602
        %2609 = vmatprep.subr.bf16.mxu0 0
        %2610 = vmatpush1.bf16.msra.mxu0 0
        %2611 = vmatprep.subr.bf16.mxu0 0
        %2612 = vmatpush1.bf16.msra.mxu0 0
        %2613 = vmatprep.subr.bf16.mxu0 0
        %2614 = vmatpush1.bf16.msra.mxu0 0
        %2615 = vmatprep.subr.bf16.mxu0 0
        %2616 = vmatpush1.bf16.msra.mxu0 0
        %2617 = vmatprep.subr.bf16.mxu0 0
        %2618 = vmatpush1.bf16.msra.mxu0 0
        %2619 = vmatprep.subr.bf16.mxu0 0
        %2620 = vmatpush1.bf16.msra.mxu0 0
        %2621 = vmatprep.subr.bf16.mxu0 0
        %2622 = vmatpush1.bf16.msra.mxu0 0
        %2623 = vmatprep.subr.bf16.mxu0 0
        %2624 = vmatpush1.bf16.msra.mxu0 0
        %2625 = vmatprep.subr.bf16.mxu0 0
        %2626 = vmatpush1.bf16.msra.mxu0 0
        %2627 = vmatprep.subr.bf16.mxu0 0
        %2628 = vmatpush1.bf16.msra.mxu0 0
        %2629 = vmatprep.subr.bf16.mxu0 0
        %2630 = vmatpush1.bf16.msra.mxu0 0
        %2631 = vmatprep.subr.bf16.mxu0 0
        %2632 = vmatpush1.bf16.msra.mxu0 0
        %2633 = vmatprep.subr.bf16.mxu0 0
        %2634 = vmatpush1.bf16.msra.mxu0 0
        %2635 = vmatprep.subr.bf16.mxu0 0
        %2636 = vmatpush1.bf16.msra.mxu0 0
        %2637 = vmatprep.subr.bf16.mxu0 0
        %2638 = vmatpush1.bf16.msra.mxu0 0
        %2639 = vmatprep.mubr.bf16.mxu0 0
        %2640 = vmatmul.mubr.bf16.gmra.mrb[0].mxu0 %v2605
        %v2641 = vpop.f32.mrb[0].mxu0
        %v2642 = vadd.f32 0.0, %v2641
        %v2643 = vpop.f32.mrb[0].mxu0
        %v2644 = vpop.f32.mrb[0].mxu0
        %v2645 = vpop.f32.mrb[0].mxu0
        %2646 = vdwg.mxu0
        %v2647 = vadd.f32 %v2599, %v2642
        %2648 = vst.msk [vmem:[%s2592] sm:$0xff] %vm2248, %v2647
        %2649 = vst.msk [vmem:[%s2567] sm:$0xff] %vm2319, %v2572
        %2650 = vrot.lane.b32.xlu0 %v2381, 104
        %v2651 = vpop.permute.xlu0 %2650
        %2652 = vrot.lane.b32.xlu0 %v2246, 104
        %v2653 = vpop.permute.xlu0 %2652
        %v2655 = vsel %vm2248, %v2651, 0
        %v2658 = vsel %vm2248, %v2653, 0
        %2660 = vmatprep.subr.bf16.mxu0 0
        %2661 = vmatpush1.bf16.xpose.msra.mxu0 %v2658
        %2662 = vmatprep.subr.bf16.mxu0 0
        %2663 = vmatpush1.bf16.xpose.msra.mxu0 0
        %2664 = vmatprep.subr.bf16.mxu0 0
        %2665 = vmatpush1.bf16.xpose.msra.mxu0 0
        %2666 = vmatprep.subr.bf16.mxu0 0
        %2667 = vmatpush1.bf16.xpose.msra.mxu0 0
        %2668 = vmatprep.subr.bf16.mxu0 0
        %2669 = vmatpush1.bf16.xpose.msra.mxu0 0
        %2670 = vmatprep.subr.bf16.mxu0 0
        %2671 = vmatpush1.bf16.xpose.msra.mxu0 0
        %2672 = vmatprep.subr.bf16.mxu0 0
        %2673 = vmatpush1.bf16.xpose.msra.mxu0 0
        %2674 = vmatprep.subr.bf16.mxu0 0
        %2675 = vmatpush1.bf16.xpose.msra.mxu0 0
        %2676 = vmatprep.subr.bf16.mxu0 0
        %2677 = vmatpush1.bf16.xpose.msra.mxu0 0
        %2678 = vmatprep.subr.bf16.mxu0 0
        %2679 = vmatpush1.bf16.xpose.msra.mxu0 0
        %2680 = vmatprep.subr.bf16.mxu0 0
        %2681 = vmatpush1.bf16.xpose.msra.mxu0 0
        %2682 = vmatprep.subr.bf16.mxu0 0
        %2683 = vmatpush1.bf16.xpose.msra.mxu0 0
        %2684 = vmatprep.subr.bf16.mxu0 0
        %2685 = vmatpush1.bf16.xpose.msra.mxu0 0
        %2686 = vmatprep.subr.bf16.mxu0 0
        %2687 = vmatpush1.bf16.xpose.msra.mxu0 0
        %2688 = vmatprep.subr.bf16.mxu0 0
        %2689 = vmatpush1.bf16.xpose.msra.mxu0 0
        %2690 = vmatprep.subr.bf16.mxu0 0
        %2691 = vmatpush1.bf16.xpose.msra.mxu0 0
        %2692 = vmatprep.mubr.bf16.mxu0 0
        %2693 = vmatmul.mubr.bf16.gmra.mrb[0].mxu0 %v2655
        %v2694 = vpop.f32.mrb[0].mxu0
        %v2695 = vadd.f32 0.0, %v2694
        %v2696 = vpop.f32.mrb[0].mxu0
        %v2697 = vpop.f32.mrb[0].mxu0
        %v2698 = vpop.f32.mrb[0].mxu0
        %2699 = vdwg.mxu0
        %v2700 = vmul.f32 %v2695, 0.35355338
        %s2701 = scalar_lea.vmem [#allocation4], 24
        %v2702 = vld [vmem:[%s2701] sm:$0xff]
        %v2703 = vsel %vm2297, %v2700, -inf
        %2704 = vmax.xlane.f32.xlu0 %v2703
        %v2705 = vpop.xlane.xlu0 %2704
        %v2706 = vmax.f32 %v2702, %v2705
        %v2707 = vsub.f32 %v2702, %v2706
        %v2708 = vmul.f32 %v2707, 1.442695
        %v2709 = vpow.pop %v2708
        %2711 = vset.pattern.permute.xlu0 0
        %2712 = vperm.xlu0 %2711, %v2706
        %v2713 = vpop.permute.xlu0 %2712
        %v2715 = vsub.f32 %v2700, %v2713
        %v2716 = vmul.f32 %v2715, 1.442695
        %v2717 = vpow.pop %v2716
        %s2718 = scalar_lea.vmem [#allocation5], 24
        %v2719 = vld [vmem:[%s2718] sm:$0xff]
        %v2720 = vmul.f32 %v2709, %v2719
        %v2721 = vsel %vm2297, %v2717, 0.0
        %2722 = vadd.xlane.f32.xlu0 %v2721
        %v2723 = vpop.xlane.xlu0 %2722
        %v2724 = vadd.f32 %v2720, %v2723
        %2725 = vst.msk [vmem:[%s2718] sm:$0xff] %vm2319, %v2724
        %s2726 = scalar_lea.vmem [#allocation6], 24
        %v2727 = vld [vmem:[%s2726] sm:$0xff]
        %2729 = vset.pattern.permute.xlu0 0
        %2730 = vperm.xlu0 %2729, %v2709
        %v2731 = vpop.permute.xlu0 %2730
        %v2733 = vmul.f32 %v2731, %v2727
        %v2734 = vpack.c.bf16 %v2717, %v2717
        %2735 = vrot.lane.b32.xlu0 %v2246, 72
        %v2736 = vpop.permute.xlu0 %2735
        %v2739 = vsel %vm2297, %v2734, 0
        %2741 = vmatprep.subr.bf16.mxu0 0
        %2742 = vmatpush1.bf16.msra.mxu0 %v2736
        %2743 = vmatprep.subr.bf16.mxu0 0
        %2744 = vmatpush1.bf16.msra.mxu0 0
        %2745 = vmatprep.subr.bf16.mxu0 0
        %2746 = vmatpush1.bf16.msra.mxu0 0
        %2747 = vmatprep.subr.bf16.mxu0 0
        %2748 = vmatpush1.bf16.msra.mxu0 0
        %2749 = vmatprep.subr.bf16.mxu0 0
        %2750 = vmatpush1.bf16.msra.mxu0 0
        %2751 = vmatprep.subr.bf16.mxu0 0
        %2752 = vmatpush1.bf16.msra.mxu0 0
        %2753 = vmatprep.subr.bf16.mxu0 0
        %2754 = vmatpush1.bf16.msra.mxu0 0
        %2755 = vmatprep.subr.bf16.mxu0 0
        %2756 = vmatpush1.bf16.msra.mxu0 0
        %2757 = vmatprep.subr.bf16.mxu0 0
        %2758 = vmatpush1.bf16.msra.mxu0 0
        %2759 = vmatprep.subr.bf16.mxu0 0
        %2760 = vmatpush1.bf16.msra.mxu0 0
        %2761 = vmatprep.subr.bf16.mxu0 0
        %2762 = vmatpush1.bf16.msra.mxu0 0
        %2763 = vmatprep.subr.bf16.mxu0 0
        %2764 = vmatpush1.bf16.msra.mxu0 0
        %2765 = vmatprep.subr.bf16.mxu0 0
        %2766 = vmatpush1.bf16.msra.mxu0 0
        %2767 = vmatprep.subr.bf16.mxu0 0
        %2768 = vmatpush1.bf16.msra.mxu0 0
        %2769 = vmatprep.subr.bf16.mxu0 0
        %2770 = vmatpush1.bf16.msra.mxu0 0
        %2771 = vmatprep.subr.bf16.mxu0 0
        %2772 = vmatpush1.bf16.msra.mxu0 0
        %2773 = vmatprep.mubr.bf16.mxu0 0
        %2774 = vmatmul.mubr.bf16.gmra.mrb[0].mxu0 %v2739
        %v2775 = vpop.f32.mrb[0].mxu0
        %v2776 = vadd.f32 0.0, %v2775
        %v2777 = vpop.f32.mrb[0].mxu0
        %v2778 = vpop.f32.mrb[0].mxu0
        %v2779 = vpop.f32.mrb[0].mxu0
        %2780 = vdwg.mxu0
        %v2781 = vadd.f32 %v2733, %v2776
        %2782 = vst.msk [vmem:[%s2726] sm:$0xff] %vm2248, %v2781
        %2783 = vst.msk [vmem:[%s2701] sm:$0xff] %vm2319, %v2706
        // Predicated region
        $region165: #{run.3} parent=159 // pred_check
          %p2784 = pneg %p1247
        $region166: #{run.3} parent=159 // pred_check_branch
          %2786 = sbr.rel (%p2784) target = $region168
        $region167: #{run.3} parent=159 // pred_region
          %v2787 = vld [vmem:[#allocation6] sm:$0xff]
          %v2788 = vld [vmem:[#allocation6 + $0x8] sm:$0xff]
          %v2789 = vld [vmem:[#allocation6 + $0x10] sm:$0xff]
          %v2790 = vld [vmem:[#allocation6 + $0x18] sm:$0xff]
          %v2791 = vld [vmem:[#allocation5] sm:$0xff]
          %v2792 = vld [vmem:[#allocation5 + $0x8] sm:$0xff]
          %v2793 = vld [vmem:[#allocation5 + $0x10] sm:$0xff]
          %v2794 = vld [vmem:[#allocation5 + $0x18] sm:$0xff]
          %2796 = vset.pattern.permute.xlu0 0
          %2797 = vperm.xlu0 %2796, %v2791
          %v2798 = vpop.permute.xlu0 %2797
          %2801 = vset.pattern.permute.xlu0 0
          %2802 = vperm.xlu0 %2801, %v2792
          %v2803 = vpop.permute.xlu0 %2802
          %2806 = vset.pattern.permute.xlu0 0
          %2807 = vperm.xlu0 %2806, %v2793
          %v2808 = vpop.permute.xlu0 %2807
          %2811 = vset.pattern.permute.xlu0 0
          %2812 = vperm.xlu0 %2811, %v2794
          %v2813 = vpop.permute.xlu0 %2812
          %v2815 = vrcp.pop %v2798
          %v2816 = vmul.f32 %v2787, %v2815
          %v2817 = vrcp.pop %v2803
          %v2818 = vmul.f32 %v2788, %v2817
          %v2819 = vrcp.pop %v2808
          %v2820 = vmul.f32 %v2789, %v2819
          %v2821 = vrcp.pop %v2813
          %v2822 = vmul.f32 %v2790, %v2821
          %2824 = vrot.lane.b32.xlu0 %v2818, 8
          %v2825 = vpop.permute.xlu0 %2824
          %2828 = vrot.lane.b32.xlu0 %v2820, 16
          %v2829 = vpop.permute.xlu0 %2828
          %2832 = vrot.lane.b32.xlu0 %v2822, 24
          %v2833 = vpop.permute.xlu0 %2832
          %v2835 = vsel %vm2248, %v2816, %v2825
          %v2836 = vsel %vm2297, %v2835, %v2829
          %vm2837 = vcmask 195584
          %v2838 = vsel %vm2837, %v2836, %v2833
          %v2839 = vld [vmem:[%s39] sm:$0xf]
          %v2840 = vld [vmem:[%s39 + $0x4] sm:$0xf]
          %v2841 = vld [vmem:[%s39 + $0x8] sm:$0xf]
          %v2842 = vld [vmem:[%s39 + $0xc] sm:$0xf]
          %v2843 = vpack.c.bf16 %v2838, %v2838
          %v2844 = vld [vmem:[%s41] sm:$0x1]
          %v2846 = vlaneseq
          %v2847 = vshrl.u32 %v2846, 7
          %v2848 = vsub.s32 0, %v2847
          %v2849 = vrot.slane %v2844, %v2848
          %v2855 = vunpack.c.l.b16 %v2839
          %v2856 = vunpack.c.l.b16 %v2840
          %v2857 = vunpack.c.l.b16 %v2841
          %v2858 = vunpack.c.l.b16 %v2842
          %v2859 = vpack.c.b16 %v2856, %v2855
          %v2860 = vpack.c.b16 %v2858, %v2857
          %v2864 = vsel %vm2201, %v2843, 0
          %2866 = vmatprep.subr.bf16.mxu0 0
          %2867 = vmatpush1.bf16.msra.mxu0 %v2859
          %2868 = vmatprep.subr.bf16.mxu0 0
          %2869 = vmatpush1.bf16.msra.mxu0 %v2860
          %2870 = vmatprep.subr.bf16.mxu0 0
          %2871 = vmatpush1.bf16.msra.mxu0 0
          %2872 = vmatprep.subr.bf16.mxu0 0
          %2873 = vmatpush1.bf16.msra.mxu0 0
          %2874 = vmatprep.subr.bf16.mxu0 0
          %2875 = vmatpush1.bf16.msra.mxu0 0
          %2876 = vmatprep.subr.bf16.mxu0 0
          %2877 = vmatpush1.bf16.msra.mxu0 0
          %2878 = vmatprep.subr.bf16.mxu0 0
          %2879 = vmatpush1.bf16.msra.mxu0 0
          %2880 = vmatprep.subr.bf16.mxu0 0
          %2881 = vmatpush1.bf16.msra.mxu0 0
          %2882 = vmatprep.subr.bf16.mxu0 0
          %2883 = vmatpush1.bf16.msra.mxu0 0
          %2884 = vmatprep.subr.bf16.mxu0 0
          %2885 = vmatpush1.bf16.msra.mxu0 0
          %2886 = vmatprep.subr.bf16.mxu0 0
          %2887 = vmatpush1.bf16.msra.mxu0 0
          %2888 = vmatprep.subr.bf16.mxu0 0
          %2889 = vmatpush1.bf16.msra.mxu0 0
          %2890 = vmatprep.subr.bf16.mxu0 0
          %2891 = vmatpush1.bf16.msra.mxu0 0
          %2892 = vmatprep.subr.bf16.mxu0 0
          %2893 = vmatpush1.bf16.msra.mxu0 0
          %2894 = vmatprep.subr.bf16.mxu0 0
          %2895 = vmatpush1.bf16.msra.mxu0 0
          %2896 = vmatprep.subr.bf16.mxu0 0
          %2897 = vmatpush1.bf16.msra.mxu0 0
          %2898 = vmatprep.mubr.bf16.mxu0 0
          %2899 = vmatmul.mubr.bf16.gmra.mrb[0].mxu0 %v2864
          %v2900 = vpop.f32.mrb[0].mxu0
          %v2901 = vadd.f32 %v2849, %v2900
          %v2902 = vpop.f32.mrb[0].mxu0
          %v2903 = vpop.f32.mrb[0].mxu0
          %v2904 = vpop.f32.mrb[0].mxu0
          %2905 = vdwg.mxu0
          %v2906 = vld [vmem:[#allocation2] sm:$0xff]
          %v2907 = vadd.f32 %v2906, %v2901
          %v2908 = vld [vmem:[%s43] sm:$0x1]
          %v2909 = vld [vmem:[%s45] sm:$0x1]
          %v2910 = vsel %vm2201, %v2907, 0.0
          %2911 = vadd.xlane.f32.xlu0 %v2910
          %v2912 = vpop.xlane.xlu0 %2911
          %v2913 = vrcp.pop 32.0
          %v2914 = vmul.f32 %v2912, %v2913
          %v2915 = vsub.f32 %v2907, %v2914
          %v2916 = vmul.f32 %v2915, %v2915
          %v2917 = vsel %vm2201, %v2916, 0.0
          %2918 = vadd.xlane.f32.xlu0 %v2917
          %v2919 = vpop.xlane.xlu0 %2918
          %v2920 = vmul.f32 %v2919, %v2913
          %v2921 = vadd.f32 %v2920, 1e-05
          %v2922 = vrsqrt.pop %v2921
          %v2923 = vmul.f32 %v2915, %v2922
          %v2925 = vlaneseq
          %v2926 = vshrl.u32 %v2925, 7
          %v2927 = vsub.s32 0, %v2926
          %v2928 = vrot.slane %v2908, %v2927
          %v2930 = vmul.f32 %v2923, %v2928
          %v2932 = vlaneseq
          %v2933 = vshrl.u32 %v2932, 7
          %v2934 = vsub.s32 0, %v2933
          %v2935 = vrot.slane %v2909, %v2934
          %v2937 = vadd.f32 %v2930, %v2935
          %v2938 = vld [vmem:[%s47] sm:$0xf]
          %v2939 = vld [vmem:[%s47 + $0x4] sm:$0xf]
          %v2940 = vld [vmem:[%s47 + $0x8] sm:$0xf]
          %v2941 = vld [vmem:[%s47 + $0xc] sm:$0xf]
          %v2942 = vpack.c.bf16 %v2937, %v2937
          %v2943 = vld [vmem:[%s49] sm:$0x1]
          %v2945 = vlaneseq
          %v2946 = vshrl.u32 %v2945, 7
          %v2947 = vsub.s32 0, %v2946
          %v2948 = vrot.slane %v2943, %v2947
          %v2954 = vunpack.c.l.b16 %v2938
          %v2955 = vunpack.c.l.b16 %v2939
          %v2956 = vunpack.c.l.b16 %v2940
          %v2957 = vunpack.c.l.b16 %v2941
          %v2958 = vpack.c.b16 %v2955, %v2954
          %v2959 = vpack.c.b16 %v2957, %v2956
          %v2963 = vsel %vm2201, %v2942, 0
          %2965 = vmatprep.subr.bf16.mxu0 0
          %2966 = vmatpush1.bf16.msra.mxu0 %v2958
          %2967 = vmatprep.subr.bf16.mxu0 0
          %2968 = vmatpush1.bf16.msra.mxu0 %v2959
          %2969 = vmatprep.subr.bf16.mxu0 0
          %2970 = vmatpush1.bf16.msra.mxu0 0
          %2971 = vmatprep.subr.bf16.mxu0 0
          %2972 = vmatpush1.bf16.msra.mxu0 0
          %2973 = vmatprep.subr.bf16.mxu0 0
          %2974 = vmatpush1.bf16.msra.mxu0 0
          %2975 = vmatprep.subr.bf16.mxu0 0
          %2976 = vmatpush1.bf16.msra.mxu0 0
          %2977 = vmatprep.subr.bf16.mxu0 0
          %2978 = vmatpush1.bf16.msra.mxu0 0
          %2979 = vmatprep.subr.bf16.mxu0 0
          %2980 = vmatpush1.bf16.msra.mxu0 0
          %2981 = vmatprep.subr.bf16.mxu0 0
          %2982 = vmatpush1.bf16.msra.mxu0 0
          %2983 = vmatprep.subr.bf16.mxu0 0
          %2984 = vmatpush1.bf16.msra.mxu0 0
          %2985 = vmatprep.subr.bf16.mxu0 0
          %2986 = vmatpush1.bf16.msra.mxu0 0
          %2987 = vmatprep.subr.bf16.mxu0 0
          %2988 = vmatpush1.bf16.msra.mxu0 0
          %2989 = vmatprep.subr.bf16.mxu0 0
          %2990 = vmatpush1.bf16.msra.mxu0 0
          %2991 = vmatprep.subr.bf16.mxu0 0
          %2992 = vmatpush1.bf16.msra.mxu0 0
          %2993 = vmatprep.subr.bf16.mxu0 0
          %2994 = vmatpush1.bf16.msra.mxu0 0
          %2995 = vmatprep.subr.bf16.mxu0 0
          %2996 = vmatpush1.bf16.msra.mxu0 0
          %2997 = vmatprep.mubr.bf16.mxu0 0
          %2998 = vmatmul.mubr.bf16.gmra.mrb[0].mxu0 %v2963
          %v2999 = vpop.f32.mrb[0].mxu0
          %v3000 = vadd.f32 %v2948, %v2999
          %v3001 = vpop.f32.mrb[0].mxu0
          %v3002 = vpop.f32.mrb[0].mxu0
          %v3003 = vpop.f32.mrb[0].mxu0
          %3004 = vdwg.mxu0
          %v3005 = vmax.f32 %v3000, 0.0
          %v3006 = vld [vmem:[%s51] sm:$0xf]
          %v3007 = vld [vmem:[%s51 + $0x4] sm:$0xf]
          %v3008 = vld [vmem:[%s51 + $0x8] sm:$0xf]
          %v3009 = vld [vmem:[%s51 + $0xc] sm:$0xf]
          %v3010 = vld [vmem:[%s51 + $0x10] sm:$0xf]
          %v3011 = vld [vmem:[%s51 + $0x14] sm:$0xf]
          %v3012 = vld [vmem:[%s51 + $0x18] sm:$0xf]
          %v3013 = vld [vmem:[%s51 + $0x1c] sm:$0xf]
          %v3014 = vpack.c.bf16 %v3005, %v3005
          %v3023 = vunpack.c.l.b16 %v3006
          %v3024 = vunpack.c.l.b16 %v3007
          %v3025 = vunpack.c.l.b16 %v3008
          %v3026 = vunpack.c.l.b16 %v3009
          %v3027 = vunpack.c.l.b16 %v3010
          %v3028 = vunpack.c.l.b16 %v3011
          %v3029 = vunpack.c.l.b16 %v3012
          %v3030 = vunpack.c.l.b16 %v3013
          %v3031 = vpack.c.b16 %v3024, %v3023
          %v3032 = vpack.c.b16 %v3026, %v3025
          %v3033 = vpack.c.b16 %v3028, %v3027
          %v3034 = vpack.c.b16 %v3030, %v3029
          %vm3039 = vcmask 523264
          %v3041 = vsel %vm3039, %v3014, 0
          %3043 = vmatprep.subr.bf16.mxu0 0
          %3044 = vmatpush1.bf16.msra.mxu0 %v3031
          %3045 = vmatprep.subr.bf16.mxu0 0
          %3046 = vmatpush1.bf16.msra.mxu0 %v3032
          %3047 = vmatprep.subr.bf16.mxu0 0
          %3048 = vmatpush1.bf16.msra.mxu0 %v3033
          %3049 = vmatprep.subr.bf16.mxu0 0
          %3050 = vmatpush1.bf16.msra.mxu0 %v3034
          %3051 = vmatprep.subr.bf16.mxu0 0
          %3052 = vmatpush1.bf16.msra.mxu0 0
          %3053 = vmatprep.subr.bf16.mxu0 0
          %3054 = vmatpush1.bf16.msra.mxu0 0
          %3055 = vmatprep.subr.bf16.mxu0 0
          %3056 = vmatpush1.bf16.msra.mxu0 0
          %3057 = vmatprep.subr.bf16.mxu0 0
          %3058 = vmatpush1.bf16.msra.mxu0 0
          %3059 = vmatprep.subr.bf16.mxu0 0
          %3060 = vmatpush1.bf16.msra.mxu0 0
          %3061 = vmatprep.subr.bf16.mxu0 0
          %3062 = vmatpush1.bf16.msra.mxu0 0
          %3063 = vmatprep.subr.bf16.mxu0 0
          %3064 = vmatpush1.bf16.msra.mxu0 0
          %3065 = vmatprep.subr.bf16.mxu0 0
          %3066 = vmatpush1.bf16.msra.mxu0 0
          %3067 = vmatprep.subr.bf16.mxu0 0
          %3068 = vmatpush1.bf16.msra.mxu0 0
          %3069 = vmatprep.subr.bf16.mxu0 0
          %3070 = vmatpush1.bf16.msra.mxu0 0
          %3071 = vmatprep.subr.bf16.mxu0 0
          %3072 = vmatpush1.bf16.msra.mxu0 0
          %3073 = vmatprep.subr.bf16.mxu0 0
          %3074 = vmatpush1.bf16.msra.mxu0 0
          %3075 = vmatprep.mubr.bf16.mxu0 0
          %3076 = vmatmul.mubr.bf16.gmra.mrb[0].mxu0 %v3041
          %v3077 = vpop.f32.mrb[0].mxu0
          %v3078 = vadd.f32 0.0, %v3077
          %v3079 = vpop.f32.mrb[0].mxu0
          %v3080 = vpop.f32.mrb[0].mxu0
          %v3081 = vpop.f32.mrb[0].mxu0
          %3082 = vdwg.mxu0
          %v3083 = vadd.f32 %v2937, %v3078
          %v3084 = vld [vmem:[%s53] sm:$0x1]
          %v3086 = vlaneseq
          %v3087 = vshrl.u32 %v3086, 7
          %v3088 = vsub.s32 0, %v3087
          %v3089 = vrot.slane %v3084, %v3088
          %v3091 = vadd.f32 %v3083, %v3089
          %v3092 = vld [vmem:[%s55] sm:$0x1]
          %v3093 = vld [vmem:[%s57] sm:$0x1]
          %v3094 = vsel %vm2201, %v3091, 0.0
          %3095 = vadd.xlane.f32.xlu0 %v3094
          %v3096 = vpop.xlane.xlu0 %3095
          %v3097 = vmul.f32 %v3096, %v2913
          %v3098 = vsub.f32 %v3091, %v3097
          %v3099 = vmul.f32 %v3098, %v3098
          %v3100 = vsel %vm2201, %v3099, 0.0
          %3101 = vadd.xlane.f32.xlu0 %v3100
          %v3102 = vpop.xlane.xlu0 %3101
          %v3103 = vmul.f32 %v3102, %v2913
          %v3104 = vadd.f32 %v3103, 1e-05
          %v3105 = vrsqrt.pop %v3104
          %v3106 = vmul.f32 %v3098, %v3105
          %v3108 = vlaneseq
          %v3109 = vshrl.u32 %v3108, 7
          %v3110 = vsub.s32 0, %v3109
          %v3111 = vrot.slane %v3092, %v3110
          %v3113 = vmul.f32 %v3106, %v3111
          %v3115 = vlaneseq
          %v3116 = vshrl.u32 %v3115, 7
          %v3117 = vsub.s32 0, %v3116
          %v3118 = vrot.slane %v3093, %v3117
          %v3120 = vadd.f32 %v3113, %v3118
          %v3121 = vpack.c.bf16 %v3120, %v3120
          %vm3122 = vcmask 257024
          %3123 = vst.msk [vmem:[%s1241] sm:$0xf] %vm3122, %v3121
          %v3124 = vld [vmem:[%s59] sm:$0xf]
          %v3125 = vld [vmem:[%s59 + $0x4] sm:$0xf]
          %v3126 = vld [vmem:[%s59 + $0x8] sm:$0xf]
          %v3127 = vld [vmem:[%s59 + $0xc] sm:$0xf]
          %v3128 = vld [vmem:[%s61] sm:$0x1]
          %v3130 = vlaneseq
          %v3131 = vshrl.u32 %v3130, 7
          %v3132 = vsub.s32 0, %v3131
          %v3133 = vrot.slane %v3128, %v3132
          %v3139 = vunpack.c.l.b16 %v3124
          %v3140 = vunpack.c.l.b16 %v3125
          %v3141 = vunpack.c.l.b16 %v3126
          %v3142 = vunpack.c.l.b16 %v3127
          %v3143 = vpack.c.b16 %v3140, %v3139
          %v3144 = vpack.c.b16 %v3142, %v3141
          %v3148 = vsel %vm2201, %v3121, 0
          %3150 = vmatprep.subr.bf16.mxu0 0
          %3151 = vmatpush1.bf16.msra.mxu0 %v3143
          %3152 = vmatprep.subr.bf16.mxu0 0
          %3153 = vmatpush1.bf16.msra.mxu0 %v3144
          %3154 = vmatprep.subr.bf16.mxu0 0
          %3155 = vmatpush1.bf16.msra.mxu0 0
          %3156 = vmatprep.subr.bf16.mxu0 0
          %3157 = vmatpush1.bf16.msra.mxu0 0
          %3158 = vmatprep.subr.bf16.mxu0 0
          %3159 = vmatpush1.bf16.msra.mxu0 0
          %3160 = vmatprep.subr.bf16.mxu0 0
          %3161 = vmatpush1.bf16.msra.mxu0 0
          %3162 = vmatprep.subr.bf16.mxu0 0
          %3163 = vmatpush1.bf16.msra.mxu0 0
          %3164 = vmatprep.subr.bf16.mxu0 0
          %3165 = vmatpush1.bf16.msra.mxu0 0
          %3166 = vmatprep.subr.bf16.mxu0 0
          %3167 = vmatpush1.bf16.msra.mxu0 0
          %3168 = vmatprep.subr.bf16.mxu0 0
          %3169 = vmatpush1.bf16.msra.mxu0 0
          %3170 = vmatprep.subr.bf16.mxu0 0
          %3171 = vmatpush1.bf16.msra.mxu0 0
          %3172 = vmatprep.subr.bf16.mxu0 0
          %3173 = vmatpush1.bf16.msra.mxu0 0
          %3174 = vmatprep.subr.bf16.mxu0 0
          %3175 = vmatpush1.bf16.msra.mxu0 0
          %3176 = vmatprep.subr.bf16.mxu0 0
          %3177 = vmatpush1.bf16.msra.mxu0 0
          %3178 = vmatprep.subr.bf16.mxu0 0
          %3179 = vmatpush1.bf16.msra.mxu0 0
          %3180 = vmatprep.subr.bf16.mxu0 0
          %3181 = vmatpush1.bf16.msra.mxu0 0
          %3182 = vmatprep.mubr.bf16.mxu0 0
          %3183 = vmatmul.mubr.bf16.gmra.mrb[0].mxu0 %v3148
          %v3184 = vpop.f32.mrb[0].mxu0
          %v3185 = vadd.f32 %v3133, %v3184
          %v3186 = vpop.f32.mrb[0].mxu0
          %v3187 = vpop.f32.mrb[0].mxu0
          %v3188 = vpop.f32.mrb[0].mxu0
          %3189 = vdwg.mxu0
          %v3190 = vmax.f32 %v3185, 0.0
          %v3191 = vld [vmem:[%s63] sm:$0xf]
          %v3192 = vld [vmem:[%s63 + $0x4] sm:$0xf]
          %v3193 = vld [vmem:[%s63 + $0x8] sm:$0xf]
          %v3194 = vld [vmem:[%s63 + $0xc] sm:$0xf]
          %v3195 = vpack.c.bf16 %v3190, %v3190
          %v3196 = vld [vmem:[%s65] sm:$0x1]
          %v3198 = vlaneseq
          %v3199 = vshrl.u32 %v3198, 7
          %v3200 = vsub.s32 0, %v3199
          %v3201 = vrot.slane %v3196, %v3200
          %v3207 = vunpack.c.l.b16 %v3191
          %v3208 = vunpack.c.l.b16 %v3192
          %v3209 = vunpack.c.l.b16 %v3193
          %v3210 = vunpack.c.l.b16 %v3194
          %v3211 = vpack.c.b16 %v3208, %v3207
          %v3212 = vpack.c.b16 %v3210, %v3209
          %v3216 = vsel %vm2201, %v3195, 0
          %3218 = vmatprep.subr.bf16.mxu0 0
          %3219 = vmatpush1.bf16.msra.mxu0 %v3211
          %3220 = vmatprep.subr.bf16.mxu0 0
          %3221 = vmatpush1.bf16.msra.mxu0 %v3212
          %3222 = vmatprep.subr.bf16.mxu0 0
          %3223 = vmatpush1.bf16.msra.mxu0 0
          %3224 = vmatprep.subr.bf16.mxu0 0
          %3225 = vmatpush1.bf16.msra.mxu0 0
          %3226 = vmatprep.subr.bf16.mxu0 0
          %3227 = vmatpush1.bf16.msra.mxu0 0
          %3228 = vmatprep.subr.bf16.mxu0 0
          %3229 = vmatpush1.bf16.msra.mxu0 0
          %3230 = vmatprep.subr.bf16.mxu0 0
          %3231 = vmatpush1.bf16.msra.mxu0 0
          %3232 = vmatprep.subr.bf16.mxu0 0
          %3233 = vmatpush1.bf16.msra.mxu0 0
          %3234 = vmatprep.subr.bf16.mxu0 0
          %3235 = vmatpush1.bf16.msra.mxu0 0
          %3236 = vmatprep.subr.bf16.mxu0 0
          %3237 = vmatpush1.bf16.msra.mxu0 0
          %3238 = vmatprep.subr.bf16.mxu0 0
          %3239 = vmatpush1.bf16.msra.mxu0 0
          %3240 = vmatprep.subr.bf16.mxu0 0
          %3241 = vmatpush1.bf16.msra.mxu0 0
          %3242 = vmatprep.subr.bf16.mxu0 0
          %3243 = vmatpush1.bf16.msra.mxu0 0
          %3244 = vmatprep.subr.bf16.mxu0 0
          %3245 = vmatpush1.bf16.msra.mxu0 0
          %3246 = vmatprep.subr.bf16.mxu0 0
          %3247 = vmatpush1.bf16.msra.mxu0 0
          %3248 = vmatprep.subr.bf16.mxu0 0
          %3249 = vmatpush1.bf16.msra.mxu0 0
          %3250 = vmatprep.mubr.bf16.mxu0 0
          %3251 = vmatmul.mubr.bf16.gmra.mrb[0].mxu0 %v3216
          %v3252 = vpop.f32.mrb[0].mxu0
          %v3253 = vadd.f32 %v3201, %v3252
          %v3254 = vpop.f32.mrb[0].mxu0
          %v3255 = vpop.f32.mrb[0].mxu0
          %v3256 = vpop.f32.mrb[0].mxu0
          %3257 = vdwg.mxu0
          %v3258 = vmax.f32 %v3253, 0.0
          %v3259 = vld [vmem:[%s67] sm:$0xf]
          %v3260 = vld [vmem:[%s67 + $0x4] sm:$0xf]
          %v3261 = vld [vmem:[%s67 + $0x8] sm:$0xf]
          %v3262 = vld [vmem:[%s67 + $0xc] sm:$0xf]
          %v3263 = vpack.c.bf16 %v3258, %v3258
          %v3264 = vld [vmem:[%s69] sm:$0x1]
          %v3266 = vlaneseq
          %v3267 = vshrl.u32 %v3266, 7
          %v3268 = vsub.s32 0, %v3267
          %v3269 = vrot.slane %v3264, %v3268
          %v3275 = vunpack.c.l.b16 %v3259
          %v3276 = vunpack.c.l.b16 %v3260
          %v3277 = vunpack.c.l.b16 %v3261
          %v3278 = vunpack.c.l.b16 %v3262
          %v3279 = vpack.c.b16 %v3276, %v3275
          %v3280 = vpack.c.b16 %v3278, %v3277
          %v3284 = vsel %vm2201, %v3263, 0
          %3286 = vmatprep.subr.bf16.mxu0 0
          %3287 = vmatpush1.bf16.msra.mxu0 %v3279
          %3288 = vmatprep.subr.bf16.mxu0 0
          %3289 = vmatpush1.bf16.msra.mxu0 %v3280
          %3290 = vmatprep.subr.bf16.mxu0 0
          %3291 = vmatpush1.bf16.msra.mxu0 0
          %3292 = vmatprep.subr.bf16.mxu0 0
          %3293 = vmatpush1.bf16.msra.mxu0 0
          %3294 = vmatprep.subr.bf16.mxu0 0
          %3295 = vmatpush1.bf16.msra.mxu0 0
          %3296 = vmatprep.subr.bf16.mxu0 0
          %3297 = vmatpush1.bf16.msra.mxu0 0
          %3298 = vmatprep.subr.bf16.mxu0 0
          %3299 = vmatpush1.bf16.msra.mxu0 0
          %3300 = vmatprep.subr.bf16.mxu0 0
          %3301 = vmatpush1.bf16.msra.mxu0 0
          %3302 = vmatprep.subr.bf16.mxu0 0
          %3303 = vmatpush1.bf16.msra.mxu0 0
          %3304 = vmatprep.subr.bf16.mxu0 0
          %3305 = vmatpush1.bf16.msra.mxu0 0
          %3306 = vmatprep.subr.bf16.mxu0 0
          %3307 = vmatpush1.bf16.msra.mxu0 0
          %3308 = vmatprep.subr.bf16.mxu0 0
          %3309 = vmatpush1.bf16.msra.mxu0 0
          %3310 = vmatprep.subr.bf16.mxu0 0
          %3311 = vmatpush1.bf16.msra.mxu0 0
          %3312 = vmatprep.subr.bf16.mxu0 0
          %3313 = vmatpush1.bf16.msra.mxu0 0
          %3314 = vmatprep.subr.bf16.mxu0 0
          %3315 = vmatpush1.bf16.msra.mxu0 0
          %3316 = vmatprep.subr.bf16.mxu0 0
          %3317 = vmatpush1.bf16.msra.mxu0 0
          %3318 = vmatprep.mubr.bf16.mxu0 0
          %3319 = vmatmul.mubr.bf16.gmra.mrb[0].mxu0 %v3284
          %v3320 = vpop.f32.mrb[0].mxu0
          %v3321 = vadd.f32 %v3269, %v3320
          %v3322 = vpop.f32.mrb[0].mxu0
          %v3323 = vpop.f32.mrb[0].mxu0
          %v3324 = vpop.f32.mrb[0].mxu0
          %3325 = vdwg.mxu0
          %vm3326 = vcmask 31744
          %3327 = vst.msk [vmem:[%s1213] sm:$0xff] %vm3326, %v3321
          %v3328 = vld [vmem:[%s1227] sm:$0xff]
          %v3329 = vmax.f32 %v3328, 0.0
          %v3330 = vmin.f32 %v3329, 1.0
          %v3331 = vmax.f32 %v3330, 1e-05
          %v3332 = vsub.f32 1.0, %v3330
          %v3333 = vmax.f32 %v3332, 1e-05
          %v3334 = vrcp.pop %v3333
          %v3335 = vmul.f32 %v3331, %v3334
          %v3336 = vlog2.pop %v3335
          %v3337 = vmul.f32 %v3336, 0.6931472
          %v3338 = vadd.f32 %v3321, %v3337
          %v3339 = vxor.u32 %v3338, 2147483648
          %v3340 = vmul.f32 %v3339, 1.442695
          %v3341 = vpow.pop %v3340
          %v3342 = vadd.f32 %v3341, 1.0
          %v3343 = vrcp.pop %v3342
          %v3344 = vmul.f32 1.0, %v3343
          %3345 = vst.msk [vmem:[%s1245] sm:$0xff] %vm3326, %v3344
        $region168: #{run.3} parent=159 // pred_fallthru
          _
        %p3346 = scmp.lt.s32.totalorder %s99, 1
        %s3347 = scalar_select %p3346, %s99, 1
        %s3348 = smul.addr %s3347, 4
        %s3349 = scalar_lea.vmem %s71, %s3348
        %s3350 = sand.u32 %s893, 1
        %s3351 = scalar_lea.sflag [#allocation8], %s3350
        %s3352 = sand.u32 %s893, 1
        %s3353 = smul.addr %s3352, 8
        %s3354 = scalar_lea.vmem [#allocation7], %s3353
        %s3355 = sand.u32 %s919, 1
        %s3356 = scalar_lea.sflag [#allocation10], %s3355
        %s3357 = sand.u32 %s919, 1
        %s3358 = smul.addr %s3357, 8
        %s3359 = scalar_lea.vmem [#allocation9], %s3358
        %p3360 = scmp.lt.s32.totalorder %s99, 1
        %s3361 = scalar_select %p3360, %s99, 1
        %s3362 = smul.addr %s3361, 8
        %s3363 = scalar_lea.vmem %s77, %s3362
        // Predicated region
        $region169: #{run.3} parent=159 // pred_check
          %p3364 = pneg %p877
        $region170: #{run.3} parent=159 // pred_check_branch
          %3366 = sbr.rel (%p3364) target = $region172
        $region171: #{run.3} parent=159 // pred_region
          _
        $region172: #{run.3} parent=159 // pred_fallthru
          _
        // Predicated region
        $region173: #{run.3} parent=159 // pred_check
          %p3367 = pneg %p903
        $region174: #{run.3} parent=159 // pred_check_branch
          %3369 = sbr.rel (%p3367) target = $region176
        $region175: #{run.3} parent=159 // pred_region
          %s3371 = ssub.s32 128, 128
          %3372 = vsyncadd %s3351, %s3371
          %s3373 = smul.addr %s99, 128
          %s3374 = scalar_lea.hbm %s73, %s3373
          %s3376 = sshll.u32 %s3354, 4
          %s3377 = int_to_ptr.vmem [resolvable:$true] %s3376
          %3379 = dma.vmem_to_hbm [thread:$0]  %s3377, 128, %s3374, %s3351
        $region176: #{run.3} parent=159 // pred_fallthru
          _
        // Predicated region
        $region177: #{run.3} parent=159 // pred_check
          %p3380 = pneg %p929
        $region178: #{run.3} parent=159 // pred_check_branch
          %3382 = sbr.rel (%p3380) target = $region180
        $region179: #{run.3} parent=159 // pred_region
          %s3384 = ssub.s32 128, 128
          %3385 = vsyncadd %s3356, %s3384
          %s3386 = smul.addr %s99, 128
          %s3387 = scalar_lea.hbm %s75, %s3386
          %s3389 = sshll.u32 %s3359, 4
          %s3390 = int_to_ptr.vmem [resolvable:$true] %s3389
          %3392 = dma.vmem_to_hbm [thread:$0]  %s3390, 128, %s3387, %s3356
        $region180: #{run.3} parent=159 // pred_fallthru
          _
        // Predicated region
        $region181: #{run.3} parent=159 // pred_check
          %p3393 = pneg %p955
        $region182: #{run.3} parent=159 // pred_check_branch
          %3395 = sbr.rel (%p3393) target = $region184
        $region183: #{run.3} parent=159 // pred_region
          _
        $region184: #{run.3} parent=159 // pred_fallthru
          _
      $region160: #{run.3} parent=5 // pred_fallthru
        _
      %p3396 = scmp.le.s32.totalorder 2, %s90
      // Predicated region
      $region185: #{run.3} parent=5 // pred_check
        %p3397 = pneg %p3396
      $region186: #{run.3} parent=5 // pred_check_branch
        %3399 = sbr.rel (%p3397) target = $region188
      $region187: #{run.3} parent=5 // pred_region
        %s3400 = ssub.s32 %s90, 2
        // Predicated region
        $region189: #{run.3} parent=187 // pred_check
          %p3401 = pneg %p883
        $region190: #{run.3} parent=187 // pred_check_branch
          %3403 = sbr.rel (%p3401) target = $region192
        $region191: #{run.3} parent=187 // pred_region
          %p3404 = scmp.lt.s32.totalorder %s101, 1
          %s3405 = scalar_select %p3404, %s101, 1
          %s3406 = smul.addr %s3405, 4
          %s3407 = scalar_lea.vmem %s71, %s3406
        $region192: #{run.3} parent=187 // pred_fallthru
          _
        // Predicated region
        $region193: #{run.3} parent=187 // pred_check
          %p3408 = pneg %p909
        $region194: #{run.3} parent=187 // pred_check_branch
          %3410 = sbr.rel (%p3408) target = $region196
        $region195: #{run.3} parent=187 // pred_region
          %s3411 = sand.u32 %s894, 1
          %s3412 = scalar_lea.sflag [#allocation8], %s3411
          %s3413 = sand.u32 %s894, 1
          %s3414 = smul.addr %s3413, 8
          %s3415 = scalar_lea.vmem [#allocation7], %s3414
          %3416 = dma.done %s3412, 128
        $region196: #{run.3} parent=187 // pred_fallthru
          _
        // Predicated region
        $region197: #{run.3} parent=187 // pred_check
          %p3417 = pneg %p935
        $region198: #{run.3} parent=187 // pred_check_branch
          %3419 = sbr.rel (%p3417) target = $region200
        $region199: #{run.3} parent=187 // pred_region
          %s3420 = sand.u32 %s920, 1
          %s3421 = scalar_lea.sflag [#allocation10], %s3420
          %s3422 = sand.u32 %s920, 1
          %s3423 = smul.addr %s3422, 8
          %s3424 = scalar_lea.vmem [#allocation9], %s3423
          %3425 = dma.done %s3421, 128
        $region200: #{run.3} parent=187 // pred_fallthru
          _
        // Predicated region
        $region201: #{run.3} parent=187 // pred_check
          %p3426 = pneg %p961
        $region202: #{run.3} parent=187 // pred_check_branch
          %3428 = sbr.rel (%p3426) target = $region204
        $region203: #{run.3} parent=187 // pred_region
          %p3429 = scmp.lt.s32.totalorder %s101, 1
          %s3430 = scalar_select %p3429, %s101, 1
          %s3431 = smul.addr %s3430, 8
          %s3432 = scalar_lea.vmem %s77, %s3431
        $region204: #{run.3} parent=187 // pred_fallthru
          _
      $region188: #{run.3} parent=5 // pred_fallthru
        _
    $region6: #{run.3} parent=1 // loop_footer
      %s94 = sadd.s32 1, %s90
    $region7: #{run.3} parent=1 // loop_footer_branch
      %89 = sbr.rel target = $region3
    $region8: #{run.3} parent=1 // loop_exit
      _
    %3433 = vsyncpa [#allocation8], 1
    %s3434 = scalar_lea.sflag [#allocation8], 1
    %3435 = vsyncpa %s3434, 1
    %3436 = vsyncpa [#allocation10], 1
    %s3437 = scalar_lea.sflag [#allocation10], 1
    %3438 = vsyncpa %s3437, 1

</llo_original>
